<compile_context>
chip_gen: v7x
topology: tpu7x:2x2x1
jax: 0.10.0
libtpu: 0.0.40
codegen_flags: <defaults>
</compile_context>

<pallas_src>
import functools

import jax
import jax.numpy as jnp
from jax.experimental import pallas as pl
from jax.experimental.pallas import tpu as pltpu


def _round_up(v, m):
    return (v + m - 1) // m * m


# ----------------------------------------------------------------------------
# Tiled, pipelined matmul + bias (+ optional ReLU) — the conv workhorse
# ----------------------------------------------------------------------------
def _matmul_bias_kernel(x_ref, w_ref, b_ref, o_ref, acc_ref, *, activation):
    @pl.when(pl.program_id(2) == 0)
    def _():
        acc_ref[...] = jnp.zeros_like(acc_ref)

    acc_ref[...] += jnp.dot(x_ref[...], w_ref[...],
                            preferred_element_type=jnp.float32)

    @pl.when(pl.program_id(2) == pl.num_programs(2) - 1)
    def _():
        out = acc_ref[...] + b_ref[...]            # bias only in the epilogue
        if activation == "relu":
            out = jnp.maximum(out, 0.0)
        o_ref[...] = out.astype(o_ref.dtype)


def matmul_bias(x, w, b, activation="none"):
    """x:[M,K] @ w:[K,N] + b:[N] -> [M,N] f32, tiled/pipelined on the MXU."""
    M, K = x.shape
    N = w.shape[1]

    # --- adaptive tile sizes (MXU-friendly 256-wide where the dims allow) ---
    if M >= 256:
        tm, Mp = 256, _round_up(M, 256)
    else:
        tm = _round_up(M, 8)
        Mp = tm

    Np = _round_up(N, 128)                         # lane-dense output channels
    tn = 256 if Np % 256 == 0 else 128

    if K % 128 == 0:
        tk = 512 if K % 512 == 0 else (256 if K % 256 == 0 else 128)
        Kp = K
    else:
        tk, Kp = K, K                              # small / odd K: one full-K step

    xp = x if (Mp, Kp) == (M, K) else jnp.pad(x, ((0, Mp - M), (0, Kp - K)))
    wp = w if (Kp, Np) == (K, N) else jnp.pad(w, ((0, Kp - K), (0, Np - N)))
    bp = b if Np == N else jnp.pad(b, (0, Np - N))

    # bf16 storage, f32 accumulation (halves HBM traffic, 2x MXU throughput).
    xp = xp.astype(jnp.bfloat16)
    wp = wp.astype(jnp.bfloat16)
    bp = bp.reshape(1, Np).astype(jnp.float32)

    grid = (Mp // tm, Np // tn, Kp // tk)
    kernel = functools.partial(_matmul_bias_kernel, activation=activation)
    y = pl.pallas_call(
        kernel,
        out_shape=jax.ShapeDtypeStruct((Mp, Np), jnp.float32),
        grid=grid,
        in_specs=[
            pl.BlockSpec((tm, tk), lambda i, j, k: (i, k)),
            pl.BlockSpec((tk, tn), lambda i, j, k: (k, j)),
            pl.BlockSpec((1, tn), lambda i, j, k: (0, j)),
        ],
        out_specs=pl.BlockSpec((tm, tn), lambda i, j, k: (i, j)),
        scratch_shapes=[pltpu.VMEM((tm, tn), jnp.float32)],
        compiler_params=pltpu.CompilerParams(
            dimension_semantics=("parallel", "parallel", "arbitrary")),
    )(xp, wp, bp)

    if (Mp, Np) != (M, N):
        y = y[:M, :N]
    return y


# ----------------------------------------------------------------------------
# Conv wrapper: 1x1 convs -> direct matmul; kxk convs -> im2col glue + matmul
# ----------------------------------------------------------------------------
def conv2d_nhwc(x, w, b, stride=1, padding=0, activation="none"):
    """x:[B,H,W,Cin], w:[kh,kw,Cin,Cout], b:[Cout] -> [B,Ho,Wo,Cout]."""
    B, H, W, Cin = x.shape
    kh, kw, _, Cout = w.shape
    Ho = (H + 2 * padding - kh) // stride + 1
    Wo = (W + 2 * padding - kw) // stride + 1

    if kh == 1 and kw == 1 and stride == 1 and padding == 0:
        # 1x1 conv: no im2col at all.
        mat = x.reshape(B * H * W, Cin)
        wm = w.reshape(Cin, Cout)
    else:
        # TODO(synk): move im2col into the matmul kernel (kh*kw as an extra
        # reduction grid axis over shifted input windows) to avoid materializing
        # the kh*kw-duplicated patch tensor in HBM. Patches are built in bf16 to
        # halve the glue traffic in the meantime.
        xb = x.astype(jnp.bfloat16)
        xp = jnp.pad(xb, ((0, 0), (padding, padding), (padding, padding), (0, 0)))
        cols = []
        for di in range(kh):
            for dj in range(kw):
                cols.append(
                    xp[:, di:di + stride * (Ho - 1) + 1:stride,
                          dj:dj + stride * (Wo - 1) + 1:stride, :]
                )
        patches = jnp.concatenate(cols, axis=-1)           # [B, Ho, Wo, kh*kw*Cin]
        mat = patches.reshape(B * Ho * Wo, kh * kw * Cin)
        wm = w.reshape(kh * kw * Cin, Cout)                # (di, dj, cin) order matches cols

    y = matmul_bias(mat, wm, b, activation=activation)
    return y.reshape(B, Ho, Wo, Cout)


# ----------------------------------------------------------------------------
# Windowed 32x32 max pool: grid over (B, Ho), window reduction inside the kernel
# ----------------------------------------------------------------------------
def _maxpool_kernel(x_ref, o_ref):
    v = x_ref[...]                      # (pool, Wo, pool, C)
    m = jnp.max(v, axis=2)              # reduce pool columns  -> (pool, Wo, C)
    o_ref[...] = jnp.max(m, axis=0)     # reduce pool rows     -> (Wo, C)


def maxpool_nhwc(x, pool):
    """Non-overlapping pool x pool max-pooling, pipelined over (B, Ho)."""
    B, H, W, C = x.shape
    Ho, Wo = H // pool, W // pool
    xr = x.reshape(B, Ho, pool, Wo, pool, C)        # free reshape, no transpose
    return pl.pallas_call(
        _maxpool_kernel,
        out_shape=jax.ShapeDtypeStruct((B, Ho, Wo, C), jnp.float32),
        grid=(B, Ho),
        in_specs=[pl.BlockSpec((None, None, pool, Wo, pool, C),
                               lambda b, h: (b, h, 0, 0, 0, 0))],
        out_specs=pl.BlockSpec((None, None, Wo, C), lambda b, h: (b, h, 0, 0)),
        compiler_params=pltpu.CompilerParams(
            dimension_semantics=("parallel", "parallel")),
    )(xr)


# ----------------------------------------------------------------------------
# Fused CMAFF kernel: split + DEM + CSM + channel-concat + 1x1 fuse conv
# ----------------------------------------------------------------------------
def _cmaff_kernel(rgb_ref, ir_ref,
                  dw1_ref, db1_ref, dw2_ref, db2_ref,
                  cw1_ref, cb1_ref, cw2_ref, cb2_ref,
                  fwd_ref, fwc_ref, fb_ref, o_ref):
    r = rgb_ref[...].astype(jnp.float32)            # (HW, C)
    i = ir_ref[...].astype(jnp.float32)
    diff = (r - i) * 0.5
    comm = (r + i) * 0.5

    # DifferentialEnhanciveModule: (avg+max global pool) -> MLP -> sigmoid -> x*(1+attn)
    pooled = (jnp.mean(diff, axis=0, keepdims=True)
              + jnp.max(diff, axis=0, keepdims=True))                       # (1, C)
    h = jnp.dot(pooled, dw1_ref[...], preferred_element_type=jnp.float32) + db1_ref[...]
    h = jnp.maximum(h, 0.0)
    s = jnp.dot(h, dw2_ref[...], preferred_element_type=jnp.float32) + db2_ref[...]
    gate = 1.0 / (1.0 + jnp.exp(-s))                                        # sigmoid (1, C)
    enhanced = diff * (1.0 + gate)

    # CommonSelectiveModule: softmax(fc2(relu(fc1(x)))) over channels, gate x
    a = jnp.dot(comm, cw1_ref[...], preferred_element_type=jnp.float32) + cb1_ref[...]
    a = jnp.maximum(a, 0.0)
    s2 = jnp.dot(a, cw2_ref[...], preferred_element_type=jnp.float32) + cb2_ref[...]
    s2 = s2 - jnp.max(s2, axis=-1, keepdims=True)
    e = jnp.exp(s2)
    attn = e / jnp.sum(e, axis=-1, keepdims=True)
    refined = comm * attn

    # 1x1 fuse conv over the channel concat [enhanced, refined] without materializing it
    out = (jnp.dot(enhanced, fwd_ref[...], preferred_element_type=jnp.float32)
           + jnp.dot(refined, fwc_ref[...], preferred_element_type=jnp.float32)
           + fb_ref[...])
    o_ref[...] = out.astype(o_ref.dtype)


def cmaff_fused(rgb_feat, ir_feat, params):
    B, Hf, Wf, C = rgb_feat.shape
    HW = Hf * Wf
    Cr = params["dem_w1"].shape[1]

    rgb2 = rgb_feat.reshape(B, HW, C)
    ir2 = ir_feat.reshape(B, HW, C)
    fuse_w = params["fuse_w"].reshape(2 * C, C)
    fw_diff = fuse_w[:C]                 # weights for the "enhanced diff" half of the concat
    fw_comm = fuse_w[C:]                 # weights for the "refined common" half

    def wspec(shape):
        return pl.BlockSpec(shape, lambda b: (0, 0))

    out = pl.pallas_call(
        _cmaff_kernel,
        out_shape=jax.ShapeDtypeStruct((B, HW, C), jnp.float32),
        grid=(B,),
        in_specs=[
            pl.BlockSpec((None, HW, C), lambda b: (b, 0, 0)),
            pl.BlockSpec((None, HW, C), lambda b: (b, 0, 0)),
            wspec((C, Cr)), wspec((1, Cr)), wspec((Cr, C)), wspec((1, C)),
            wspec((C, Cr)), wspec((1, Cr)), wspec((Cr, C)), wspec((1, C)),
            wspec((C, C)), wspec((C, C)), wspec((1, C)),
        ],
        out_specs=pl.BlockSpec((None, HW, C), lambda b: (b, 0, 0)),
        compiler_params=pltpu.CompilerParams(dimension_semantics=("parallel",)),
    )(rgb2, ir2,
      params["dem_w1"], params["dem_b1"].reshape(1, Cr),
      params["dem_w2"], params["dem_b2"].reshape(1, C),
      params["csm_w1"], params["csm_b1"].reshape(1, Cr),
      params["csm_w2"], params["csm_b2"].reshape(1, C),
      fw_diff, fw_comm, params["fuse_b"].reshape(1, C))
    return out.reshape(B, Hf, Wf, C)


# ----------------------------------------------------------------------------
# Model: parameters + forward
# ----------------------------------------------------------------------------
def make_params(key, C):
    Cr = C // 16
    keys = iter(jax.random.split(key, 40))

    def nrm(shape, scale=0.05):
        return scale * jax.random.normal(next(keys), shape, dtype=jnp.float32)

    p = {}
    # stand-in backbone stem + IR branch (3x3 conv, 3 -> C)
    p["bb_w"], p["bb_b"] = nrm((3, 3, 3, C)), nrm((C,))
    p["ir_w"], p["ir_b"] = nrm((3, 3, 3, C)), nrm((C,))
    # DifferentialEnhanciveModule (1x1 convs as [C,Cr]/[Cr,C] matrices)
    p["dem_w1"], p["dem_b1"] = nrm((C, Cr)), nrm((Cr,))
    p["dem_w2"], p["dem_b2"] = nrm((Cr, C)), nrm((C,))
    # CommonSelectiveModule
    p["csm_w1"], p["csm_b1"] = nrm((C, Cr)), nrm((Cr,))
    p["csm_w2"], p["csm_b2"] = nrm((Cr, C)), nrm((C,))
    # CMAFF fusion 1x1 conv (2C -> C)
    p["fuse_w"], p["fuse_b"] = nrm((1, 1, 2 * C, C)), nrm((C,))
    # head: 1x1, 3x3 s2, 3x3 s1, 1x1, 3x3 s1, 3x3 s2
    for idx, k in enumerate([1, 3, 3, 1, 3, 3]):
        p[f"head{idx}_w"], p[f"head{idx}_b"] = nrm((k, k, C, C)), nrm((C,))
    return p


def yolov5_with_cmaff_forward(img_nchw, params):
    """img_nchw: [B, 6, H, W] (3 RGB + 3 IR channels), H and W multiples of 32."""
    img = jnp.transpose(img_nchw, (0, 2, 3, 1))               # -> NHWC
    rgb, ir = img[..., :3], img[..., 3:]

    # TODO(synk): the pretrained YOLOv5s backbone (torch.hub checkpoint, layers [:10])
    # cannot be reproduced from an in-script deterministic init; it is replaced by a
    # shape-equivalent deterministic stride-32 stem (3x3 conv -> 32x32 max pool).
    rgb_feat = conv2d_nhwc(rgb, params["bb_w"], params["bb_b"], stride=1, padding=1)
    rgb_feat = maxpool_nhwc(rgb_feat, 32)

    # IR branch: 3x3 conv (s1, p1) -> MaxPool2d(32, 32)
    ir_feat = conv2d_nhwc(ir, params["ir_w"], params["ir_b"], stride=1, padding=1)
    ir_feat = maxpool_nhwc(ir_feat, 32)

    # CMAFF (split + DEM + CSM + concat + 1x1 fuse) — single fused kernel
    fused = cmaff_fused(rgb_feat, ir_feat, params)

    # head: six plain convs, no activations
    head_cfg = [(1, 1, 0), (3, 2, 1), (3, 1, 1), (1, 1, 0), (3, 1, 1), (3, 2, 1)]
    for idx, (k, s, p) in enumerate(head_cfg):
        fused = conv2d_nhwc(fused, params[f"head{idx}_w"], params[f"head{idx}_b"],
                            stride=s, padding=p)

    return jnp.transpose(fused, (0, 3, 1, 2))                 # back to NCHW


# ----------------------------------------------------------------------------
if __name__ == "__main__":
    B, C_IMG, H, W = 2, 6, 64, 64          # 3 RGB + 3 IR channels, stride-32 friendly
    C = 64                                 # stand-in for 512 feature channels (C//16 = 4)

    key = jax.random.PRNGKey(0)
    pkey, xkey = jax.random.split(key)
    params = make_params(pkey, C)
    img = jax.random.normal(xkey, (B, C_IMG, H, W), dtype=jnp.float32)

    fwd = jax.jit(functools.partial(yolov5_with_cmaff_forward, params=params))
    out = jax.block_until_ready(fwd(img))

    assert out.shape == (B, C, 1, 1), out.shape
    assert out.dtype == jnp.float32
    print("KERNEL_OK")
</pallas_src>

<mosaic_0001>
module attributes {stable_mosaic.version = 11 : i64} {
  func.func @_matmul_bias_kernel(%arg0: i32, %arg1: i32, %arg2: i32, %arg3: memref<256x27xbf16, #tpu.memory_space<vmem>>, %arg4: memref<27x128xbf16, #tpu.memory_space<vmem>>, %arg5: memref<1x128xf32, #tpu.memory_space<vmem>>, %arg6: memref<256x128xf32, #tpu.memory_space<vmem>>, %arg7: memref<256x128xf32, #tpu.memory_space<vmem>>) attributes {dimension_semantics = [#tpu.dimension_semantics<parallel>, #tpu.dimension_semantics<parallel>, #tpu.dimension_semantics<arbitrary>], iteration_bounds = array<i64: 32, 1, 1>, scalar_prefetch = 0 : i64, scratch_operands = 1 : i64, tpu.core_type = #tpu.core_type<tc>, window_params = [{transform_indices = @transform_0, window_bounds = array<i64: 256, 27>}, {transform_indices = @transform_1, window_bounds = array<i64: 27, 128>}, {transform_indices = @transform_2, window_bounds = array<i64: 1, 128>}, {transform_indices = @transform_3, window_bounds = array<i64: 256, 128>}]} {
    %c0_i32 = arith.constant 0 : i32
    %0 = arith.cmpi eq, %arg2, %c0_i32 : i32
    %1 = arith.extui %0 : i1 to i32
    %c0_i32_0 = arith.constant 0 : i32
    %2 = arith.cmpi ne, %1, %c0_i32_0 : i32
    scf.if %2 {
      %cst_10 = arith.constant 0.000000e+00 : f32
      %12 = vector.broadcast %cst_10 : f32 to vector<256x128xf32>
      %c0_11 = arith.constant 0 : index
      %c0_12 = arith.constant 0 : index
      %13 = vector.load %arg7[%c0_11, %c0_12] : memref<256x128xf32, #tpu.memory_space<vmem>>, vector<256x128xf32>
      tpu.vector_store %arg7[%c0_11, %c0_12], %12 {strides = array<i32>} : memref<256x128xf32, #tpu.memory_space<vmem>>, vector<256x128xf32>,
    } else {
    }
    %c0 = arith.constant 0 : index
    %c0_1 = arith.constant 0 : index
    %3 = vector.load %arg7[%c0, %c0_1] : memref<256x128xf32, #tpu.memory_space<vmem>>, vector<256x128xf32>
    %c0_2 = arith.constant 0 : index
    %c0_3 = arith.constant 0 : index
    %4 = vector.load %arg3[%c0_2, %c0_3] : memref<256x27xbf16, #tpu.memory_space<vmem>>, vector<256x27xbf16>
    %c0_4 = arith.constant 0 : index
    %c0_5 = arith.constant 0 : index
    %5 = vector.load %arg4[%c0_4, %c0_5] : memref<27x128xbf16, #tpu.memory_space<vmem>>, vector<27x128xbf16>
    %cst = arith.constant dense<0.000000e+00> : vector<256x128xf32>
    %6 = tpu.matmul %4, %5, %cst {dimension_numbers = #tpu.dot_dimension_numbers<[1], [0], [0], [1], [0, 0, 1, 1], [], []>} : vector<256x27xbf16>, vector<27x128xbf16>, vector<256x128xf32> -> vector<256x128xf32>
    %7 = arith.addf %3, %6 : vector<256x128xf32>
    %c0_6 = arith.constant 0 : index
    %c0_7 = arith.constant 0 : index
    %8 = vector.load %arg7[%c0_6, %c0_7] : memref<256x128xf32, #tpu.memory_space<vmem>>, vector<256x128xf32>
    tpu.vector_store %arg7[%c0_6, %c0_7], %7 {strides = array<i32>} : memref<256x128xf32, #tpu.memory_space<vmem>>, vector<256x128xf32>,
    %c0_i32_8 = arith.constant 0 : i32
    %9 = arith.cmpi eq, %arg2, %c0_i32_8 : i32
    %10 = arith.extui %9 : i1 to i32
    %c0_i32_9 = arith.constant 0 : i32
    %11 = arith.cmpi ne, %10, %c0_i32_9 : i32
    scf.if %11 {
      %c0_10 = arith.constant 0 : index
      %c0_11 = arith.constant 0 : index
      %12 = vector.load %arg7[%c0_10, %c0_11] : memref<256x128xf32, #tpu.memory_space<vmem>>, vector<256x128xf32>
      %c0_12 = arith.constant 0 : index
      %c0_13 = arith.constant 0 : index
      %13 = vector.load %arg5[%c0_12, %c0_13] : memref<1x128xf32, #tpu.memory_space<vmem>>, vector<1x128xf32>
      %14 = vector.broadcast %13 : vector<1x128xf32> to vector<256x128xf32>
      %15 = arith.addf %12, %14 : vector<256x128xf32>
      %c0_14 = arith.constant 0 : index
      %c0_15 = arith.constant 0 : index
      %16 = vector.load %arg6[%c0_14, %c0_15] : memref<256x128xf32, #tpu.memory_space<vmem>>, vector<256x128xf32>
      tpu.vector_store %arg6[%c0_14, %c0_15], %15 {strides = array<i32>} : memref<256x128xf32, #tpu.memory_space<vmem>>, vector<256x128xf32>,
    } else {
    }
    return
  }
  func.func @transform_0(%arg0: i32, %arg1: i32, %arg2: i32) -> (i32, i32) {
    %c0_i32 = arith.constant 0 : i32
    return %arg0, %arg2 : i32, i32
  }
  func.func @transform_1(%arg0: i32, %arg1: i32, %arg2: i32) -> (i32, i32) {
    %c0_i32 = arith.constant 0 : i32
    return %arg2, %arg1 : i32, i32
  }
  func.func @transform_2(%arg0: i32, %arg1: i32, %arg2: i32) -> (i32, i32) {
    %c0_i32 = arith.constant 0 : i32
    %c0_i32_0 = arith.constant 0 : i32
    return %c0_i32, %arg1 : i32, i32
  }
  func.func @transform_3(%arg0: i32, %arg1: i32, %arg2: i32) -> (i32, i32) {
    %c0_i32 = arith.constant 0 : i32
    return %arg0, %arg1 : i32, i32
  }
}

module attributes {stable_mosaic.version = 11 : i64} {
  func.func @_maxpool_kernel(%arg0: i32, %arg1: i32, %arg2: memref<1x1x32x2x32x64xf32, #tpu.memory_space<vmem>>, %arg3: memref<1x1x2x64xf32, #tpu.memory_space<vmem>>) attributes {dimension_semantics = [#tpu.dimension_semantics<parallel>, #tpu.dimension_semantics<parallel>], iteration_bounds = array<i64: 2, 2>, scalar_prefetch = 0 : i64, scratch_operands = 0 : i64, tpu.core_type = #tpu.core_type<tc>, window_params = [{transform_indices = @transform_0, window_bounds = array<i64: 1, 1, 32, 2, 32, 64>}, {transform_indices = @transform_1, window_bounds = array<i64: 1, 1, 2, 64>}]} {
    %c0 = arith.constant 0 : index
    %c0_0 = arith.constant 0 : index
    %c0_1 = arith.constant 0 : index
    %c0_2 = arith.constant 0 : index
    %c0_3 = arith.constant 0 : index
    %c0_4 = arith.constant 0 : index
    %0 = vector.load %arg2[%c0, %c0_0, %c0_1, %c0_2, %c0_3, %c0_4] : memref<1x1x32x2x32x64xf32, #tpu.memory_space<vmem>>, vector<1x1x32x2x32x64xf32>
    %1 = vector.shape_cast %0 : vector<1x1x32x2x32x64xf32> to vector<32x2x32x64xf32>
    %cst = arith.constant dense<0xFF800000> : vector<32x2x64xf32>
    %2 = vector.multi_reduction <maximumf>, %1, %cst [2] : vector<32x2x32x64xf32> to vector<32x2x64xf32>
    %cst_5 = arith.constant dense<0xFF800000> : vector<2x64xf32>
    %3 = vector.multi_reduction <maximumf>, %2, %cst_5 [0] : vector<32x2x64xf32> to vector<2x64xf32>
    %c0_6 = arith.constant 0 : index
    %c0_7 = arith.constant 0 : index
    %c0_8 = arith.constant 0 : index
    %c0_9 = arith.constant 0 : index
    %4 = vector.load %arg3[%c0_6, %c0_7, %c0_8, %c0_9] : memref<1x1x2x64xf32, #tpu.memory_space<vmem>>, vector<1x1x2x64xf32>
    %5 = vector.shape_cast %4 : vector<1x1x2x64xf32> to vector<2x64xf32>
    %6 = vector.shape_cast %3 : vector<2x64xf32> to vector<1x1x2x64xf32>
    tpu.vector_store %arg3[%c0_6, %c0_7, %c0_8, %c0_9], %6 {strides = array<i32>} : memref<1x1x2x64xf32, #tpu.memory_space<vmem>>, vector<1x1x2x64xf32>,
    return
  }
  func.func @transform_0(%arg0: i32, %arg1: i32) -> (i32, i32, i32, i32, i32, i32) {
    %c0_i32 = arith.constant 0 : i32
    %c0_i32_0 = arith.constant 0 : i32
    %c0_i32_1 = arith.constant 0 : i32
    %c0_i32_2 = arith.constant 0 : i32
    %c0_i32_3 = arith.constant 0 : i32
    return %arg0, %arg1, %c0_i32, %c0_i32_0, %c0_i32_1, %c0_i32_2 : i32, i32, i32, i32, i32, i32
  }
  func.func @transform_1(%arg0: i32, %arg1: i32) -> (i32, i32, i32, i32) {
    %c0_i32 = arith.constant 0 : i32
    %c0_i32_0 = arith.constant 0 : i32
    %c0_i32_1 = arith.constant 0 : i32
    return %arg0, %arg1, %c0_i32, %c0_i32_0 : i32, i32, i32, i32
  }
}

module attributes {stable_mosaic.version = 11 : i64} {
  func.func @_cmaff_kernel(%arg0: i32, %arg1: memref<1x4x64xf32, #tpu.memory_space<vmem>>, %arg2: memref<1x4x64xf32, #tpu.memory_space<vmem>>, %arg3: memref<64x4xf32, #tpu.memory_space<vmem>>, %arg4: memref<1x4xf32, #tpu.memory_space<vmem>>, %arg5: memref<4x64xf32, #tpu.memory_space<vmem>>, %arg6: memref<1x64xf32, #tpu.memory_space<vmem>>, %arg7: memref<64x4xf32, #tpu.memory_space<vmem>>, %arg8: memref<1x4xf32, #tpu.memory_space<vmem>>, %arg9: memref<4x64xf32, #tpu.memory_space<vmem>>, %arg10: memref<1x64xf32, #tpu.memory_space<vmem>>, %arg11: memref<64x64xf32, #tpu.memory_space<vmem>>, %arg12: memref<64x64xf32, #tpu.memory_space<vmem>>, %arg13: memref<1x64xf32, #tpu.memory_space<vmem>>, %arg14: memref<1x4x64xf32, #tpu.memory_space<vmem>>) attributes {dimension_semantics = [#tpu.dimension_semantics<parallel>], iteration_bounds = array<i64: 2>, scalar_prefetch = 0 : i64, scratch_operands = 0 : i64, tpu.core_type = #tpu.core_type<tc>, window_params = [{transform_indices = @transform_0, window_bounds = array<i64: 1, 4, 64>}, {transform_indices = @transform_1, window_bounds = array<i64: 1, 4, 64>}, {pipeline_mode = #tpu.pipeline_mode<synchronous>, transform_indices = @transform_2, window_bounds = array<i64: 64, 4>}, {pipeline_mode = #tpu.pipeline_mode<synchronous>, transform_indices = @transform_3, window_bounds = array<i64: 1, 4>}, {pipeline_mode = #tpu.pipeline_mode<synchronous>, transform_indices = @transform_4, window_bounds = array<i64: 4, 64>}, {pipeline_mode = #tpu.pipeline_mode<synchronous>, transform_indices = @transform_5, window_bounds = array<i64: 1, 64>}, {pipeline_mode = #tpu.pipeline_mode<synchronous>, transform_indices = @transform_6, window_bounds = array<i64: 64, 4>}, {pipeline_mode = #tpu.pipeline_mode<synchronous>, transform_indices = @transform_7, window_bounds = array<i64: 1, 4>}, {pipeline_mode = #tpu.pipeline_mode<synchronous>, transform_indices = @transform_8, window_bounds = array<i64: 4, 64>}, {pipeline_mode = #tpu.pipeline_mode<synchronous>, transform_indices = @transform_9, window_bounds = array<i64: 1, 64>}, {pipeline_mode = #tpu.pipeline_mode<synchronous>, transform_indices = @transform_10, window_bounds = array<i64: 64, 64>}, {pipeline_mode = #tpu.pipeline_mode<synchronous>, transform_indices = @transform_11, window_bounds = array<i64: 64, 64>}, {pipeline_mode = #tpu.pipeline_mode<synchronous>, transform_indices = @transform_12, window_bounds = array<i64: 1, 64>}, {transform_indices = @transform_13, window_bounds = array<i64: 1, 4, 64>}]} {
    %c0 = arith.constant 0 : index
    %c0_0 = arith.constant 0 : index
    %c0_1 = arith.constant 0 : index
    %0 = vector.load %arg1[%c0, %c0_0, %c0_1] : memref<1x4x64xf32, #tpu.memory_space<vmem>>, vector<1x4x64xf32>
    %1 = vector.shape_cast %0 : vector<1x4x64xf32> to vector<4x64xf32>
    %c0_2 = arith.constant 0 : index
    %c0_3 = arith.constant 0 : index
    %c0_4 = arith.constant 0 : index
    %2 = vector.load %arg2[%c0_2, %c0_3, %c0_4] : memref<1x4x64xf32, #tpu.memory_space<vmem>>, vector<1x4x64xf32>
    %3 = vector.shape_cast %2 : vector<1x4x64xf32> to vector<4x64xf32>
    %4 = arith.subf %1, %3 : vector<4x64xf32>
    %cst = arith.constant 5.000000e-01 : f32
    %5 = vector.broadcast %cst : f32 to vector<4x64xf32>
    %6 = arith.mulf %4, %5 : vector<4x64xf32>
    %7 = arith.addf %1, %3 : vector<4x64xf32>
    %cst_5 = arith.constant 5.000000e-01 : f32
    %8 = vector.broadcast %cst_5 : f32 to vector<4x64xf32>
    %9 = arith.mulf %7, %8 : vector<4x64xf32>
    %cst_6 = arith.constant dense<0.000000e+00> : vector<64xf32>
    %10 = vector.multi_reduction <add>, %6, %cst_6 [0] : vector<4x64xf32> to vector<64xf32>
    %11 = vector.shape_cast %10 : vector<64xf32> to vector<1x64xf32>
    %cst_7 = arith.constant 4.000000e+00 : f32
    %12 = vector.broadcast %cst_7 : f32 to vector<1x64xf32>
    %13 = arith.divf %11, %12 : vector<1x64xf32>
    %cst_8 = arith.constant dense<0xFF800000> : vector<64xf32>
    %14 = vector.multi_reduction <maximumf>, %6, %cst_8 [0] : vector<4x64xf32> to vector<64xf32>
    %15 = vector.shape_cast %14 : vector<64xf32> to vector<1x64xf32>
    %16 = arith.addf %13, %15 : vector<1x64xf32>
    %c0_9 = arith.constant 0 : index
    %c0_10 = arith.constant 0 : index
    %17 = vector.load %arg3[%c0_9, %c0_10] : memref<64x4xf32, #tpu.memory_space<vmem>>, vector<64x4xf32>
    %cst_11 = arith.constant dense<0.000000e+00> : vector<1x4xf32>
    %18 = tpu.matmul %16, %17, %cst_11 {dimension_numbers = #tpu.dot_dimension_numbers<[1], [0], [0], [1], [0, 0, 1, 1], [], []>} : vector<1x64xf32>, vector<64x4xf32>, vector<1x4xf32> -> vector<1x4xf32>
    %c0_12 = arith.constant 0 : index
    %c0_13 = arith.constant 0 : index
    %19 = vector.load %arg4[%c0_12, %c0_13] : memref<1x4xf32, #tpu.memory_space<vmem>>, vector<1x4xf32>
    %20 = arith.addf %18, %19 : vector<1x4xf32>
    %cst_14 = arith.constant 0.000000e+00 : f32
    %21 = vector.broadcast %cst_14 : f32 to vector<1x4xf32>
    %22 = arith.maximumf %20, %21 : vector<1x4xf32>
    %c0_15 = arith.constant 0 : index
    %c0_16 = arith.constant 0 : index
    %23 = vector.load %arg5[%c0_15, %c0_16] : memref<4x64xf32, #tpu.memory_space<vmem>>, vector<4x64xf32>
    %cst_17 = arith.constant dense<0.000000e+00> : vector<1x64xf32>
    %24 = tpu.matmul %22, %23, %cst_17 {dimension_numbers = #tpu.dot_dimension_numbers<[1], [0], [0], [1], [0, 0, 1, 1], [], []>} : vector<1x4xf32>, vector<4x64xf32>, vector<1x64xf32> -> vector<1x64xf32>
    %c0_18 = arith.constant 0 : index
    %c0_19 = arith.constant 0 : index
    %25 = vector.load %arg6[%c0_18, %c0_19] : memref<1x64xf32, #tpu.memory_space<vmem>>, vector<1x64xf32>
    %26 = arith.addf %24, %25 : vector<1x64xf32>
    %cst_20 = arith.constant 0.000000e+00 : f32
    %27 = vector.broadcast %cst_20 : f32 to vector<1x64xf32>
    %28 = arith.subf %27, %26 : vector<1x64xf32>
    %29 = math.exp %28 : vector<1x64xf32>
    %cst_21 = arith.constant 1.000000e+00 : f32
    %30 = vector.broadcast %cst_21 : f32 to vector<1x64xf32>
    %31 = arith.addf %30, %29 : vector<1x64xf32>
    %cst_22 = arith.constant 1.000000e+00 : f32
    %32 = vector.broadcast %cst_22 : f32 to vector<1x64xf32>
    %33 = arith.divf %32, %31 : vector<1x64xf32>
    %cst_23 = arith.constant 1.000000e+00 : f32
    %34 = vector.broadcast %cst_23 : f32 to vector<1x64xf32>
    %35 = arith.addf %34, %33 : vector<1x64xf32>
    %36 = vector.broadcast %35 : vector<1x64xf32> to vector<4x64xf32>
    %37 = arith.mulf %6, %36 : vector<4x64xf32>
    %c0_24 = arith.constant 0 : index
    %c0_25 = arith.constant 0 : index
    %38 = vector.load %arg7[%c0_24, %c0_25] : memref<64x4xf32, #tpu.memory_space<vmem>>, vector<64x4xf32>
    %cst_26 = arith.constant dense<0.000000e+00> : vector<4x4xf32>
    %39 = tpu.matmul %9, %38, %cst_26 {dimension_numbers = #tpu.dot_dimension_numbers<[1], [0], [0], [1], [0, 0, 1, 1], [], []>} : vector<4x64xf32>, vector<64x4xf32>, vector<4x4xf32> -> vector<4x4xf32>
    %c0_27 = arith.constant 0 : index
    %c0_28 = arith.constant 0 : index
    %40 = vector.load %arg8[%c0_27, %c0_28] : memref<1x4xf32, #tpu.memory_space<vmem>>, vector<1x4xf32>
    %41 = vector.broadcast %40 : vector<1x4xf32> to vector<4x4xf32>
    %42 = arith.addf %39, %41 : vector<4x4xf32>
    %cst_29 = arith.constant 0.000000e+00 : f32
    %43 = vector.broadcast %cst_29 : f32 to vector<4x4xf32>
    %44 = arith.maximumf %42, %43 : vector<4x4xf32>
    %c0_30 = arith.constant 0 : index
    %c0_31 = arith.constant 0 : index
    %45 = vector.load %arg9[%c0_30, %c0_31] : memref<4x64xf32, #tpu.memory_space<vmem>>, vector<4x64xf32>
    %cst_32 = arith.constant dense<0.000000e+00> : vector<4x64xf32>
    %46 = tpu.matmul %44, %45, %cst_32 {dimension_numbers = #tpu.dot_dimension_numbers<[1], [0], [0], [1], [0, 0, 1, 1], [], []>} : vector<4x4xf32>, vector<4x64xf32>, vector<4x64xf32> -> vector<4x64xf32>
    %c0_33 = arith.constant 0 : index
    %c0_34 = arith.constant 0 : index
    %47 = vector.load %arg10[%c0_33, %c0_34] : memref<1x64xf32, #tpu.memory_space<vmem>>, vector<1x64xf32>
    %48 = vector.broadcast %47 : vector<1x64xf32> to vector<4x64xf32>
    %49 = arith.addf %46, %48 : vector<4x64xf32>
    %cst_35 = arith.constant dense<0xFF800000> : vector<4xf32>
    %50 = vector.multi_reduction <maximumf>, %49, %cst_35 [1] : vector<4x64xf32> to vector<4xf32>
    %51 = vector.shape_cast %50 : vector<4xf32> to vector<4x1xf32>
    %52 = vector.broadcast %51 : vector<4x1xf32> to vector<4x64xf32>
    %53 = arith.subf %49, %52 : vector<4x64xf32>
    %54 = math.exp %53 : vector<4x64xf32>
    %cst_36 = arith.constant dense<0.000000e+00> : vector<4xf32>
    %55 = vector.multi_reduction <add>, %54, %cst_36 [1] : vector<4x64xf32> to vector<4xf32>
    %56 = vector.shape_cast %55 : vector<4xf32> to vector<4x1xf32>
    %57 = vector.broadcast %56 : vector<4x1xf32> to vector<4x64xf32>
    %58 = arith.divf %54, %57 : vector<4x64xf32>
    %59 = arith.mulf %9, %58 : vector<4x64xf32>
    %c0_37 = arith.constant 0 : index
    %c0_38 = arith.constant 0 : index
    %60 = vector.load %arg11[%c0_37, %c0_38] : memref<64x64xf32, #tpu.memory_space<vmem>>, vector<64x64xf32>
    %cst_39 = arith.constant dense<0.000000e+00> : vector<4x64xf32>
    %61 = tpu.matmul %37, %60, %cst_39 {dimension_numbers = #tpu.dot_dimension_numbers<[1], [0], [0], [1], [0, 0, 1, 1], [], []>} : vector<4x64xf32>, vector<64x64xf32>, vector<4x64xf32> -> vector<4x64xf32>
    %c0_40 = arith.constant 0 : index
    %c0_41 = arith.constant 0 : index
    %62 = vector.load %arg12[%c0_40, %c0_41] : memref<64x64xf32, #tpu.memory_space<vmem>>, vector<64x64xf32>
    %cst_42 = arith.constant dense<0.000000e+00> : vector<4x64xf32>
    %63 = tpu.matmul %59, %62, %cst_42 {dimension_numbers = #tpu.dot_dimension_numbers<[1], [0], [0], [1], [0, 0, 1, 1], [], []>} : vector<4x64xf32>, vector<64x64xf32>, vector<4x64xf32> -> vector<4x64xf32>
    %64 = arith.addf %61, %63 : vector<4x64xf32>
    %c0_43 = arith.constant 0 : index
    %c0_44 = arith.constant 0 : index
    %65 = vector.load %arg13[%c0_43, %c0_44] : memref<1x64xf32, #tpu.memory_space<vmem>>, vector<1x64xf32>
    %66 = vector.broadcast %65 : vector<1x64xf32> to vector<4x64xf32>
    %67 = arith.addf %64, %66 : vector<4x64xf32>
    %c0_45 = arith.constant 0 : index
    %c0_46 = arith.constant 0 : index
    %c0_47 = arith.constant 0 : index
    %68 = vector.load %arg14[%c0_45, %c0_46, %c0_47] : memref<1x4x64xf32, #tpu.memory_space<vmem>>, vector<1x4x64xf32>
    %69 = vector.shape_cast %68 : vector<1x4x64xf32> to vector<4x64xf32>
    %70 = vector.shape_cast %67 : vector<4x64xf32> to vector<1x4x64xf32>
    tpu.vector_store %arg14[%c0_45, %c0_46, %c0_47], %70 {strides = array<i32>} : memref<1x4x64xf32, #tpu.memory_space<vmem>>, vector<1x4x64xf32>,
    return
  }
  func.func @transform_0(%arg0: i32) -> (i32, i32, i32) {
    %c0_i32 = arith.constant 0 : i32
    %c0_i32_0 = arith.constant 0 : i32
    %c0_i32_1 = arith.constant 0 : i32
    return %arg0, %c0_i32, %c0_i32_0 : i32, i32, i32
  }
  func.func @transform_1(%arg0: i32) -> (i32, i32, i32) {
    %c0_i32 = arith.constant 0 : i32
    %c0_i32_0 = arith.constant 0 : i32
    %c0_i32_1 = arith.constant 0 : i32
    return %arg0, %c0_i32, %c0_i32_0 : i32, i32, i32
  }
  func.func @transform_2(%arg0: i32) -> (i32, i32) {
    %c0_i32 = arith.constant 0 : i32
    %c0_i32_0 = arith.constant 0 : i32
    %c0_i32_1 = arith.constant 0 : i32
    return %c0_i32, %c0_i32_0 : i32, i32
  }
  func.func @transform_3(%arg0: i32) -> (i32, i32) {
    %c0_i32 = arith.constant 0 : i32
    %c0_i32_0 = arith.constant 0 : i32
    %c0_i32_1 = arith.constant 0 : i32
    return %c0_i32, %c0_i32_0 : i32, i32
  }
  func.func @transform_4(%arg0: i32) -> (i32, i32) {
    %c0_i32 = arith.constant 0 : i32
    %c0_i32_0 = arith.constant 0 : i32
    %c0_i32_1 = arith.constant 0 : i32
    return %c0_i32, %c0_i32_0 : i32, i32
  }
  func.func @transform_5(%arg0: i32) -> (i32, i32) {
    %c0_i32 = arith.constant 0 : i32
    %c0_i32_0 = arith.constant 0 : i32
    %c0_i32_1 = arith.constant 0 : i32
    return %c0_i32, %c0_i32_0 : i32, i32
  }
  func.func @transform_6(%arg0: i32) -> (i32, i32) {
    %c0_i32 = arith.constant 0 : i32
    %c0_i32_0 = arith.constant 0 : i32
    %c0_i32_1 = arith.constant 0 : i32
    return %c0_i32, %c0_i32_0 : i32, i32
  }
  func.func @transform_7(%arg0: i32) -> (i32, i32) {
    %c0_i32 = arith.constant 0 : i32
    %c0_i32_0 = arith.constant 0 : i32
    %c0_i32_1 = arith.constant 0 : i32
    return %c0_i32, %c0_i32_0 : i32, i32
  }
  func.func @transform_8(%arg0: i32) -> (i32, i32) {
    %c0_i32 = arith.constant 0 : i32
    %c0_i32_0 = arith.constant 0 : i32
    %c0_i32_1 = arith.constant 0 : i32
    return %c0_i32, %c0_i32_0 : i32, i32
  }
  func.func @transform_9(%arg0: i32) -> (i32, i32) {
    %c0_i32 = arith.constant 0 : i32
    %c0_i32_0 = arith.constant 0 : i32
    %c0_i32_1 = arith.constant 0 : i32
    return %c0_i32, %c0_i32_0 : i32, i32
  }
  func.func @transform_10(%arg0: i32) -> (i32, i32) {
    %c0_i32 = arith.constant 0 : i32
    %c0_i32_0 = arith.constant 0 : i32
    %c0_i32_1 = arith.constant 0 : i32
    return %c0_i32, %c0_i32_0 : i32, i32
  }
  func.func @transform_11(%arg0: i32) -> (i32, i32) {
    %c0_i32 = arith.constant 0 : i32
    %c0_i32_0 = arith.constant 0 : i32
    %c0_i32_1 = arith.constant 0 : i32
    return %c0_i32, %c0_i32_0 : i32, i32
  }
  func.func @transform_12(%arg0: i32) -> (i32, i32) {
    %c0_i32 = arith.constant 0 : i32
    %c0_i32_0 = arith.constant 0 : i32
    %c0_i32_1 = arith.constant 0 : i32
    return %c0_i32, %c0_i32_0 : i32, i32
  }
  func.func @transform_13(%arg0: i32) -> (i32, i32, i32) {
    %c0_i32 = arith.constant 0 : i32
    %c0_i32_0 = arith.constant 0 : i32
    %c0_i32_1 = arith.constant 0 : i32
    return %arg0, %c0_i32, %c0_i32_0 : i32, i32, i32
  }
}

module attributes {stable_mosaic.version = 11 : i64} {
  func.func @_matmul_bias_kernel(%arg0: i32, %arg1: i32, %arg2: i32, %arg3: memref<8x64xbf16, #tpu.memory_space<vmem>>, %arg4: memref<64x128xbf16, #tpu.memory_space<vmem>>, %arg5: memref<1x128xf32, #tpu.memory_space<vmem>>, %arg6: memref<8x128xf32, #tpu.memory_space<vmem>>, %arg7: memref<8x128xf32, #tpu.memory_space<vmem>>) attributes {dimension_semantics = [#tpu.dimension_semantics<parallel>, #tpu.dimension_semantics<parallel>, #tpu.dimension_semantics<arbitrary>], iteration_bounds = array<i64: 1, 1, 1>, scalar_prefetch = 0 : i64, scratch_operands = 1 : i64, tpu.core_type = #tpu.core_type<tc>, window_params = [{transform_indices = @transform_0, window_bounds = array<i64: 8, 64>}, {transform_indices = @transform_1, window_bounds = array<i64: 64, 128>}, {transform_indices = @transform_2, window_bounds = array<i64: 1, 128>}, {transform_indices = @transform_3, window_bounds = array<i64: 8, 128>}]} {
    %c0_i32 = arith.constant 0 : i32
    %0 = arith.cmpi eq, %arg2, %c0_i32 : i32
    %1 = arith.extui %0 : i1 to i32
    %c0_i32_0 = arith.constant 0 : i32
    %2 = arith.cmpi ne, %1, %c0_i32_0 : i32
    scf.if %2 {
      %cst_10 = arith.constant 0.000000e+00 : f32
      %12 = vector.broadcast %cst_10 : f32 to vector<8x128xf32>
      %c0_11 = arith.constant 0 : index
      %c0_12 = arith.constant 0 : index
      %13 = vector.load %arg7[%c0_11, %c0_12] : memref<8x128xf32, #tpu.memory_space<vmem>>, vector<8x128xf32>
      tpu.vector_store %arg7[%c0_11, %c0_12], %12 {strides = array<i32>} : memref<8x128xf32, #tpu.memory_space<vmem>>, vector<8x128xf32>,
    } else {
    }
    %c0 = arith.constant 0 : index
    %c0_1 = arith.constant 0 : index
    %3 = vector.load %arg7[%c0, %c0_1] : memref<8x128xf32, #tpu.memory_space<vmem>>, vector<8x128xf32>
    %c0_2 = arith.constant 0 : index
    %c0_3 = arith.constant 0 : index
    %4 = vector.load %arg3[%c0_2, %c0_3] : memref<8x64xbf16, #tpu.memory_space<vmem>>, vector<8x64xbf16>
    %c0_4 = arith.constant 0 : index
    %c0_5 = arith.constant 0 : index
    %5 = vector.load %arg4[%c0_4, %c0_5] : memref<64x128xbf16, #tpu.memory_space<vmem>>, vector<64x128xbf16>
    %cst = arith.constant dense<0.000000e+00> : vector<8x128xf32>
    %6 = tpu.matmul %4, %5, %cst {dimension_numbers = #tpu.dot_dimension_numbers<[1], [0], [0], [1], [0, 0, 1, 1], [], []>} : vector<8x64xbf16>, vector<64x128xbf16>, vector<8x128xf32> -> vector<8x128xf32>
    %7 = arith.addf %3, %6 : vector<8x128xf32>
    %c0_6 = arith.constant 0 : index
    %c0_7 = arith.constant 0 : index
    %8 = vector.load %arg7[%c0_6, %c0_7] : memref<8x128xf32, #tpu.memory_space<vmem>>, vector<8x128xf32>
    tpu.vector_store %arg7[%c0_6, %c0_7], %7 {strides = array<i32>} : memref<8x128xf32, #tpu.memory_space<vmem>>, vector<8x128xf32>,
    %c0_i32_8 = arith.constant 0 : i32
    %9 = arith.cmpi eq, %arg2, %c0_i32_8 : i32
    %10 = arith.extui %9 : i1 to i32
    %c0_i32_9 = arith.constant 0 : i32
    %11 = arith.cmpi ne, %10, %c0_i32_9 : i32
    scf.if %11 {
      %c0_10 = arith.constant 0 : index
      %c0_11 = arith.constant 0 : index
      %12 = vector.load %arg7[%c0_10, %c0_11] : memref<8x128xf32, #tpu.memory_space<vmem>>, vector<8x128xf32>
      %c0_12 = arith.constant 0 : index
      %c0_13 = arith.constant 0 : index
      %13 = vector.load %arg5[%c0_12, %c0_13] : memref<1x128xf32, #tpu.memory_space<vmem>>, vector<1x128xf32>
      %14 = vector.broadcast %13 : vector<1x128xf32> to vector<8x128xf32>
      %15 = arith.addf %12, %14 : vector<8x128xf32>
      %c0_14 = arith.constant 0 : index
      %c0_15 = arith.constant 0 : index
      %16 = vector.load %arg6[%c0_14, %c0_15] : memref<8x128xf32, #tpu.memory_space<vmem>>, vector<8x128xf32>
      tpu.vector_store %arg6[%c0_14, %c0_15], %15 {strides = array<i32>} : memref<8x128xf32, #tpu.memory_space<vmem>>, vector<8x128xf32>,
    } else {
    }
    return
  }
  func.func @transform_0(%arg0: i32, %arg1: i32, %arg2: i32) -> (i32, i32) {
    %c0_i32 = arith.constant 0 : i32
    return %arg0, %arg2 : i32, i32
  }
  func.func @transform_1(%arg0: i32, %arg1: i32, %arg2: i32) -> (i32, i32) {
    %c0_i32 = arith.constant 0 : i32
    return %arg2, %arg1 : i32, i32
  }
  func.func @transform_2(%arg0: i32, %arg1: i32, %arg2: i32) -> (i32, i32) {
    %c0_i32 = arith.constant 0 : i32
    %c0_i32_0 = arith.constant 0 : i32
    return %c0_i32, %arg1 : i32, i32
  }
  func.func @transform_3(%arg0: i32, %arg1: i32, %arg2: i32) -> (i32, i32) {
    %c0_i32 = arith.constant 0 : i32
    return %arg0, %arg1 : i32, i32
  }
}

module attributes {stable_mosaic.version = 11 : i64} {
  func.func @_matmul_bias_kernel(%arg0: i32, %arg1: i32, %arg2: i32, %arg3: memref<8x576xbf16, #tpu.memory_space<vmem>>, %arg4: memref<576x128xbf16, #tpu.memory_space<vmem>>, %arg5: memref<1x128xf32, #tpu.memory_space<vmem>>, %arg6: memref<8x128xf32, #tpu.memory_space<vmem>>, %arg7: memref<8x128xf32, #tpu.memory_space<vmem>>) attributes {dimension_semantics = [#tpu.dimension_semantics<parallel>, #tpu.dimension_semantics<parallel>, #tpu.dimension_semantics<arbitrary>], iteration_bounds = array<i64: 1, 1, 1>, scalar_prefetch = 0 : i64, scratch_operands = 1 : i64, tpu.core_type = #tpu.core_type<tc>, window_params = [{transform_indices = @transform_0, window_bounds = array<i64: 8, 576>}, {transform_indices = @transform_1, window_bounds = array<i64: 576, 128>}, {transform_indices = @transform_2, window_bounds = array<i64: 1, 128>}, {transform_indices = @transform_3, window_bounds = array<i64: 8, 128>}]} {
    %c0_i32 = arith.constant 0 : i32
    %0 = arith.cmpi eq, %arg2, %c0_i32 : i32
    %1 = arith.extui %0 : i1 to i32
    %c0_i32_0 = arith.constant 0 : i32
    %2 = arith.cmpi ne, %1, %c0_i32_0 : i32
    scf.if %2 {
      %cst_10 = arith.constant 0.000000e+00 : f32
      %12 = vector.broadcast %cst_10 : f32 to vector<8x128xf32>
      %c0_11 = arith.constant 0 : index
      %c0_12 = arith.constant 0 : index
      %13 = vector.load %arg7[%c0_11, %c0_12] : memref<8x128xf32, #tpu.memory_space<vmem>>, vector<8x128xf32>
      tpu.vector_store %arg7[%c0_11, %c0_12], %12 {strides = array<i32>} : memref<8x128xf32, #tpu.memory_space<vmem>>, vector<8x128xf32>,
    } else {
    }
    %c0 = arith.constant 0 : index
    %c0_1 = arith.constant 0 : index
    %3 = vector.load %arg7[%c0, %c0_1] : memref<8x128xf32, #tpu.memory_space<vmem>>, vector<8x128xf32>
    %c0_2 = arith.constant 0 : index
    %c0_3 = arith.constant 0 : index
    %4 = vector.load %arg3[%c0_2, %c0_3] : memref<8x576xbf16, #tpu.memory_space<vmem>>, vector<8x576xbf16>
    %c0_4 = arith.constant 0 : index
    %c0_5 = arith.constant 0 : index
    %5 = vector.load %arg4[%c0_4, %c0_5] : memref<576x128xbf16, #tpu.memory_space<vmem>>, vector<576x128xbf16>
    %cst = arith.constant dense<0.000000e+00> : vector<8x128xf32>
    %6 = tpu.matmul %4, %5, %cst {dimension_numbers = #tpu.dot_dimension_numbers<[1], [0], [0], [1], [0, 0, 1, 1], [], []>} : vector<8x576xbf16>, vector<576x128xbf16>, vector<8x128xf32> -> vector<8x128xf32>
    %7 = arith.addf %3, %6 : vector<8x128xf32>
    %c0_6 = arith.constant 0 : index
    %c0_7 = arith.constant 0 : index
    %8 = vector.load %arg7[%c0_6, %c0_7] : memref<8x128xf32, #tpu.memory_space<vmem>>, vector<8x128xf32>
    tpu.vector_store %arg7[%c0_6, %c0_7], %7 {strides = array<i32>} : memref<8x128xf32, #tpu.memory_space<vmem>>, vector<8x128xf32>,
    %c0_i32_8 = arith.constant 0 : i32
    %9 = arith.cmpi eq, %arg2, %c0_i32_8 : i32
    %10 = arith.extui %9 : i1 to i32
    %c0_i32_9 = arith.constant 0 : i32
    %11 = arith.cmpi ne, %10, %c0_i32_9 : i32
    scf.if %11 {
      %c0_10 = arith.constant 0 : index
      %c0_11 = arith.constant 0 : index
      %12 = vector.load %arg7[%c0_10, %c0_11] : memref<8x128xf32, #tpu.memory_space<vmem>>, vector<8x128xf32>
      %c0_12 = arith.constant 0 : index
      %c0_13 = arith.constant 0 : index
      %13 = vector.load %arg5[%c0_12, %c0_13] : memref<1x128xf32, #tpu.memory_space<vmem>>, vector<1x128xf32>
      %14 = vector.broadcast %13 : vector<1x128xf32> to vector<8x128xf32>
      %15 = arith.addf %12, %14 : vector<8x128xf32>
      %c0_14 = arith.constant 0 : index
      %c0_15 = arith.constant 0 : index
      %16 = vector.load %arg6[%c0_14, %c0_15] : memref<8x128xf32, #tpu.memory_space<vmem>>, vector<8x128xf32>
      tpu.vector_store %arg6[%c0_14, %c0_15], %15 {strides = array<i32>} : memref<8x128xf32, #tpu.memory_space<vmem>>, vector<8x128xf32>,
    } else {
    }
    return
  }
  func.func @transform_0(%arg0: i32, %arg1: i32, %arg2: i32) -> (i32, i32) {
    %c0_i32 = arith.constant 0 : i32
    return %arg0, %arg2 : i32, i32
  }
  func.func @transform_1(%arg0: i32, %arg1: i32, %arg2: i32) -> (i32, i32) {
    %c0_i32 = arith.constant 0 : i32
    return %arg2, %arg1 : i32, i32
  }
  func.func @transform_2(%arg0: i32, %arg1: i32, %arg2: i32) -> (i32, i32) {
    %c0_i32 = arith.constant 0 : i32
    %c0_i32_0 = arith.constant 0 : i32
    return %c0_i32, %arg1 : i32, i32
  }
  func.func @transform_3(%arg0: i32, %arg1: i32, %arg2: i32) -> (i32, i32) {
    %c0_i32 = arith.constant 0 : i32
    return %arg0, %arg1 : i32, i32
  }
}

</mosaic_0001>

<llo_original>
// kernel: yolov5_with_cmaff_forward.11
$region0: #{yolov5_with_cmaff_forward.11}
  #allocation0 [shape = 'u32[]', space=smem, size = 0x4, offset = 0x4, fixed_abs, tag = 'smem constant byte address 0x4 - core index']
  #allocation1 [shape = 'u32[144,128]{1,0:T(1,128)}', space=vmem, size = 0x12000, scoped, tag = 'internal scratch']
  #allocation2 [shape = 'f32[256,128]{1,0:T(8,128)}', space=vmem, size = 0x20000, scoped, tag = 'scratch operand']
  %s0 = inlined_call_operand.vmem [shape: bf16[8192,27], index: 0, kind: input, shape index: {}]
  %s1 = inlined_call_operand.vmem [shape: bf16[27,128], index: 1, kind: input, shape index: {}]
  %s2 = inlined_call_operand.vmem [shape: f32[1,128], index: 2, kind: input, shape index: {}]
  %s3 = inlined_call_operand.vmem [shape: f32[8192,128], index: 3, kind: output, shape index: {}]
  %s4 = sld [smem:[#allocation0]]
  $region53: #{yolov5_with_cmaff_forward.11} parent=0
    _
  %s6 = ssub.s32 1, %s4
  %s7 = scalar_select 0, %s6, %s4
  loop: start=0, step=1, limit=34
  $region2: #{yolov5_with_cmaff_forward.11} parent=0 // loop_pre_header
    _
  $region3: #{yolov5_with_cmaff_forward.11} parent=0 // loop_header
    %s9 = sphi 0, %s13
    %p10 = scmp.ge.s32.totalorder %s9, 34
    %s16 = sphi 0, %s35
    %s17 = sphi 0, %s31
    %s18 = sphi 0, %s27
    %s19 = sphi 0, %s16
    %s20 = sphi 0, %s17
    %s21 = sphi 0, %s18
    %s22 = sphi 0, %s19
    %s23 = sphi 0, %s20
    %s24 = sphi 0, %s21
    %s40 = sphi 0, %s42
    %s43 = sphi 0, %s40
    %s44 = sphi 0, %s43
    %s60 = sphi 0, %s44
    %s68 = sphi 0, %s70
    %s71 = sphi 0, %s68
    %s72 = sphi 0, %s71
    %s88 = sphi 0, %s72
    %s94 = sphi 0, %s96
    %s97 = sphi 0, %s94
    %s98 = sphi 0, %s97
    %s114 = sphi 0, %s98
    %s122 = sphi 0, %s124
    %s125 = sphi 0, %s122
    %s126 = sphi 0, %s125
    %s142 = sphi 0, %s126
  $region4: #{yolov5_with_cmaff_forward.11} parent=0 // loop_header_branch
    %12 = sbr.rel (%p10) target = $region8
  $region5: #{yolov5_with_cmaff_forward.11} parent=0 // loop_body
    %s14 = ssub.s32 %s9, 1
    %s15 = ssub.s32 %s9, 2
    %s25 = sadd.s32 1, %s18
    %p26 = scmp.ge.s32.totalorder %s25, 1
    %s27 = scalar_select %p26, 0, %s25
    %s28 = sadd.s32 1, %s17
    %s29 = scalar_select %p26, %s28, %s17
    %p30 = scmp.ge.s32.totalorder %s29, 1
    %s31 = scalar_select %p30, 0, %s29
    %s32 = sadd.s32 1, %s16
    %s33 = scalar_select %p30, %s32, %s16
    %p34 = scmp.ge.s32.totalorder %s33, 32
    %s35 = scalar_select %p34, 0, %s33
    %s36 = ssub.s32 %s16, %s35
    %s37 = ssub.s32 %s18, %s27
    %s38 = sor.u32 %s36, %s37
    %p39 = scmp.eq.s32.totalorder %s38, 0
    %s41 = sadd.s32 %s40, 1
    %s42 = scalar_select %p39, %s40, %s41
    %p45 = pneg %p39
    %p46 = scmp.eq.s32.totalorder %s9, 31
    %p47 = por %p45, %p46
    %p48 = scmp.ne.s32.totalorder %s40, %s43
    %p49 = scmp.eq.s32.totalorder %s9, 0
    %p50 = por %p48, %p49
    %p51 = scmp.ne.s32.totalorder %s40, %s43
    %p52 = scmp.eq.s32.totalorder %s14, 31
    %p53 = por %p51, %p52
    %p54 = scmp.ne.s32.totalorder %s43, %s44
    %p55 = scmp.eq.s32.totalorder %s14, 0
    %p56 = por %p54, %p55
    %p57 = scmp.ne.s32.totalorder %s43, %s44
    %p58 = scmp.eq.s32.totalorder %s15, 31
    %p59 = por %p57, %p58
    %p61 = scmp.ne.s32.totalorder %s44, %s60
    %p62 = scmp.eq.s32.totalorder %s15, 0
    %p63 = por %p61, %p62
    %s64 = ssub.s32 %s18, %s27
    %s65 = ssub.s32 %s17, %s31
    %s66 = sor.u32 %s64, %s65
    %p67 = scmp.eq.s32.totalorder %s66, 0
    %s69 = sadd.s32 %s68, 1
    %s70 = scalar_select %p67, %s68, %s69
    %p73 = pneg %p67
    %p74 = scmp.eq.s32.totalorder %s9, 31
    %p75 = por %p73, %p74
    %p76 = scmp.ne.s32.totalorder %s68, %s71
    %p77 = scmp.eq.s32.totalorder %s9, 0
    %p78 = por %p76, %p77
    %p79 = scmp.ne.s32.totalorder %s68, %s71
    %p80 = scmp.eq.s32.totalorder %s14, 31
    %p81 = por %p79, %p80
    %p82 = scmp.ne.s32.totalorder %s71, %s72
    %p83 = scmp.eq.s32.totalorder %s14, 0
    %p84 = por %p82, %p83
    %p85 = scmp.ne.s32.totalorder %s71, %s72
    %p86 = scmp.eq.s32.totalorder %s15, 31
    %p87 = por %p85, %p86
    %p89 = scmp.ne.s32.totalorder %s72, %s88
    %p90 = scmp.eq.s32.totalorder %s15, 0
    %p91 = por %p89, %p90
    %s92 = ssub.s32 %s17, %s31
    %p93 = scmp.eq.s32.totalorder %s92, 0
    %s95 = sadd.s32 %s94, 1
    %s96 = scalar_select %p93, %s94, %s95
    %p99 = pneg %p93
    %p100 = scmp.eq.s32.totalorder %s9, 31
    %p101 = por %p99, %p100
    %p102 = scmp.ne.s32.totalorder %s94, %s97
    %p103 = scmp.eq.s32.totalorder %s9, 0
    %p104 = por %p102, %p103
    %p105 = scmp.ne.s32.totalorder %s94, %s97
    %p106 = scmp.eq.s32.totalorder %s14, 31
    %p107 = por %p105, %p106
    %p108 = scmp.ne.s32.totalorder %s97, %s98
    %p109 = scmp.eq.s32.totalorder %s14, 0
    %p110 = por %p108, %p109
    %p111 = scmp.ne.s32.totalorder %s97, %s98
    %p112 = scmp.eq.s32.totalorder %s15, 31
    %p113 = por %p111, %p112
    %p115 = scmp.ne.s32.totalorder %s98, %s114
    %p116 = scmp.eq.s32.totalorder %s15, 0
    %p117 = por %p115, %p116
    %s118 = ssub.s32 %s16, %s35
    %s119 = ssub.s32 %s17, %s31
    %s120 = sor.u32 %s118, %s119
    %p121 = scmp.eq.s32.totalorder %s120, 0
    %s123 = sadd.s32 %s122, 1
    %s124 = scalar_select %p121, %s122, %s123
    %p127 = pneg %p121
    %p128 = scmp.eq.s32.totalorder %s9, 31
    %p129 = por %p127, %p128
    %p130 = scmp.ne.s32.totalorder %s122, %s125
    %p131 = scmp.eq.s32.totalorder %s9, 0
    %p132 = por %p130, %p131
    %p133 = scmp.ne.s32.totalorder %s122, %s125
    %p134 = scmp.eq.s32.totalorder %s14, 31
    %p135 = por %p133, %p134
    %p136 = scmp.ne.s32.totalorder %s125, %s126
    %p137 = scmp.eq.s32.totalorder %s14, 0
    %p138 = por %p136, %p137
    %p139 = scmp.ne.s32.totalorder %s125, %s126
    %p140 = scmp.eq.s32.totalorder %s15, 31
    %p141 = por %p139, %p140
    %p143 = scmp.ne.s32.totalorder %s126, %s142
    %p144 = scmp.eq.s32.totalorder %s15, 0
    %p145 = por %p143, %p144
    %p146 = scmp.le.s32.totalorder 1, %s9
    %p147 = scmp.lt.s32.totalorder %s9, 33
    %p148 = pnand %p146, %p147
    %p149 = pneg %p148
    // Predicated region
    $region9: #{yolov5_with_cmaff_forward.11} parent=5 // pred_check
      _
    $region10: #{yolov5_with_cmaff_forward.11} parent=5 // pred_check_branch
      %151 = sbr.rel (%p148) target = $region12
    $region11: #{yolov5_with_cmaff_forward.11} parent=5 // pred_region
      %s152 = ssub.s32 %s9, 1
      // Predicated region
      $region13: #{yolov5_with_cmaff_forward.11} parent=11 // pred_check
        %p153 = pneg %p84
      $region14: #{yolov5_with_cmaff_forward.11} parent=11 // pred_check_branch
        %155 = sbr.rel (%p153) target = $region16
      $region15: #{yolov5_with_cmaff_forward.11} parent=11 // pred_region
        %s156 = smul.u32 4, %s21
        %p157 = scmp.lt.s32.totalorder %s156, 3
        %s158 = scalar_select %p157, %s156, 3
        %p159 = scmp.lt.s32.totalorder %s20, 0
        %s160 = scalar_select %p159, %s20, 0
        %s161 = sadd.s32 %s160, %s158
        %s162 = smul.addr %s161, 4
        %s163 = scalar_lea.vmem %s1, %s162
        %s164 = smul.u32 4, %s21
      $region16: #{yolov5_with_cmaff_forward.11} parent=11 // pred_fallthru
        _
      // Predicated region
      $region17: #{yolov5_with_cmaff_forward.11} parent=11 // pred_check
        %p165 = pneg %p110
      $region18: #{yolov5_with_cmaff_forward.11} parent=11 // pred_check_branch
        %167 = sbr.rel (%p165) target = $region20
      $region19: #{yolov5_with_cmaff_forward.11} parent=11 // pred_region
        %p168 = scmp.lt.s32.totalorder %s20, 0
        %s169 = scalar_select %p168, %s20, 0
        %s170 = scalar_lea.vmem %s2, %s169
      $region20: #{yolov5_with_cmaff_forward.11} parent=11 // pred_fallthru
        _
    $region12: #{yolov5_with_cmaff_forward.11} parent=5 // pred_fallthru
      _
    %p171 = scmp.lt.s32.totalorder %s9, 32
    // Predicated region
    $region21: #{yolov5_with_cmaff_forward.11} parent=5 // pred_check
      %p172 = pneg %p171
    $region22: #{yolov5_with_cmaff_forward.11} parent=5 // pred_check_branch
      %174 = sbr.rel (%p172) target = $region24
    $region23: #{yolov5_with_cmaff_forward.11} parent=5 // pred_region
      // Predicated region
      $region25: #{yolov5_with_cmaff_forward.11} parent=23 // pred_check
        %p175 = pneg %p50
      $region26: #{yolov5_with_cmaff_forward.11} parent=23 // pred_check_branch
        %177 = sbr.rel (%p175) target = $region28
      $region27: #{yolov5_with_cmaff_forward.11} parent=23 // pred_region
        %s178 = smul.u32 32, %s16
        %p179 = scmp.lt.s32.totalorder %s178, 1023
        %s180 = scalar_select %p179, %s178, 1023
        %p181 = scmp.lt.s32.totalorder %s18, 0
        %s182 = scalar_select %p181, %s18, 0
        %s183 = sadd.s32 %s182, %s180
        %s184 = smul.addr %s183, 4
        %s185 = scalar_lea.vmem %s0, %s184
        %s186 = smul.u32 32, %s16
      $region28: #{yolov5_with_cmaff_forward.11} parent=23 // pred_fallthru
        _
    $region24: #{yolov5_with_cmaff_forward.11} parent=5 // pred_fallthru
      _
    %p187 = scmp.le.s32.totalorder 1, %s9
    %p188 = scmp.lt.s32.totalorder %s9, 33
    %p189 = pnand %p187, %p188
    %p190 = pneg %p189
    // Predicated region
    $region29: #{yolov5_with_cmaff_forward.11} parent=5 // pred_check
      _
    $region30: #{yolov5_with_cmaff_forward.11} parent=5 // pred_check_branch
      %192 = sbr.rel (%p189) target = $region32
    $region31: #{yolov5_with_cmaff_forward.11} parent=5 // pred_region
      %s193 = ssub.s32 %s9, 1
      %s194 = smul.u32 32, %s19
      %p195 = scmp.lt.s32.totalorder %s194, 1023
      %s196 = scalar_select %p195, %s194, 1023
      %p197 = scmp.lt.s32.totalorder %s21, 0
      %s198 = scalar_select %p197, %s21, 0
      %s199 = sadd.s32 %s198, %s196
      %s200 = smul.addr %s199, 4
      %s201 = scalar_lea.vmem %s0, %s200
      %p202 = pneg %p56
      %p203 = pneg %p53
      %s204 = smul.u32 4, %s21
      %p205 = scmp.lt.s32.totalorder %s204, 3
      %s206 = scalar_select %p205, %s204, 3
      %p207 = scmp.lt.s32.totalorder %s20, 0
      %s208 = scalar_select %p207, %s20, 0
      %s209 = sadd.s32 %s208, %s206
      %s210 = smul.addr %s209, 4
      %s211 = scalar_lea.vmem %s1, %s210
      %p212 = pneg %p84
      %p213 = pneg %p81
      %p214 = scmp.lt.s32.totalorder %s20, 0
      %s215 = scalar_select %p214, %s20, 0
      %s216 = scalar_lea.vmem %s2, %s215
      %p217 = pneg %p110
      %p218 = pneg %p107
      %p219 = pneg %p138
      %p220 = pneg %p135
      %s221 = smul.u32 32, %s19
      %p222 = scmp.lt.s32.totalorder %s221, 1023
      %s223 = scalar_select %p222, %s221, 1023
      %p224 = scmp.lt.s32.totalorder %s20, 0
      %s225 = scalar_select %p224, %s20, 0
      %s226 = sadd.s32 %s225, %s223
      %s227 = smul.addr %s226, 8
      %s228 = scalar_lea.vmem %s3, %s227
      %s229 = smul.u32 32, %s19
      %p230 = scmp.lt.s32.totalorder %s229, 1023
      %s231 = scalar_select %p230, %s229, 1023
      %p232 = scmp.lt.s32.totalorder %s21, 0
      %s233 = scalar_select %p232, %s21, 0
      %s234 = sadd.s32 %s233, %s231
      %s235 = smul.addr %s234, 4
      %s236 = scalar_lea.vmem %s0, %s235
      %s237 = smul.u32 32, %s19
      %s238 = smul.u32 4, %s21
      %p239 = scmp.lt.s32.totalorder %s238, 3
      %s240 = scalar_select %p239, %s238, 3
      %p241 = scmp.lt.s32.totalorder %s20, 0
      %s242 = scalar_select %p241, %s20, 0
      %s243 = sadd.s32 %s242, %s240
      %s244 = smul.addr %s243, 4
      %s245 = scalar_lea.vmem %s1, %s244
      %s246 = smul.u32 4, %s21
      %p247 = scmp.lt.s32.totalorder %s20, 0
      %s248 = scalar_select %p247, %s20, 0
      %s249 = scalar_lea.vmem %s2, %s248
      %s250 = smul.u32 32, %s19
      %p251 = scmp.lt.s32.totalorder %s250, 1023
      %s252 = scalar_select %p251, %s250, 1023
      %p253 = scmp.lt.s32.totalorder %s20, 0
      %s254 = scalar_select %p253, %s20, 0
      %s255 = sadd.s32 %s254, %s252
      %s256 = smul.addr %s255, 8
      %s257 = scalar_lea.vmem %s3, %s256
      %s258 = smul.u32 32, %s19
      %p260 = scmp.eq.s32.totalorder %s21, 0
      // Predicated region
      $region33: #{yolov5_with_cmaff_forward.11} parent=31 // pred_check
        %p261 = pneg %p260
      $region34: #{yolov5_with_cmaff_forward.11} parent=31 // pred_check_branch
        %263 = sbr.rel (%p261) target = $region36
      $region35: #{yolov5_with_cmaff_forward.11} parent=31 // pred_region
        %264 = vst [vmem:[#allocation2] sm:$0xff] 0.0
        %265 = vst [vmem:[#allocation2 + $0x8] sm:$0xff] 0.0
        %266 = vst [vmem:[#allocation2 + $0x10] sm:$0xff] 0.0
        %267 = vst [vmem:[#allocation2 + $0x18] sm:$0xff] 0.0
        %268 = vst [vmem:[#allocation2 + $0x20] sm:$0xff] 0.0
        %269 = vst [vmem:[#allocation2 + $0x28] sm:$0xff] 0.0
        %270 = vst [vmem:[#allocation2 + $0x30] sm:$0xff] 0.0
        %271 = vst [vmem:[#allocation2 + $0x38] sm:$0xff] 0.0
        %272 = vst [vmem:[#allocation2 + $0x40] sm:$0xff] 0.0
        %273 = vst [vmem:[#allocation2 + $0x48] sm:$0xff] 0.0
        %274 = vst [vmem:[#allocation2 + $0x50] sm:$0xff] 0.0
        %275 = vst [vmem:[#allocation2 + $0x58] sm:$0xff] 0.0
        %276 = vst [vmem:[#allocation2 + $0x60] sm:$0xff] 0.0
        %277 = vst [vmem:[#allocation2 + $0x68] sm:$0xff] 0.0
        %278 = vst [vmem:[#allocation2 + $0x70] sm:$0xff] 0.0
        %279 = vst [vmem:[#allocation2 + $0x78] sm:$0xff] 0.0
        %280 = vst [vmem:[#allocation2 + $0x80] sm:$0xff] 0.0
        %281 = vst [vmem:[#allocation2 + $0x88] sm:$0xff] 0.0
        %282 = vst [vmem:[#allocation2 + $0x90] sm:$0xff] 0.0
        %283 = vst [vmem:[#allocation2 + $0x98] sm:$0xff] 0.0
        %284 = vst [vmem:[#allocation2 + $0xa0] sm:$0xff] 0.0
        %285 = vst [vmem:[#allocation2 + $0xa8] sm:$0xff] 0.0
        %286 = vst [vmem:[#allocation2 + $0xb0] sm:$0xff] 0.0
        %287 = vst [vmem:[#allocation2 + $0xb8] sm:$0xff] 0.0
        %288 = vst [vmem:[#allocation2 + $0xc0] sm:$0xff] 0.0
        %289 = vst [vmem:[#allocation2 + $0xc8] sm:$0xff] 0.0
        %290 = vst [vmem:[#allocation2 + $0xd0] sm:$0xff] 0.0
        %291 = vst [vmem:[#allocation2 + $0xd8] sm:$0xff] 0.0
        %292 = vst [vmem:[#allocation2 + $0xe0] sm:$0xff] 0.0
        %293 = vst [vmem:[#allocation2 + $0xe8] sm:$0xff] 0.0
        %294 = vst [vmem:[#allocation2 + $0xf0] sm:$0xff] 0.0
        %295 = vst [vmem:[#allocation2 + $0xf8] sm:$0xff] 0.0
      $region36: #{yolov5_with_cmaff_forward.11} parent=31 // pred_fallthru
        _
      %v296 = vld [vmem:[#allocation2] sm:$0xff]
      %v297 = vld [vmem:[#allocation2 + $0x8] sm:$0xff]
      %v298 = vld [vmem:[#allocation2 + $0x10] sm:$0xff]
      %v299 = vld [vmem:[#allocation2 + $0x18] sm:$0xff]
      %v300 = vld [vmem:[#allocation2 + $0x20] sm:$0xff]
      %v301 = vld [vmem:[#allocation2 + $0x28] sm:$0xff]
      %v302 = vld [vmem:[#allocation2 + $0x30] sm:$0xff]
      %v303 = vld [vmem:[#allocation2 + $0x38] sm:$0xff]
      %v304 = vld [vmem:[#allocation2 + $0x40] sm:$0xff]
      %v305 = vld [vmem:[#allocation2 + $0x48] sm:$0xff]
      %v306 = vld [vmem:[#allocation2 + $0x50] sm:$0xff]
      %v307 = vld [vmem:[#allocation2 + $0x58] sm:$0xff]
      %v308 = vld [vmem:[#allocation2 + $0x60] sm:$0xff]
      %v309 = vld [vmem:[#allocation2 + $0x68] sm:$0xff]
      %v310 = vld [vmem:[#allocation2 + $0x70] sm:$0xff]
      %v311 = vld [vmem:[#allocation2 + $0x78] sm:$0xff]
      %v312 = vld [vmem:[#allocation2 + $0x80] sm:$0xff]
      %v313 = vld [vmem:[#allocation2 + $0x88] sm:$0xff]
      %v314 = vld [vmem:[#allocation2 + $0x90] sm:$0xff]
      %v315 = vld [vmem:[#allocation2 + $0x98] sm:$0xff]
      %v316 = vld [vmem:[#allocation2 + $0xa0] sm:$0xff]
      %v317 = vld [vmem:[#allocation2 + $0xa8] sm:$0xff]
      %v318 = vld [vmem:[#allocation2 + $0xb0] sm:$0xff]
      %v319 = vld [vmem:[#allocation2 + $0xb8] sm:$0xff]
      %v320 = vld [vmem:[#allocation2 + $0xc0] sm:$0xff]
      %v321 = vld [vmem:[#allocation2 + $0xc8] sm:$0xff]
      %v322 = vld [vmem:[#allocation2 + $0xd0] sm:$0xff]
      %v323 = vld [vmem:[#allocation2 + $0xd8] sm:$0xff]
      %v324 = vld [vmem:[#allocation2 + $0xe0] sm:$0xff]
      %v325 = vld [vmem:[#allocation2 + $0xe8] sm:$0xff]
      %v326 = vld [vmem:[#allocation2 + $0xf0] sm:$0xff]
      %v327 = vld [vmem:[#allocation2 + $0xf8] sm:$0xff]
      %v328 = vld [vmem:[%s236] sm:$0xf]
      %v329 = vld [vmem:[%s236 + $0x4] sm:$0xf]
      %v330 = vld [vmem:[%s236 + $0x8] sm:$0xf]
      %v331 = vld [vmem:[%s236 + $0xc] sm:$0xf]
      %v332 = vld [vmem:[%s236 + $0x10] sm:$0xf]
      %v333 = vld [vmem:[%s236 + $0x14] sm:$0xf]
      %v334 = vld [vmem:[%s236 + $0x18] sm:$0xf]
      %v335 = vld [vmem:[%s236 + $0x1c] sm:$0xf]
      %v336 = vld [vmem:[%s236 + $0x20] sm:$0xf]
      %v337 = vld [vmem:[%s236 + $0x24] sm:$0xf]
      %v338 = vld [vmem:[%s236 + $0x28] sm:$0xf]
      %v339 = vld [vmem:[%s236 + $0x2c] sm:$0xf]
      %v340 = vld [vmem:[%s236 + $0x30] sm:$0xf]
      %v341 = vld [vmem:[%s236 + $0x34] sm:$0xf]
      %v342 = vld [vmem:[%s236 + $0x38] sm:$0xf]
      %v343 = vld [vmem:[%s236 + $0x3c] sm:$0xf]
      %v344 = vld [vmem:[%s236 + $0x40] sm:$0xf]
      %v345 = vld [vmem:[%s236 + $0x44] sm:$0xf]
      %v346 = vld [vmem:[%s236 + $0x48] sm:$0xf]
      %v347 = vld [vmem:[%s236 + $0x4c] sm:$0xf]
      %v348 = vld [vmem:[%s236 + $0x50] sm:$0xf]
      %v349 = vld [vmem:[%s236 + $0x54] sm:$0xf]
      %v350 = vld [vmem:[%s236 + $0x58] sm:$0xf]
      %v351 = vld [vmem:[%s236 + $0x5c] sm:$0xf]
      %v352 = vld [vmem:[%s236 + $0x60] sm:$0xf]
      %v353 = vld [vmem:[%s236 + $0x64] sm:$0xf]
      %v354 = vld [vmem:[%s236 + $0x68] sm:$0xf]
      %v355 = vld [vmem:[%s236 + $0x6c] sm:$0xf]
      %v356 = vld [vmem:[%s236 + $0x70] sm:$0xf]
      %v357 = vld [vmem:[%s236 + $0x74] sm:$0xf]
      %v358 = vld [vmem:[%s236 + $0x78] sm:$0xf]
      %v359 = vld [vmem:[%s236 + $0x7c] sm:$0xf]
      %v360 = vld [vmem:[%s245] sm:$0xf]
      %v361 = vld [vmem:[%s245 + $0x4] sm:$0xf]
      %v362 = vld [vmem:[%s245 + $0x8] sm:$0xf]
      %v363 = vld [vmem:[%s245 + $0xc] sm:$0x3]
      %v396 = vunpack.c.l.b16 %v328
      %v397 = vunpack.c.l.b16 %v329
      %v398 = vunpack.c.l.b16 %v330
      %v399 = vunpack.c.l.b16 %v331
      %v400 = vunpack.c.l.b16 %v332
      %v401 = vunpack.c.l.b16 %v333
      %v402 = vunpack.c.l.b16 %v334
      %v403 = vunpack.c.l.b16 %v335
      %v404 = vunpack.c.l.b16 %v336
      %v405 = vunpack.c.l.b16 %v337
      %v406 = vunpack.c.l.b16 %v338
      %v407 = vunpack.c.l.b16 %v339
      %v408 = vunpack.c.l.b16 %v340
      %v409 = vunpack.c.l.b16 %v341
      %v410 = vunpack.c.l.b16 %v342
      %v411 = vunpack.c.l.b16 %v343
      %v412 = vunpack.c.l.b16 %v344
      %v413 = vunpack.c.l.b16 %v345
      %v414 = vunpack.c.l.b16 %v346
      %v415 = vunpack.c.l.b16 %v347
      %v416 = vunpack.c.l.b16 %v348
      %v417 = vunpack.c.l.b16 %v349
      %v418 = vunpack.c.l.b16 %v350
      %v419 = vunpack.c.l.b16 %v351
      %v420 = vunpack.c.l.b16 %v352
      %v421 = vunpack.c.l.b16 %v353
      %v422 = vunpack.c.l.b16 %v354
      %v423 = vunpack.c.l.b16 %v355
      %v424 = vunpack.c.l.b16 %v356
      %v425 = vunpack.c.l.b16 %v357
      %v426 = vunpack.c.l.b16 %v358
      %v427 = vunpack.c.l.b16 %v359
      %v428 = vpack.c.b16 %v397, %v396
      %v429 = vpack.c.b16 %v399, %v398
      %v430 = vpack.c.b16 %v401, %v400
      %v431 = vpack.c.b16 %v403, %v402
      %v432 = vpack.c.b16 %v405, %v404
      %v433 = vpack.c.b16 %v407, %v406
      %v434 = vpack.c.b16 %v409, %v408
      %v435 = vpack.c.b16 %v411, %v410
      %v436 = vpack.c.b16 %v413, %v412
      %v437 = vpack.c.b16 %v415, %v414
      %v438 = vpack.c.b16 %v417, %v416
      %v439 = vpack.c.b16 %v419, %v418
      %v440 = vpack.c.b16 %v421, %v420
      %v441 = vpack.c.b16 %v423, %v422
      %v442 = vpack.c.b16 %v425, %v424
      %v443 = vpack.c.b16 %v427, %v426
      %v448 = vunpack.c.l.b16 %v360
      %v449 = vunpack.c.l.b16 %v361
      %v450 = vunpack.c.l.b16 %v362
      %v451 = vunpack.c.l.b16 %v363
      %v452 = vpack.c.b16 %v449, %v448
      %v453 = vpack.c.b16 %v451, %v450
      %vm455 = vcmask 220160
      %v457 = vsel %vm455, %v428, 0
      %v460 = vsel %vm455, %v429, 0
      %v463 = vsel %vm455, %v430, 0
      %v466 = vsel %vm455, %v431, 0
      %v469 = vsel %vm455, %v432, 0
      %v472 = vsel %vm455, %v433, 0
      %v475 = vsel %vm455, %v434, 0
      %v478 = vsel %vm455, %v435, 0
      %v481 = vsel %vm455, %v436, 0
      %v484 = vsel %vm455, %v437, 0
      %v487 = vsel %vm455, %v438, 0
      %v490 = vsel %vm455, %v439, 0
      %v493 = vsel %vm455, %v440, 0
      %v496 = vsel %vm455, %v441, 0
      %v499 = vsel %vm455, %v442, 0
      %v502 = vsel %vm455, %v443, 0
      %vm504 = vcmask 1044480
      %vm505 = vcmask 1045504
      %v506 = vsel %vm504, 4294967295, 65535
      %v507 = vsel %vm505, %v506, 0
      %v509 = vand.u32 %v453, %v507
      %511 = vmatprep.subr.bf16.mxu0 0
      %512 = vmatpush1.bf16.msra.mxu0 %v452
      %513 = vmatprep.subr.bf16.mxu0 0
      %514 = vmatpush1.bf16.msra.mxu0 %v509
      %515 = vmatprep.subr.bf16.mxu0 0
      %516 = vmatpush1.bf16.msra.mxu0 0
      %517 = vmatprep.subr.bf16.mxu0 0
      %518 = vmatpush1.bf16.msra.mxu0 0
      %519 = vmatprep.subr.bf16.mxu0 0
      %520 = vmatpush1.bf16.msra.mxu0 0
      %521 = vmatprep.subr.bf16.mxu0 0
      %522 = vmatpush1.bf16.msra.mxu0 0
      %523 = vmatprep.subr.bf16.mxu0 0
      %524 = vmatpush1.bf16.msra.mxu0 0
      %525 = vmatprep.subr.bf16.mxu0 0
      %526 = vmatpush1.bf16.msra.mxu0 0
      %527 = vmatprep.subr.bf16.mxu0 0
      %528 = vmatpush1.bf16.msra.mxu0 0
      %529 = vmatprep.subr.bf16.mxu0 0
      %530 = vmatpush1.bf16.msra.mxu0 0
      %531 = vmatprep.subr.bf16.mxu0 0
      %532 = vmatpush1.bf16.msra.mxu0 0
      %533 = vmatprep.subr.bf16.mxu0 0
      %534 = vmatpush1.bf16.msra.mxu0 0
      %535 = vmatprep.subr.bf16.mxu0 0
      %536 = vmatpush1.bf16.msra.mxu0 0
      %537 = vmatprep.subr.bf16.mxu0 0
      %538 = vmatpush1.bf16.msra.mxu0 0
      %539 = vmatprep.subr.bf16.mxu0 0
      %540 = vmatpush1.bf16.msra.mxu0 0
      %541 = vmatprep.subr.bf16.mxu0 0
      %542 = vmatpush1.bf16.msra.mxu0 0
      %543 = vmatprep.mubr.bf16.mxu0 0
      %544 = vmatmul.mubr.bf16.gmra.mrb[0].mxu0 %v457
      %v545 = vpop.f32.mrb[0].mxu0
      %v546 = vadd.f32 0.0, %v545
      %v547 = vpop.f32.mrb[0].mxu0
      %v548 = vpop.f32.mrb[0].mxu0
      %v549 = vadd.f32 0.0, %v548
      %v550 = vpop.f32.mrb[0].mxu0
      %551 = vmatprep.mubr.bf16.mxu0 0
      %552 = vmatmul.mubr.bf16.gmra.mrb[0].mxu0 %v460
      %v553 = vpop.f32.mrb[0].mxu0
      %v554 = vadd.f32 0.0, %v553
      %v555 = vpop.f32.mrb[0].mxu0
      %v556 = vpop.f32.mrb[0].mxu0
      %v557 = vadd.f32 0.0, %v556
      %v558 = vpop.f32.mrb[0].mxu0
      %559 = vmatprep.mubr.bf16.mxu0 0
      %560 = vmatmul.mubr.bf16.gmra.mrb[0].mxu0 %v463
      %v561 = vpop.f32.mrb[0].mxu0
      %v562 = vadd.f32 0.0, %v561
      %v563 = vpop.f32.mrb[0].mxu0
      %v564 = vpop.f32.mrb[0].mxu0
      %v565 = vadd.f32 0.0, %v564
      %v566 = vpop.f32.mrb[0].mxu0
      %567 = vmatprep.mubr.bf16.mxu0 0
      %568 = vmatmul.mubr.bf16.gmra.mrb[0].mxu0 %v466
      %v569 = vpop.f32.mrb[0].mxu0
      %v570 = vadd.f32 0.0, %v569
      %v571 = vpop.f32.mrb[0].mxu0
      %v572 = vpop.f32.mrb[0].mxu0
      %v573 = vadd.f32 0.0, %v572
      %v574 = vpop.f32.mrb[0].mxu0
      %575 = vmatprep.mubr.bf16.mxu0 0
      %576 = vmatmul.mubr.bf16.gmra.mrb[0].mxu0 %v469
      %v577 = vpop.f32.mrb[0].mxu0
      %v578 = vadd.f32 0.0, %v577
      %v579 = vpop.f32.mrb[0].mxu0
      %v580 = vpop.f32.mrb[0].mxu0
      %v581 = vadd.f32 0.0, %v580
      %v582 = vpop.f32.mrb[0].mxu0
      %583 = vmatprep.mubr.bf16.mxu0 0
      %584 = vmatmul.mubr.bf16.gmra.mrb[0].mxu0 %v472
      %v585 = vpop.f32.mrb[0].mxu0
      %v586 = vadd.f32 0.0, %v585
      %v587 = vpop.f32.mrb[0].mxu0
      %v588 = vpop.f32.mrb[0].mxu0
      %v589 = vadd.f32 0.0, %v588
      %v590 = vpop.f32.mrb[0].mxu0
      %591 = vmatprep.mubr.bf16.mxu0 0
      %592 = vmatmul.mubr.bf16.gmra.mrb[0].mxu0 %v475
      %v593 = vpop.f32.mrb[0].mxu0
      %v594 = vadd.f32 0.0, %v593
      %v595 = vpop.f32.mrb[0].mxu0
      %v596 = vpop.f32.mrb[0].mxu0
      %v597 = vadd.f32 0.0, %v596
      %v598 = vpop.f32.mrb[0].mxu0
      %599 = vmatprep.mubr.bf16.mxu0 0
      %600 = vmatmul.mubr.bf16.gmra.mrb[0].mxu0 %v478
      %v601 = vpop.f32.mrb[0].mxu0
      %v602 = vadd.f32 0.0, %v601
      %v603 = vpop.f32.mrb[0].mxu0
      %v604 = vpop.f32.mrb[0].mxu0
      %v605 = vadd.f32 0.0, %v604
      %v606 = vpop.f32.mrb[0].mxu0
      %607 = vmatprep.mubr.bf16.mxu0 0
      %608 = vmatmul.mubr.bf16.gmra.mrb[0].mxu0 %v481
      %v609 = vpop.f32.mrb[0].mxu0
      %v610 = vadd.f32 0.0, %v609
      %v611 = vpop.f32.mrb[0].mxu0
      %v612 = vpop.f32.mrb[0].mxu0
      %v613 = vadd.f32 0.0, %v612
      %v614 = vpop.f32.mrb[0].mxu0
      %615 = vmatprep.mubr.bf16.mxu0 0
      %616 = vmatmul.mubr.bf16.gmra.mrb[0].mxu0 %v484
      %v617 = vpop.f32.mrb[0].mxu0
      %v618 = vadd.f32 0.0, %v617
      %v619 = vpop.f32.mrb[0].mxu0
      %v620 = vpop.f32.mrb[0].mxu0
      %v621 = vadd.f32 0.0, %v620
      %v622 = vpop.f32.mrb[0].mxu0
      %623 = vmatprep.mubr.bf16.mxu0 0
      %624 = vmatmul.mubr.bf16.gmra.mrb[0].mxu0 %v487
      %v625 = vpop.f32.mrb[0].mxu0
      %v626 = vadd.f32 0.0, %v625
      %v627 = vpop.f32.mrb[0].mxu0
      %v628 = vpop.f32.mrb[0].mxu0
      %v629 = vadd.f32 0.0, %v628
      %v630 = vpop.f32.mrb[0].mxu0
      %631 = vmatprep.mubr.bf16.mxu0 0
      %632 = vmatmul.mubr.bf16.gmra.mrb[0].mxu0 %v490
      %v633 = vpop.f32.mrb[0].mxu0
      %v634 = vadd.f32 0.0, %v633
      %v635 = vpop.f32.mrb[0].mxu0
      %v636 = vpop.f32.mrb[0].mxu0
      %v637 = vadd.f32 0.0, %v636
      %v638 = vpop.f32.mrb[0].mxu0
      %639 = vmatprep.mubr.bf16.mxu0 0
      %640 = vmatmul.mubr.bf16.gmra.mrb[0].mxu0 %v493
      %v641 = vpop.f32.mrb[0].mxu0
      %v642 = vadd.f32 0.0, %v641
      %v643 = vpop.f32.mrb[0].mxu0
      %v644 = vpop.f32.mrb[0].mxu0
      %v645 = vadd.f32 0.0, %v644
      %v646 = vpop.f32.mrb[0].mxu0
      %647 = vmatprep.mubr.bf16.mxu0 0
      %648 = vmatmul.mubr.bf16.gmra.mrb[0].mxu0 %v496
      %v649 = vpop.f32.mrb[0].mxu0
      %v650 = vadd.f32 0.0, %v649
      %v651 = vpop.f32.mrb[0].mxu0
      %v652 = vpop.f32.mrb[0].mxu0
      %v653 = vadd.f32 0.0, %v652
      %v654 = vpop.f32.mrb[0].mxu0
      %655 = vmatprep.mubr.bf16.mxu0 0
      %656 = vmatmul.mubr.bf16.gmra.mrb[0].mxu0 %v499
      %v657 = vpop.f32.mrb[0].mxu0
      %v658 = vadd.f32 0.0, %v657
      %v659 = vpop.f32.mrb[0].mxu0
      %v660 = vpop.f32.mrb[0].mxu0
      %v661 = vadd.f32 0.0, %v660
      %v662 = vpop.f32.mrb[0].mxu0
      %663 = vmatprep.mubr.bf16.mxu0 0
      %664 = vmatmul.mubr.bf16.gmra.mrb[0].mxu0 %v502
      %v665 = vpop.f32.mrb[0].mxu0
      %v666 = vadd.f32 0.0, %v665
      %v667 = vpop.f32.mrb[0].mxu0
      %v668 = vpop.f32.mrb[0].mxu0
      %v669 = vadd.f32 0.0, %v668
      %v670 = vpop.f32.mrb[0].mxu0
      %671 = vdwg.mxu0
      %v672 = vadd.f32 %v296, %v546
      %v673 = vadd.f32 %v297, %v549
      %v674 = vadd.f32 %v298, %v554
      %v675 = vadd.f32 %v299, %v557
      %v676 = vadd.f32 %v300, %v562
      %v677 = vadd.f32 %v301, %v565
      %v678 = vadd.f32 %v302, %v570
      %v679 = vadd.f32 %v303, %v573
      %v680 = vadd.f32 %v304, %v578
      %v681 = vadd.f32 %v305, %v581
      %v682 = vadd.f32 %v306, %v586
      %v683 = vadd.f32 %v307, %v589
      %v684 = vadd.f32 %v308, %v594
      %v685 = vadd.f32 %v309, %v597
      %v686 = vadd.f32 %v310, %v602
      %v687 = vadd.f32 %v311, %v605
      %v688 = vadd.f32 %v312, %v610
      %v689 = vadd.f32 %v313, %v613
      %v690 = vadd.f32 %v314, %v618
      %v691 = vadd.f32 %v315, %v621
      %v692 = vadd.f32 %v316, %v626
      %v693 = vadd.f32 %v317, %v629
      %v694 = vadd.f32 %v318, %v634
      %v695 = vadd.f32 %v319, %v637
      %v696 = vadd.f32 %v320, %v642
      %v697 = vadd.f32 %v321, %v645
      %v698 = vadd.f32 %v322, %v650
      %v699 = vadd.f32 %v323, %v653
      %v700 = vadd.f32 %v324, %v658
      %v701 = vadd.f32 %v325, %v661
      %v702 = vadd.f32 %v326, %v666
      %v703 = vadd.f32 %v327, %v669
      %704 = vst [vmem:[#allocation2] sm:$0xff] %v672
      %705 = vst [vmem:[#allocation2 + $0x8] sm:$0xff] %v673
      %706 = vst [vmem:[#allocation2 + $0x10] sm:$0xff] %v674
      %707 = vst [vmem:[#allocation2 + $0x18] sm:$0xff] %v675
      %708 = vst [vmem:[#allocation2 + $0x20] sm:$0xff] %v676
      %709 = vst [vmem:[#allocation2 + $0x28] sm:$0xff] %v677
      %710 = vst [vmem:[#allocation2 + $0x30] sm:$0xff] %v678
      %711 = vst [vmem:[#allocation2 + $0x38] sm:$0xff] %v679
      %712 = vst [vmem:[#allocation2 + $0x40] sm:$0xff] %v680
      %713 = vst [vmem:[#allocation2 + $0x48] sm:$0xff] %v681
      %714 = vst [vmem:[#allocation2 + $0x50] sm:$0xff] %v682
      %715 = vst [vmem:[#allocation2 + $0x58] sm:$0xff] %v683
      %716 = vst [vmem:[#allocation2 + $0x60] sm:$0xff] %v684
      %717 = vst [vmem:[#allocation2 + $0x68] sm:$0xff] %v685
      %718 = vst [vmem:[#allocation2 + $0x70] sm:$0xff] %v686
      %719 = vst [vmem:[#allocation2 + $0x78] sm:$0xff] %v687
      %720 = vst [vmem:[#allocation2 + $0x80] sm:$0xff] %v688
      %721 = vst [vmem:[#allocation2 + $0x88] sm:$0xff] %v689
      %722 = vst [vmem:[#allocation2 + $0x90] sm:$0xff] %v690
      %723 = vst [vmem:[#allocation2 + $0x98] sm:$0xff] %v691
      %724 = vst [vmem:[#allocation2 + $0xa0] sm:$0xff] %v692
      %725 = vst [vmem:[#allocation2 + $0xa8] sm:$0xff] %v693
      %726 = vst [vmem:[#allocation2 + $0xb0] sm:$0xff] %v694
      %727 = vst [vmem:[#allocation2 + $0xb8] sm:$0xff] %v695
      %728 = vst [vmem:[#allocation2 + $0xc0] sm:$0xff] %v696
      %729 = vst [vmem:[#allocation2 + $0xc8] sm:$0xff] %v697
      %730 = vst [vmem:[#allocation2 + $0xd0] sm:$0xff] %v698
      %731 = vst [vmem:[#allocation2 + $0xd8] sm:$0xff] %v699
      %732 = vst [vmem:[#allocation2 + $0xe0] sm:$0xff] %v700
      %733 = vst [vmem:[#allocation2 + $0xe8] sm:$0xff] %v701
      %734 = vst [vmem:[#allocation2 + $0xf0] sm:$0xff] %v702
      %735 = vst [vmem:[#allocation2 + $0xf8] sm:$0xff] %v703
      // Predicated region
      $region37: #{yolov5_with_cmaff_forward.11} parent=31 // pred_check
        %p736 = pneg %p260
      $region38: #{yolov5_with_cmaff_forward.11} parent=31 // pred_check_branch
        %738 = sbr.rel (%p736) target = $region40
      $region39: #{yolov5_with_cmaff_forward.11} parent=31 // pred_region
        %v739 = vld [vmem:[#allocation2] sm:$0xff]
        %v740 = vld [vmem:[#allocation2 + $0x8] sm:$0xff]
        %v741 = vld [vmem:[#allocation2 + $0x10] sm:$0xff]
        %v742 = vld [vmem:[#allocation2 + $0x18] sm:$0xff]
        %v743 = vld [vmem:[#allocation2 + $0x20] sm:$0xff]
        %v744 = vld [vmem:[#allocation2 + $0x28] sm:$0xff]
        %v745 = vld [vmem:[#allocation2 + $0x30] sm:$0xff]
        %v746 = vld [vmem:[#allocation2 + $0x38] sm:$0xff]
        %v747 = vld [vmem:[#allocation2 + $0x40] sm:$0xff]
        %v748 = vld [vmem:[#allocation2 + $0x48] sm:$0xff]
        %v749 = vld [vmem:[#allocation2 + $0x50] sm:$0xff]
        %v750 = vld [vmem:[#allocation2 + $0x58] sm:$0xff]
        %v751 = vld [vmem:[#allocation2 + $0x60] sm:$0xff]
        %v752 = vld [vmem:[#allocation2 + $0x68] sm:$0xff]
        %v753 = vld [vmem:[#allocation2 + $0x70] sm:$0xff]
        %v754 = vld [vmem:[#allocation2 + $0x78] sm:$0xff]
        %v755 = vld [vmem:[#allocation2 + $0x80] sm:$0xff]
        %v756 = vld [vmem:[#allocation2 + $0x88] sm:$0xff]
        %v757 = vld [vmem:[#allocation2 + $0x90] sm:$0xff]
        %v758 = vld [vmem:[#allocation2 + $0x98] sm:$0xff]
        %v759 = vld [vmem:[#allocation2 + $0xa0] sm:$0xff]
        %v760 = vld [vmem:[#allocation2 + $0xa8] sm:$0xff]
        %v761 = vld [vmem:[#allocation2 + $0xb0] sm:$0xff]
        %v762 = vld [vmem:[#allocation2 + $0xb8] sm:$0xff]
        %v763 = vld [vmem:[#allocation2 + $0xc0] sm:$0xff]
        %v764 = vld [vmem:[#allocation2 + $0xc8] sm:$0xff]
        %v765 = vld [vmem:[#allocation2 + $0xd0] sm:$0xff]
        %v766 = vld [vmem:[#allocation2 + $0xd8] sm:$0xff]
        %v767 = vld [vmem:[#allocation2 + $0xe0] sm:$0xff]
        %v768 = vld [vmem:[#allocation2 + $0xe8] sm:$0xff]
        %v769 = vld [vmem:[#allocation2 + $0xf0] sm:$0xff]
        %v770 = vld [vmem:[#allocation2 + $0xf8] sm:$0xff]
        %v771 = vld [vmem:[%s249] sm:$0x1]
        %v773 = vlaneseq
        %v774 = vshrl.u32 %v773, 7
        %v775 = vsub.s32 0, %v774
        %v776 = vrot.slane %v771, %v775
        %v778 = vadd.f32 %v739, %v776
        %v779 = vadd.f32 %v740, %v776
        %v780 = vadd.f32 %v741, %v776
        %v781 = vadd.f32 %v742, %v776
        %v782 = vadd.f32 %v743, %v776
        %v783 = vadd.f32 %v744, %v776
        %v784 = vadd.f32 %v745, %v776
        %v785 = vadd.f32 %v746, %v776
        %v786 = vadd.f32 %v747, %v776
        %v787 = vadd.f32 %v748, %v776
        %v788 = vadd.f32 %v749, %v776
        %v789 = vadd.f32 %v750, %v776
        %v790 = vadd.f32 %v751, %v776
        %v791 = vadd.f32 %v752, %v776
        %v792 = vadd.f32 %v753, %v776
        %v793 = vadd.f32 %v754, %v776
        %v794 = vadd.f32 %v755, %v776
        %v795 = vadd.f32 %v756, %v776
        %v796 = vadd.f32 %v757, %v776
        %v797 = vadd.f32 %v758, %v776
        %v798 = vadd.f32 %v759, %v776
        %v799 = vadd.f32 %v760, %v776
        %v800 = vadd.f32 %v761, %v776
        %v801 = vadd.f32 %v762, %v776
        %v802 = vadd.f32 %v763, %v776
        %v803 = vadd.f32 %v764, %v776
        %v804 = vadd.f32 %v765, %v776
        %v805 = vadd.f32 %v766, %v776
        %v806 = vadd.f32 %v767, %v776
        %v807 = vadd.f32 %v768, %v776
        %v808 = vadd.f32 %v769, %v776
        %v809 = vadd.f32 %v770, %v776
        %810 = vst [vmem:[%s257] sm:$0xff] %v778
        %811 = vst [vmem:[%s257 + $0x8] sm:$0xff] %v779
        %812 = vst [vmem:[%s257 + $0x10] sm:$0xff] %v780
        %813 = vst [vmem:[%s257 + $0x18] sm:$0xff] %v781
        %814 = vst [vmem:[%s257 + $0x20] sm:$0xff] %v782
        %815 = vst [vmem:[%s257 + $0x28] sm:$0xff] %v783
        %816 = vst [vmem:[%s257 + $0x30] sm:$0xff] %v784
        %817 = vst [vmem:[%s257 + $0x38] sm:$0xff] %v785
        %818 = vst [vmem:[%s257 + $0x40] sm:$0xff] %v786
        %819 = vst [vmem:[%s257 + $0x48] sm:$0xff] %v787
        %820 = vst [vmem:[%s257 + $0x50] sm:$0xff] %v788
        %821 = vst [vmem:[%s257 + $0x58] sm:$0xff] %v789
        %822 = vst [vmem:[%s257 + $0x60] sm:$0xff] %v790
        %823 = vst [vmem:[%s257 + $0x68] sm:$0xff] %v791
        %824 = vst [vmem:[%s257 + $0x70] sm:$0xff] %v792
        %825 = vst [vmem:[%s257 + $0x78] sm:$0xff] %v793
        %826 = vst [vmem:[%s257 + $0x80] sm:$0xff] %v794
        %827 = vst [vmem:[%s257 + $0x88] sm:$0xff] %v795
        %828 = vst [vmem:[%s257 + $0x90] sm:$0xff] %v796
        %829 = vst [vmem:[%s257 + $0x98] sm:$0xff] %v797
        %830 = vst [vmem:[%s257 + $0xa0] sm:$0xff] %v798
        %831 = vst [vmem:[%s257 + $0xa8] sm:$0xff] %v799
        %832 = vst [vmem:[%s257 + $0xb0] sm:$0xff] %v800
        %833 = vst [vmem:[%s257 + $0xb8] sm:$0xff] %v801
        %834 = vst [vmem:[%s257 + $0xc0] sm:$0xff] %v802
        %835 = vst [vmem:[%s257 + $0xc8] sm:$0xff] %v803
        %836 = vst [vmem:[%s257 + $0xd0] sm:$0xff] %v804
        %837 = vst [vmem:[%s257 + $0xd8] sm:$0xff] %v805
        %838 = vst [vmem:[%s257 + $0xe0] sm:$0xff] %v806
        %839 = vst [vmem:[%s257 + $0xe8] sm:$0xff] %v807
        %840 = vst [vmem:[%s257 + $0xf0] sm:$0xff] %v808
        %841 = vst [vmem:[%s257 + $0xf8] sm:$0xff] %v809
      $region40: #{yolov5_with_cmaff_forward.11} parent=31 // pred_fallthru
        _
      %s842 = smul.u32 32, %s19
      %p843 = scmp.lt.s32.totalorder %s842, 1023
      %s844 = scalar_select %p843, %s842, 1023
      %p845 = scmp.lt.s32.totalorder %s20, 0
      %s846 = scalar_select %p845, %s20, 0
      %s847 = sadd.s32 %s846, %s844
      %s848 = smul.addr %s847, 8
      %s849 = scalar_lea.vmem %s3, %s848
      // Predicated region
      $region41: #{yolov5_with_cmaff_forward.11} parent=31 // pred_check
        %p850 = pneg %p135
      $region42: #{yolov5_with_cmaff_forward.11} parent=31 // pred_check_branch
        %852 = sbr.rel (%p850) target = $region44
      $region43: #{yolov5_with_cmaff_forward.11} parent=31 // pred_region
        %s853 = smul.u32 32, %s19
      $region44: #{yolov5_with_cmaff_forward.11} parent=31 // pred_fallthru
        _
    $region32: #{yolov5_with_cmaff_forward.11} parent=5 // pred_fallthru
      _
    %p854 = scmp.le.s32.totalorder 2, %s9
    // Predicated region
    $region45: #{yolov5_with_cmaff_forward.11} parent=5 // pred_check
      %p855 = pneg %p854
    $region46: #{yolov5_with_cmaff_forward.11} parent=5 // pred_check_branch
      %857 = sbr.rel (%p855) target = $region48
    $region47: #{yolov5_with_cmaff_forward.11} parent=5 // pred_region
      %s858 = ssub.s32 %s9, 2
      // Predicated region
      $region49: #{yolov5_with_cmaff_forward.11} parent=47 // pred_check
        %p859 = pneg %p141
      $region50: #{yolov5_with_cmaff_forward.11} parent=47 // pred_check_branch
        %861 = sbr.rel (%p859) target = $region52
      $region51: #{yolov5_with_cmaff_forward.11} parent=47 // pred_region
        %s862 = smul.u32 32, %s22
        %p863 = scmp.lt.s32.totalorder %s862, 1023
        %s864 = scalar_select %p863, %s862, 1023
        %p865 = scmp.lt.s32.totalorder %s23, 0
        %s866 = scalar_select %p865, %s23, 0
        %s867 = sadd.s32 %s866, %s864
        %s868 = smul.addr %s867, 8
        %s869 = scalar_lea.vmem %s3, %s868
      $region52: #{yolov5_with_cmaff_forward.11} parent=47 // pred_fallthru
        _
    $region48: #{yolov5_with_cmaff_forward.11} parent=5 // pred_fallthru
      _
  $region6: #{yolov5_with_cmaff_forward.11} parent=0 // loop_footer
    %s13 = sadd.s32 1, %s9
  $region7: #{yolov5_with_cmaff_forward.11} parent=0 // loop_footer_branch
    %8 = sbr.rel target = $region3
  $region8: #{yolov5_with_cmaff_forward.11} parent=0 // loop_exit
    _

// kernel: yolov5_with_cmaff_forward.12
$region0: #{yolov5_with_cmaff_forward.12}
  #allocation0 [shape = 'u32[]', space=smem, size = 0x4, offset = 0x4, fixed_abs, tag = 'smem constant byte address 0x4 - core index']
  #allocation1 [shape = 'u32[144,128]{1,0:T(1,128)}', space=vmem, size = 0x12000, scoped, tag = 'internal scratch']
  %s0 = inlined_call_operand.vmem [shape: f32[2,2,32,2,32,64], index: 0, kind: input, shape index: {}]
  %s1 = inlined_call_operand.vmem [shape: f32[2,2,2,64], index: 1, kind: output, shape index: {}]
  %s2 = sld [smem:[#allocation0]]
  $region37: #{yolov5_with_cmaff_forward.12} parent=0
    _
  %s4 = ssub.s32 1, %s2
  %s5 = scalar_select 0, %s4, %s2
  loop: start=0, step=1, limit=6
  $region2: #{yolov5_with_cmaff_forward.12} parent=0 // loop_pre_header
    _
  $region3: #{yolov5_with_cmaff_forward.12} parent=0 // loop_header
    %s7 = sphi 0, %s11
    %p8 = scmp.ge.s32.totalorder %s7, 6
    %s14 = sphi 0, %s26
    %s15 = sphi 0, %s22
    %s16 = sphi 0, %s14
    %s17 = sphi 0, %s15
    %s18 = sphi 0, %s16
    %s19 = sphi 0, %s17
    %s31 = sphi 0, %s33
    %s34 = sphi 0, %s31
    %s35 = sphi 0, %s34
    %s51 = sphi 0, %s35
    %s59 = sphi 0, %s61
    %s62 = sphi 0, %s59
    %s63 = sphi 0, %s62
    %s79 = sphi 0, %s63
  $region4: #{yolov5_with_cmaff_forward.12} parent=0 // loop_header_branch
    %10 = sbr.rel (%p8) target = $region8
  $region5: #{yolov5_with_cmaff_forward.12} parent=0 // loop_body
    %s12 = ssub.s32 %s7, 1
    %s13 = ssub.s32 %s7, 2
    %s20 = sadd.s32 1, %s15
    %p21 = scmp.ge.s32.totalorder %s20, 2
    %s22 = scalar_select %p21, 0, %s20
    %s23 = sadd.s32 1, %s14
    %s24 = scalar_select %p21, %s23, %s14
    %p25 = scmp.ge.s32.totalorder %s24, 2
    %s26 = scalar_select %p25, 0, %s24
    %s27 = ssub.s32 %s14, %s26
    %s28 = ssub.s32 %s15, %s22
    %s29 = sor.u32 %s27, %s28
    %p30 = scmp.eq.s32.totalorder %s29, 0
    %s32 = sadd.s32 %s31, 1
    %s33 = scalar_select %p30, %s31, %s32
    %p36 = pneg %p30
    %p37 = scmp.eq.s32.totalorder %s7, 3
    %p38 = por %p36, %p37
    %p39 = scmp.ne.s32.totalorder %s31, %s34
    %p40 = scmp.eq.s32.totalorder %s7, 0
    %p41 = por %p39, %p40
    %p42 = scmp.ne.s32.totalorder %s31, %s34
    %p43 = scmp.eq.s32.totalorder %s12, 3
    %p44 = por %p42, %p43
    %p45 = scmp.ne.s32.totalorder %s34, %s35
    %p46 = scmp.eq.s32.totalorder %s12, 0
    %p47 = por %p45, %p46
    %p48 = scmp.ne.s32.totalorder %s34, %s35
    %p49 = scmp.eq.s32.totalorder %s13, 3
    %p50 = por %p48, %p49
    %p52 = scmp.ne.s32.totalorder %s35, %s51
    %p53 = scmp.eq.s32.totalorder %s13, 0
    %p54 = por %p52, %p53
    %s55 = ssub.s32 %s14, %s26
    %s56 = ssub.s32 %s15, %s22
    %s57 = sor.u32 %s55, %s56
    %p58 = scmp.eq.s32.totalorder %s57, 0
    %s60 = sadd.s32 %s59, 1
    %s61 = scalar_select %p58, %s59, %s60
    %p64 = pneg %p58
    %p65 = scmp.eq.s32.totalorder %s7, 3
    %p66 = por %p64, %p65
    %p67 = scmp.ne.s32.totalorder %s59, %s62
    %p68 = scmp.eq.s32.totalorder %s7, 0
    %p69 = por %p67, %p68
    %p70 = scmp.ne.s32.totalorder %s59, %s62
    %p71 = scmp.eq.s32.totalorder %s12, 3
    %p72 = por %p70, %p71
    %p73 = scmp.ne.s32.totalorder %s62, %s63
    %p74 = scmp.eq.s32.totalorder %s12, 0
    %p75 = por %p73, %p74
    %p76 = scmp.ne.s32.totalorder %s62, %s63
    %p77 = scmp.eq.s32.totalorder %s13, 3
    %p78 = por %p76, %p77
    %p80 = scmp.ne.s32.totalorder %s63, %s79
    %p81 = scmp.eq.s32.totalorder %s13, 0
    %p82 = por %p80, %p81
    %p83 = scmp.le.s32.totalorder 1, %s7
    %p84 = scmp.lt.s32.totalorder %s7, 5
    %p85 = pnand %p83, %p84
    %p86 = pneg %p85
    // Predicated region
    $region9: #{yolov5_with_cmaff_forward.12} parent=5 // pred_check
      _
    $region10: #{yolov5_with_cmaff_forward.12} parent=5 // pred_check_branch
      %88 = sbr.rel (%p85) target = $region12
    $region11: #{yolov5_with_cmaff_forward.12} parent=5 // pred_region
      %s89 = ssub.s32 %s7, 1
    $region12: #{yolov5_with_cmaff_forward.12} parent=5 // pred_fallthru
      _
    %p90 = scmp.lt.s32.totalorder %s7, 4
    // Predicated region
    $region13: #{yolov5_with_cmaff_forward.12} parent=5 // pred_check
      %p91 = pneg %p90
    $region14: #{yolov5_with_cmaff_forward.12} parent=5 // pred_check_branch
      %93 = sbr.rel (%p91) target = $region16
    $region15: #{yolov5_with_cmaff_forward.12} parent=5 // pred_region
      // Predicated region
      $region17: #{yolov5_with_cmaff_forward.12} parent=15 // pred_check
        %p94 = pneg %p41
      $region18: #{yolov5_with_cmaff_forward.12} parent=15 // pred_check_branch
        %96 = sbr.rel (%p94) target = $region20
      $region19: #{yolov5_with_cmaff_forward.12} parent=15 // pred_region
        %p97 = scmp.lt.s32.totalorder %s14, 1
        %s98 = scalar_select %p97, %s14, 1
        %p99 = scmp.lt.s32.totalorder %s15, 1
        %s100 = scalar_select %p99, %s15, 1
        %s101 = smul.addr %s100, 256
        %s102 = smul.addr %s98, 512
        %s103 = sadd.s32 %s101, %s102
        %s104 = smul.addr %s103, 8
        %s105 = scalar_lea.vmem %s0, %s104
      $region20: #{yolov5_with_cmaff_forward.12} parent=15 // pred_fallthru
        _
    $region16: #{yolov5_with_cmaff_forward.12} parent=5 // pred_fallthru
      _
    %p106 = scmp.le.s32.totalorder 1, %s7
    %p107 = scmp.lt.s32.totalorder %s7, 5
    %p108 = pnand %p106, %p107
    %p109 = pneg %p108
    // Predicated region
    $region21: #{yolov5_with_cmaff_forward.12} parent=5 // pred_check
      _
    $region22: #{yolov5_with_cmaff_forward.12} parent=5 // pred_check_branch
      %111 = sbr.rel (%p108) target = $region24
    $region23: #{yolov5_with_cmaff_forward.12} parent=5 // pred_region
      %s112 = ssub.s32 %s7, 1
      %p113 = scmp.lt.s32.totalorder %s16, 1
      %s114 = scalar_select %p113, %s16, 1
      %p115 = scmp.lt.s32.totalorder %s17, 1
      %s116 = scalar_select %p115, %s17, 1
      %s117 = smul.addr %s116, 256
      %s118 = smul.addr %s114, 512
      %s119 = sadd.s32 %s117, %s118
      %s120 = smul.addr %s119, 8
      %s121 = scalar_lea.vmem %s0, %s120
      %p122 = pneg %p47
      %p123 = pneg %p44
      %p124 = pneg %p75
      %p125 = pneg %p72
      %p126 = scmp.lt.s32.totalorder %s16, 1
      %s127 = scalar_select %p126, %s16, 1
      %p128 = scmp.lt.s32.totalorder %s17, 1
      %s129 = scalar_select %p128, %s17, 1
      %s130 = smul.addr %s127, 2
      %s131 = sadd.s32 %s129, %s130
      %s132 = smul.addr %s131, 2
      %s133 = scalar_lea.vmem %s1, %s132
      %p134 = scmp.lt.s32.totalorder %s16, 1
      %s135 = scalar_select %p134, %s16, 1
      %p136 = scmp.lt.s32.totalorder %s17, 1
      %s137 = scalar_select %p136, %s17, 1
      %s138 = smul.addr %s137, 256
      %s139 = smul.addr %s135, 512
      %s140 = sadd.s32 %s138, %s139
      %s141 = smul.addr %s140, 8
      %s142 = scalar_lea.vmem %s0, %s141
      %p143 = scmp.lt.s32.totalorder %s16, 1
      %s144 = scalar_select %p143, %s16, 1
      %p145 = scmp.lt.s32.totalorder %s17, 1
      %s146 = scalar_select %p145, %s17, 1
      %s147 = smul.addr %s144, 2
      %s148 = sadd.s32 %s146, %s147
      %s149 = smul.addr %s148, 2
      %s150 = scalar_lea.vmem %s1, %s149
      %v151 = vld [vmem:[%s142] sm:$0xff]
      %v152 = vld [vmem:[%s142 + $0x8] sm:$0xff]
      %v153 = vld [vmem:[%s142 + $0x10] sm:$0xff]
      %v154 = vld [vmem:[%s142 + $0x18] sm:$0xff]
      %v155 = vld [vmem:[%s142 + $0x20] sm:$0xff]
      %v156 = vld [vmem:[%s142 + $0x28] sm:$0xff]
      %v157 = vld [vmem:[%s142 + $0x30] sm:$0xff]
      %v158 = vld [vmem:[%s142 + $0x38] sm:$0xff]
      %v159 = vld [vmem:[%s142 + $0x40] sm:$0xff]
      %v160 = vld [vmem:[%s142 + $0x48] sm:$0xff]
      %v161 = vld [vmem:[%s142 + $0x50] sm:$0xff]
      %v162 = vld [vmem:[%s142 + $0x58] sm:$0xff]
      %v163 = vld [vmem:[%s142 + $0x60] sm:$0xff]
      %v164 = vld [vmem:[%s142 + $0x68] sm:$0xff]
      %v165 = vld [vmem:[%s142 + $0x70] sm:$0xff]
      %v166 = vld [vmem:[%s142 + $0x78] sm:$0xff]
      %v167 = vld [vmem:[%s142 + $0x80] sm:$0xff]
      %v168 = vld [vmem:[%s142 + $0x88] sm:$0xff]
      %v169 = vld [vmem:[%s142 + $0x90] sm:$0xff]
      %v170 = vld [vmem:[%s142 + $0x98] sm:$0xff]
      %v171 = vld [vmem:[%s142 + $0xa0] sm:$0xff]
      %v172 = vld [vmem:[%s142 + $0xa8] sm:$0xff]
      %v173 = vld [vmem:[%s142 + $0xb0] sm:$0xff]
      %v174 = vld [vmem:[%s142 + $0xb8] sm:$0xff]
      %v175 = vld [vmem:[%s142 + $0xc0] sm:$0xff]
      %v176 = vld [vmem:[%s142 + $0xc8] sm:$0xff]
      %v177 = vld [vmem:[%s142 + $0xd0] sm:$0xff]
      %v178 = vld [vmem:[%s142 + $0xd8] sm:$0xff]
      %v179 = vld [vmem:[%s142 + $0xe0] sm:$0xff]
      %v180 = vld [vmem:[%s142 + $0xe8] sm:$0xff]
      %v181 = vld [vmem:[%s142 + $0xf0] sm:$0xff]
      %v182 = vld [vmem:[%s142 + $0xf8] sm:$0xff]
      %v183 = vld [vmem:[%s142 + $0x100] sm:$0xff]
      %v184 = vld [vmem:[%s142 + $0x108] sm:$0xff]
      %v185 = vld [vmem:[%s142 + $0x110] sm:$0xff]
      %v186 = vld [vmem:[%s142 + $0x118] sm:$0xff]
      %v187 = vld [vmem:[%s142 + $0x120] sm:$0xff]
      %v188 = vld [vmem:[%s142 + $0x128] sm:$0xff]
      %v189 = vld [vmem:[%s142 + $0x130] sm:$0xff]
      %v190 = vld [vmem:[%s142 + $0x138] sm:$0xff]
      %v191 = vld [vmem:[%s142 + $0x140] sm:$0xff]
      %v192 = vld [vmem:[%s142 + $0x148] sm:$0xff]
      %v193 = vld [vmem:[%s142 + $0x150] sm:$0xff]
      %v194 = vld [vmem:[%s142 + $0x158] sm:$0xff]
      %v195 = vld [vmem:[%s142 + $0x160] sm:$0xff]
      %v196 = vld [vmem:[%s142 + $0x168] sm:$0xff]
      %v197 = vld [vmem:[%s142 + $0x170] sm:$0xff]
      %v198 = vld [vmem:[%s142 + $0x178] sm:$0xff]
      %v199 = vld [vmem:[%s142 + $0x180] sm:$0xff]
      %v200 = vld [vmem:[%s142 + $0x188] sm:$0xff]
      %v201 = vld [vmem:[%s142 + $0x190] sm:$0xff]
      %v202 = vld [vmem:[%s142 + $0x198] sm:$0xff]
      %v203 = vld [vmem:[%s142 + $0x1a0] sm:$0xff]
      %v204 = vld [vmem:[%s142 + $0x1a8] sm:$0xff]
      %v205 = vld [vmem:[%s142 + $0x1b0] sm:$0xff]
      %v206 = vld [vmem:[%s142 + $0x1b8] sm:$0xff]
      %v207 = vld [vmem:[%s142 + $0x1c0] sm:$0xff]
      %v208 = vld [vmem:[%s142 + $0x1c8] sm:$0xff]
      %v209 = vld [vmem:[%s142 + $0x1d0] sm:$0xff]
      %v210 = vld [vmem:[%s142 + $0x1d8] sm:$0xff]
      %v211 = vld [vmem:[%s142 + $0x1e0] sm:$0xff]
      %v212 = vld [vmem:[%s142 + $0x1e8] sm:$0xff]
      %v213 = vld [vmem:[%s142 + $0x1f0] sm:$0xff]
      %v214 = vld [vmem:[%s142 + $0x1f8] sm:$0xff]
      %v215 = vld [vmem:[%s142 + $0x200] sm:$0xff]
      %v216 = vld [vmem:[%s142 + $0x208] sm:$0xff]
      %v217 = vld [vmem:[%s142 + $0x210] sm:$0xff]
      %v218 = vld [vmem:[%s142 + $0x218] sm:$0xff]
      %v219 = vld [vmem:[%s142 + $0x220] sm:$0xff]
      %v220 = vld [vmem:[%s142 + $0x228] sm:$0xff]
      %v221 = vld [vmem:[%s142 + $0x230] sm:$0xff]
      %v222 = vld [vmem:[%s142 + $0x238] sm:$0xff]
      %v223 = vld [vmem:[%s142 + $0x240] sm:$0xff]
      %v224 = vld [vmem:[%s142 + $0x248] sm:$0xff]
      %v225 = vld [vmem:[%s142 + $0x250] sm:$0xff]
      %v226 = vld [vmem:[%s142 + $0x258] sm:$0xff]
      %v227 = vld [vmem:[%s142 + $0x260] sm:$0xff]
      %v228 = vld [vmem:[%s142 + $0x268] sm:$0xff]
      %v229 = vld [vmem:[%s142 + $0x270] sm:$0xff]
      %v230 = vld [vmem:[%s142 + $0x278] sm:$0xff]
      %v231 = vld [vmem:[%s142 + $0x280] sm:$0xff]
      %v232 = vld [vmem:[%s142 + $0x288] sm:$0xff]
      %v233 = vld [vmem:[%s142 + $0x290] sm:$0xff]
      %v234 = vld [vmem:[%s142 + $0x298] sm:$0xff]
      %v235 = vld [vmem:[%s142 + $0x2a0] sm:$0xff]
      %v236 = vld [vmem:[%s142 + $0x2a8] sm:$0xff]
      %v237 = vld [vmem:[%s142 + $0x2b0] sm:$0xff]
      %v238 = vld [vmem:[%s142 + $0x2b8] sm:$0xff]
      %v239 = vld [vmem:[%s142 + $0x2c0] sm:$0xff]
      %v240 = vld [vmem:[%s142 + $0x2c8] sm:$0xff]
      %v241 = vld [vmem:[%s142 + $0x2d0] sm:$0xff]
      %v242 = vld [vmem:[%s142 + $0x2d8] sm:$0xff]
      %v243 = vld [vmem:[%s142 + $0x2e0] sm:$0xff]
      %v244 = vld [vmem:[%s142 + $0x2e8] sm:$0xff]
      %v245 = vld [vmem:[%s142 + $0x2f0] sm:$0xff]
      %v246 = vld [vmem:[%s142 + $0x2f8] sm:$0xff]
      %v247 = vld [vmem:[%s142 + $0x300] sm:$0xff]
      %v248 = vld [vmem:[%s142 + $0x308] sm:$0xff]
      %v249 = vld [vmem:[%s142 + $0x310] sm:$0xff]
      %v250 = vld [vmem:[%s142 + $0x318] sm:$0xff]
      %v251 = vld [vmem:[%s142 + $0x320] sm:$0xff]
      %v252 = vld [vmem:[%s142 + $0x328] sm:$0xff]
      %v253 = vld [vmem:[%s142 + $0x330] sm:$0xff]
      %v254 = vld [vmem:[%s142 + $0x338] sm:$0xff]
      %v255 = vld [vmem:[%s142 + $0x340] sm:$0xff]
      %v256 = vld [vmem:[%s142 + $0x348] sm:$0xff]
      %v257 = vld [vmem:[%s142 + $0x350] sm:$0xff]
      %v258 = vld [vmem:[%s142 + $0x358] sm:$0xff]
      %v259 = vld [vmem:[%s142 + $0x360] sm:$0xff]
      %v260 = vld [vmem:[%s142 + $0x368] sm:$0xff]
      %v261 = vld [vmem:[%s142 + $0x370] sm:$0xff]
      %v262 = vld [vmem:[%s142 + $0x378] sm:$0xff]
      %v263 = vld [vmem:[%s142 + $0x380] sm:$0xff]
      %v264 = vld [vmem:[%s142 + $0x388] sm:$0xff]
      %v265 = vld [vmem:[%s142 + $0x390] sm:$0xff]
      %v266 = vld [vmem:[%s142 + $0x398] sm:$0xff]
      %v267 = vld [vmem:[%s142 + $0x3a0] sm:$0xff]
      %v268 = vld [vmem:[%s142 + $0x3a8] sm:$0xff]
      %v269 = vld [vmem:[%s142 + $0x3b0] sm:$0xff]
      %v270 = vld [vmem:[%s142 + $0x3b8] sm:$0xff]
      %v271 = vld [vmem:[%s142 + $0x3c0] sm:$0xff]
      %v272 = vld [vmem:[%s142 + $0x3c8] sm:$0xff]
      %v273 = vld [vmem:[%s142 + $0x3d0] sm:$0xff]
      %v274 = vld [vmem:[%s142 + $0x3d8] sm:$0xff]
      %v275 = vld [vmem:[%s142 + $0x3e0] sm:$0xff]
      %v276 = vld [vmem:[%s142 + $0x3e8] sm:$0xff]
      %v277 = vld [vmem:[%s142 + $0x3f0] sm:$0xff]
      %v278 = vld [vmem:[%s142 + $0x3f8] sm:$0xff]
      %v279 = vld [vmem:[%s142 + $0x400] sm:$0xff]
      %v280 = vld [vmem:[%s142 + $0x408] sm:$0xff]
      %v281 = vld [vmem:[%s142 + $0x410] sm:$0xff]
      %v282 = vld [vmem:[%s142 + $0x418] sm:$0xff]
      %v283 = vld [vmem:[%s142 + $0x420] sm:$0xff]
      %v284 = vld [vmem:[%s142 + $0x428] sm:$0xff]
      %v285 = vld [vmem:[%s142 + $0x430] sm:$0xff]
      %v286 = vld [vmem:[%s142 + $0x438] sm:$0xff]
      %v287 = vld [vmem:[%s142 + $0x440] sm:$0xff]
      %v288 = vld [vmem:[%s142 + $0x448] sm:$0xff]
      %v289 = vld [vmem:[%s142 + $0x450] sm:$0xff]
      %v290 = vld [vmem:[%s142 + $0x458] sm:$0xff]
      %v291 = vld [vmem:[%s142 + $0x460] sm:$0xff]
      %v292 = vld [vmem:[%s142 + $0x468] sm:$0xff]
      %v293 = vld [vmem:[%s142 + $0x470] sm:$0xff]
      %v294 = vld [vmem:[%s142 + $0x478] sm:$0xff]
      %v295 = vld [vmem:[%s142 + $0x480] sm:$0xff]
      %v296 = vld [vmem:[%s142 + $0x488] sm:$0xff]
      %v297 = vld [vmem:[%s142 + $0x490] sm:$0xff]
      %v298 = vld [vmem:[%s142 + $0x498] sm:$0xff]
      %v299 = vld [vmem:[%s142 + $0x4a0] sm:$0xff]
      %v300 = vld [vmem:[%s142 + $0x4a8] sm:$0xff]
      %v301 = vld [vmem:[%s142 + $0x4b0] sm:$0xff]
      %v302 = vld [vmem:[%s142 + $0x4b8] sm:$0xff]
      %v303 = vld [vmem:[%s142 + $0x4c0] sm:$0xff]
      %v304 = vld [vmem:[%s142 + $0x4c8] sm:$0xff]
      %v305 = vld [vmem:[%s142 + $0x4d0] sm:$0xff]
      %v306 = vld [vmem:[%s142 + $0x4d8] sm:$0xff]
      %v307 = vld [vmem:[%s142 + $0x4e0] sm:$0xff]
      %v308 = vld [vmem:[%s142 + $0x4e8] sm:$0xff]
      %v309 = vld [vmem:[%s142 + $0x4f0] sm:$0xff]
      %v310 = vld [vmem:[%s142 + $0x4f8] sm:$0xff]
      %v311 = vld [vmem:[%s142 + $0x500] sm:$0xff]
      %v312 = vld [vmem:[%s142 + $0x508] sm:$0xff]
      %v313 = vld [vmem:[%s142 + $0x510] sm:$0xff]
      %v314 = vld [vmem:[%s142 + $0x518] sm:$0xff]
      %v315 = vld [vmem:[%s142 + $0x520] sm:$0xff]
      %v316 = vld [vmem:[%s142 + $0x528] sm:$0xff]
      %v317 = vld [vmem:[%s142 + $0x530] sm:$0xff]
      %v318 = vld [vmem:[%s142 + $0x538] sm:$0xff]
      %v319 = vld [vmem:[%s142 + $0x540] sm:$0xff]
      %v320 = vld [vmem:[%s142 + $0x548] sm:$0xff]
      %v321 = vld [vmem:[%s142 + $0x550] sm:$0xff]
      %v322 = vld [vmem:[%s142 + $0x558] sm:$0xff]
      %v323 = vld [vmem:[%s142 + $0x560] sm:$0xff]
      %v324 = vld [vmem:[%s142 + $0x568] sm:$0xff]
      %v325 = vld [vmem:[%s142 + $0x570] sm:$0xff]
      %v326 = vld [vmem:[%s142 + $0x578] sm:$0xff]
      %v327 = vld [vmem:[%s142 + $0x580] sm:$0xff]
      %v328 = vld [vmem:[%s142 + $0x588] sm:$0xff]
      %v329 = vld [vmem:[%s142 + $0x590] sm:$0xff]
      %v330 = vld [vmem:[%s142 + $0x598] sm:$0xff]
      %v331 = vld [vmem:[%s142 + $0x5a0] sm:$0xff]
      %v332 = vld [vmem:[%s142 + $0x5a8] sm:$0xff]
      %v333 = vld [vmem:[%s142 + $0x5b0] sm:$0xff]
      %v334 = vld [vmem:[%s142 + $0x5b8] sm:$0xff]
      %v335 = vld [vmem:[%s142 + $0x5c0] sm:$0xff]
      %v336 = vld [vmem:[%s142 + $0x5c8] sm:$0xff]
      %v337 = vld [vmem:[%s142 + $0x5d0] sm:$0xff]
      %v338 = vld [vmem:[%s142 + $0x5d8] sm:$0xff]
      %v339 = vld [vmem:[%s142 + $0x5e0] sm:$0xff]
      %v340 = vld [vmem:[%s142 + $0x5e8] sm:$0xff]
      %v341 = vld [vmem:[%s142 + $0x5f0] sm:$0xff]
      %v342 = vld [vmem:[%s142 + $0x5f8] sm:$0xff]
      %v343 = vld [vmem:[%s142 + $0x600] sm:$0xff]
      %v344 = vld [vmem:[%s142 + $0x608] sm:$0xff]
      %v345 = vld [vmem:[%s142 + $0x610] sm:$0xff]
      %v346 = vld [vmem:[%s142 + $0x618] sm:$0xff]
      %v347 = vld [vmem:[%s142 + $0x620] sm:$0xff]
      %v348 = vld [vmem:[%s142 + $0x628] sm:$0xff]
      %v349 = vld [vmem:[%s142 + $0x630] sm:$0xff]
      %v350 = vld [vmem:[%s142 + $0x638] sm:$0xff]
      %v351 = vld [vmem:[%s142 + $0x640] sm:$0xff]
      %v352 = vld [vmem:[%s142 + $0x648] sm:$0xff]
      %v353 = vld [vmem:[%s142 + $0x650] sm:$0xff]
      %v354 = vld [vmem:[%s142 + $0x658] sm:$0xff]
      %v355 = vld [vmem:[%s142 + $0x660] sm:$0xff]
      %v356 = vld [vmem:[%s142 + $0x668] sm:$0xff]
      %v357 = vld [vmem:[%s142 + $0x670] sm:$0xff]
      %v358 = vld [vmem:[%s142 + $0x678] sm:$0xff]
      %v359 = vld [vmem:[%s142 + $0x680] sm:$0xff]
      %v360 = vld [vmem:[%s142 + $0x688] sm:$0xff]
      %v361 = vld [vmem:[%s142 + $0x690] sm:$0xff]
      %v362 = vld [vmem:[%s142 + $0x698] sm:$0xff]
      %v363 = vld [vmem:[%s142 + $0x6a0] sm:$0xff]
      %v364 = vld [vmem:[%s142 + $0x6a8] sm:$0xff]
      %v365 = vld [vmem:[%s142 + $0x6b0] sm:$0xff]
      %v366 = vld [vmem:[%s142 + $0x6b8] sm:$0xff]
      %v367 = vld [vmem:[%s142 + $0x6c0] sm:$0xff]
      %v368 = vld [vmem:[%s142 + $0x6c8] sm:$0xff]
      %v369 = vld [vmem:[%s142 + $0x6d0] sm:$0xff]
      %v370 = vld [vmem:[%s142 + $0x6d8] sm:$0xff]
      %v371 = vld [vmem:[%s142 + $0x6e0] sm:$0xff]
      %v372 = vld [vmem:[%s142 + $0x6e8] sm:$0xff]
      %v373 = vld [vmem:[%s142 + $0x6f0] sm:$0xff]
      %v374 = vld [vmem:[%s142 + $0x6f8] sm:$0xff]
      %v375 = vld [vmem:[%s142 + $0x700] sm:$0xff]
      %v376 = vld [vmem:[%s142 + $0x708] sm:$0xff]
      %v377 = vld [vmem:[%s142 + $0x710] sm:$0xff]
      %v378 = vld [vmem:[%s142 + $0x718] sm:$0xff]
      %v379 = vld [vmem:[%s142 + $0x720] sm:$0xff]
      %v380 = vld [vmem:[%s142 + $0x728] sm:$0xff]
      %v381 = vld [vmem:[%s142 + $0x730] sm:$0xff]
      %v382 = vld [vmem:[%s142 + $0x738] sm:$0xff]
      %v383 = vld [vmem:[%s142 + $0x740] sm:$0xff]
      %v384 = vld [vmem:[%s142 + $0x748] sm:$0xff]
      %v385 = vld [vmem:[%s142 + $0x750] sm:$0xff]
      %v386 = vld [vmem:[%s142 + $0x758] sm:$0xff]
      %v387 = vld [vmem:[%s142 + $0x760] sm:$0xff]
      %v388 = vld [vmem:[%s142 + $0x768] sm:$0xff]
      %v389 = vld [vmem:[%s142 + $0x770] sm:$0xff]
      %v390 = vld [vmem:[%s142 + $0x778] sm:$0xff]
      %v391 = vld [vmem:[%s142 + $0x780] sm:$0xff]
      %v392 = vld [vmem:[%s142 + $0x788] sm:$0xff]
      %v393 = vld [vmem:[%s142 + $0x790] sm:$0xff]
      %v394 = vld [vmem:[%s142 + $0x798] sm:$0xff]
      %v395 = vld [vmem:[%s142 + $0x7a0] sm:$0xff]
      %v396 = vld [vmem:[%s142 + $0x7a8] sm:$0xff]
      %v397 = vld [vmem:[%s142 + $0x7b0] sm:$0xff]
      %v398 = vld [vmem:[%s142 + $0x7b8] sm:$0xff]
      %v399 = vld [vmem:[%s142 + $0x7c0] sm:$0xff]
      %v400 = vld [vmem:[%s142 + $0x7c8] sm:$0xff]
      %v401 = vld [vmem:[%s142 + $0x7d0] sm:$0xff]
      %v402 = vld [vmem:[%s142 + $0x7d8] sm:$0xff]
      %v403 = vld [vmem:[%s142 + $0x7e0] sm:$0xff]
      %v404 = vld [vmem:[%s142 + $0x7e8] sm:$0xff]
      %v405 = vld [vmem:[%s142 + $0x7f0] sm:$0xff]
      %v406 = vld [vmem:[%s142 + $0x7f8] sm:$0xff]
      %vm407 = vcmask 523264
      %v408 = vsel %vm407, %v151, -inf
      %v409 = vsel %vm407, %v152, -inf
      %v410 = vmax.f32 %v408, %v409
      %v411 = vsel %vm407, %v153, -inf
      %v412 = vmax.f32 %v410, %v411
      %v413 = vsel %vm407, %v154, -inf
      %v414 = vmax.f32 %v412, %v413
      %v415 = vrot.slane %v414, 4
      %v416 = vmax.f32 %v414, %v415
      %v417 = vrot.slane %v416, 2
      %v418 = vmax.f32 %v416, %v417
      %v419 = vrot.slane %v418, 1
      %v420 = vmax.f32 %v418, %v419
      %v421 = vsel %vm407, %v155, -inf
      %v422 = vsel %vm407, %v156, -inf
      %v423 = vmax.f32 %v421, %v422
      %v424 = vsel %vm407, %v157, -inf
      %v425 = vmax.f32 %v423, %v424
      %v426 = vsel %vm407, %v158, -inf
      %v427 = vmax.f32 %v425, %v426
      %v428 = vrot.slane %v427, 4
      %v429 = vmax.f32 %v427, %v428
      %v430 = vrot.slane %v429, 2
      %v431 = vmax.f32 %v429, %v430
      %v432 = vrot.slane %v431, 1
      %v433 = vmax.f32 %v431, %v432
      %v434 = vsel %vm407, %v159, -inf
      %v435 = vsel %vm407, %v160, -inf
      %v436 = vmax.f32 %v434, %v435
      %v437 = vsel %vm407, %v161, -inf
      %v438 = vmax.f32 %v436, %v437
      %v439 = vsel %vm407, %v162, -inf
      %v440 = vmax.f32 %v438, %v439
      %v441 = vrot.slane %v440, 4
      %v442 = vmax.f32 %v440, %v441
      %v443 = vrot.slane %v442, 2
      %v444 = vmax.f32 %v442, %v443
      %v445 = vrot.slane %v444, 1
      %v446 = vmax.f32 %v444, %v445
      %v447 = vsel %vm407, %v163, -inf
      %v448 = vsel %vm407, %v164, -inf
      %v449 = vmax.f32 %v447, %v448
      %v450 = vsel %vm407, %v165, -inf
      %v451 = vmax.f32 %v449, %v450
      %v452 = vsel %vm407, %v166, -inf
      %v453 = vmax.f32 %v451, %v452
      %v454 = vrot.slane %v453, 4
      %v455 = vmax.f32 %v453, %v454
      %v456 = vrot.slane %v455, 2
      %v457 = vmax.f32 %v455, %v456
      %v458 = vrot.slane %v457, 1
      %v459 = vmax.f32 %v457, %v458
      %v460 = vsel %vm407, %v167, -inf
      %v461 = vsel %vm407, %v168, -inf
      %v462 = vmax.f32 %v460, %v461
      %v463 = vsel %vm407, %v169, -inf
      %v464 = vmax.f32 %v462, %v463
      %v465 = vsel %vm407, %v170, -inf
      %v466 = vmax.f32 %v464, %v465
      %v467 = vrot.slane %v466, 4
      %v468 = vmax.f32 %v466, %v467
      %v469 = vrot.slane %v468, 2
      %v470 = vmax.f32 %v468, %v469
      %v471 = vrot.slane %v470, 1
      %v472 = vmax.f32 %v470, %v471
      %v473 = vsel %vm407, %v171, -inf
      %v474 = vsel %vm407, %v172, -inf
      %v475 = vmax.f32 %v473, %v474
      %v476 = vsel %vm407, %v173, -inf
      %v477 = vmax.f32 %v475, %v476
      %v478 = vsel %vm407, %v174, -inf
      %v479 = vmax.f32 %v477, %v478
      %v480 = vrot.slane %v479, 4
      %v481 = vmax.f32 %v479, %v480
      %v482 = vrot.slane %v481, 2
      %v483 = vmax.f32 %v481, %v482
      %v484 = vrot.slane %v483, 1
      %v485 = vmax.f32 %v483, %v484
      %v486 = vsel %vm407, %v175, -inf
      %v487 = vsel %vm407, %v176, -inf
      %v488 = vmax.f32 %v486, %v487
      %v489 = vsel %vm407, %v177, -inf
      %v490 = vmax.f32 %v488, %v489
      %v491 = vsel %vm407, %v178, -inf
      %v492 = vmax.f32 %v490, %v491
      %v493 = vrot.slane %v492, 4
      %v494 = vmax.f32 %v492, %v493
      %v495 = vrot.slane %v494, 2
      %v496 = vmax.f32 %v494, %v495
      %v497 = vrot.slane %v496, 1
      %v498 = vmax.f32 %v496, %v497
      %v499 = vsel %vm407, %v179, -inf
      %v500 = vsel %vm407, %v180, -inf
      %v501 = vmax.f32 %v499, %v500
      %v502 = vsel %vm407, %v181, -inf
      %v503 = vmax.f32 %v501, %v502
      %v504 = vsel %vm407, %v182, -inf
      %v505 = vmax.f32 %v503, %v504
      %v506 = vrot.slane %v505, 4
      %v507 = vmax.f32 %v505, %v506
      %v508 = vrot.slane %v507, 2
      %v509 = vmax.f32 %v507, %v508
      %v510 = vrot.slane %v509, 1
      %v511 = vmax.f32 %v509, %v510
      %v512 = vsel %vm407, %v183, -inf
      %v513 = vsel %vm407, %v184, -inf
      %v514 = vmax.f32 %v512, %v513
      %v515 = vsel %vm407, %v185, -inf
      %v516 = vmax.f32 %v514, %v515
      %v517 = vsel %vm407, %v186, -inf
      %v518 = vmax.f32 %v516, %v517
      %v519 = vrot.slane %v518, 4
      %v520 = vmax.f32 %v518, %v519
      %v521 = vrot.slane %v520, 2
      %v522 = vmax.f32 %v520, %v521
      %v523 = vrot.slane %v522, 1
      %v524 = vmax.f32 %v522, %v523
      %v525 = vsel %vm407, %v187, -inf
      %v526 = vsel %vm407, %v188, -inf
      %v527 = vmax.f32 %v525, %v526
      %v528 = vsel %vm407, %v189, -inf
      %v529 = vmax.f32 %v527, %v528
      %v530 = vsel %vm407, %v190, -inf
      %v531 = vmax.f32 %v529, %v530
      %v532 = vrot.slane %v531, 4
      %v533 = vmax.f32 %v531, %v532
      %v534 = vrot.slane %v533, 2
      %v535 = vmax.f32 %v533, %v534
      %v536 = vrot.slane %v535, 1
      %v537 = vmax.f32 %v535, %v536
      %v538 = vsel %vm407, %v191, -inf
      %v539 = vsel %vm407, %v192, -inf
      %v540 = vmax.f32 %v538, %v539
      %v541 = vsel %vm407, %v193, -inf
      %v542 = vmax.f32 %v540, %v541
      %v543 = vsel %vm407, %v194, -inf
      %v544 = vmax.f32 %v542, %v543
      %v545 = vrot.slane %v544, 4
      %v546 = vmax.f32 %v544, %v545
      %v547 = vrot.slane %v546, 2
      %v548 = vmax.f32 %v546, %v547
      %v549 = vrot.slane %v548, 1
      %v550 = vmax.f32 %v548, %v549
      %v551 = vsel %vm407, %v195, -inf
      %v552 = vsel %vm407, %v196, -inf
      %v553 = vmax.f32 %v551, %v552
      %v554 = vsel %vm407, %v197, -inf
      %v555 = vmax.f32 %v553, %v554
      %v556 = vsel %vm407, %v198, -inf
      %v557 = vmax.f32 %v555, %v556
      %v558 = vrot.slane %v557, 4
      %v559 = vmax.f32 %v557, %v558
      %v560 = vrot.slane %v559, 2
      %v561 = vmax.f32 %v559, %v560
      %v562 = vrot.slane %v561, 1
      %v563 = vmax.f32 %v561, %v562
      %v564 = vsel %vm407, %v199, -inf
      %v565 = vsel %vm407, %v200, -inf
      %v566 = vmax.f32 %v564, %v565
      %v567 = vsel %vm407, %v201, -inf
      %v568 = vmax.f32 %v566, %v567
      %v569 = vsel %vm407, %v202, -inf
      %v570 = vmax.f32 %v568, %v569
      %v571 = vrot.slane %v570, 4
      %v572 = vmax.f32 %v570, %v571
      %v573 = vrot.slane %v572, 2
      %v574 = vmax.f32 %v572, %v573
      %v575 = vrot.slane %v574, 1
      %v576 = vmax.f32 %v574, %v575
      %v577 = vsel %vm407, %v203, -inf
      %v578 = vsel %vm407, %v204, -inf
      %v579 = vmax.f32 %v577, %v578
      %v580 = vsel %vm407, %v205, -inf
      %v581 = vmax.f32 %v579, %v580
      %v582 = vsel %vm407, %v206, -inf
      %v583 = vmax.f32 %v581, %v582
      %v584 = vrot.slane %v583, 4
      %v585 = vmax.f32 %v583, %v584
      %v586 = vrot.slane %v585, 2
      %v587 = vmax.f32 %v585, %v586
      %v588 = vrot.slane %v587, 1
      %v589 = vmax.f32 %v587, %v588
      %v590 = vsel %vm407, %v207, -inf
      %v591 = vsel %vm407, %v208, -inf
      %v592 = vmax.f32 %v590, %v591
      %v593 = vsel %vm407, %v209, -inf
      %v594 = vmax.f32 %v592, %v593
      %v595 = vsel %vm407, %v210, -inf
      %v596 = vmax.f32 %v594, %v595
      %v597 = vrot.slane %v596, 4
      %v598 = vmax.f32 %v596, %v597
      %v599 = vrot.slane %v598, 2
      %v600 = vmax.f32 %v598, %v599
      %v601 = vrot.slane %v600, 1
      %v602 = vmax.f32 %v600, %v601
      %v603 = vsel %vm407, %v211, -inf
      %v604 = vsel %vm407, %v212, -inf
      %v605 = vmax.f32 %v603, %v604
      %v606 = vsel %vm407, %v213, -inf
      %v607 = vmax.f32 %v605, %v606
      %v608 = vsel %vm407, %v214, -inf
      %v609 = vmax.f32 %v607, %v608
      %v610 = vrot.slane %v609, 4
      %v611 = vmax.f32 %v609, %v610
      %v612 = vrot.slane %v611, 2
      %v613 = vmax.f32 %v611, %v612
      %v614 = vrot.slane %v613, 1
      %v615 = vmax.f32 %v613, %v614
      %v616 = vsel %vm407, %v215, -inf
      %v617 = vsel %vm407, %v216, -inf
      %v618 = vmax.f32 %v616, %v617
      %v619 = vsel %vm407, %v217, -inf
      %v620 = vmax.f32 %v618, %v619
      %v621 = vsel %vm407, %v218, -inf
      %v622 = vmax.f32 %v620, %v621
      %v623 = vrot.slane %v622, 4
      %v624 = vmax.f32 %v622, %v623
      %v625 = vrot.slane %v624, 2
      %v626 = vmax.f32 %v624, %v625
      %v627 = vrot.slane %v626, 1
      %v628 = vmax.f32 %v626, %v627
      %v629 = vsel %vm407, %v219, -inf
      %v630 = vsel %vm407, %v220, -inf
      %v631 = vmax.f32 %v629, %v630
      %v632 = vsel %vm407, %v221, -inf
      %v633 = vmax.f32 %v631, %v632
      %v634 = vsel %vm407, %v222, -inf
      %v635 = vmax.f32 %v633, %v634
      %v636 = vrot.slane %v635, 4
      %v637 = vmax.f32 %v635, %v636
      %v638 = vrot.slane %v637, 2
      %v639 = vmax.f32 %v637, %v638
      %v640 = vrot.slane %v639, 1
      %v641 = vmax.f32 %v639, %v640
      %v642 = vsel %vm407, %v223, -inf
      %v643 = vsel %vm407, %v224, -inf
      %v644 = vmax.f32 %v642, %v643
      %v645 = vsel %vm407, %v225, -inf
      %v646 = vmax.f32 %v644, %v645
      %v647 = vsel %vm407, %v226, -inf
      %v648 = vmax.f32 %v646, %v647
      %v649 = vrot.slane %v648, 4
      %v650 = vmax.f32 %v648, %v649
      %v651 = vrot.slane %v650, 2
      %v652 = vmax.f32 %v650, %v651
      %v653 = vrot.slane %v652, 1
      %v654 = vmax.f32 %v652, %v653
      %v655 = vsel %vm407, %v227, -inf
      %v656 = vsel %vm407, %v228, -inf
      %v657 = vmax.f32 %v655, %v656
      %v658 = vsel %vm407, %v229, -inf
      %v659 = vmax.f32 %v657, %v658
      %v660 = vsel %vm407, %v230, -inf
      %v661 = vmax.f32 %v659, %v660
      %v662 = vrot.slane %v661, 4
      %v663 = vmax.f32 %v661, %v662
      %v664 = vrot.slane %v663, 2
      %v665 = vmax.f32 %v663, %v664
      %v666 = vrot.slane %v665, 1
      %v667 = vmax.f32 %v665, %v666
      %v668 = vsel %vm407, %v231, -inf
      %v669 = vsel %vm407, %v232, -inf
      %v670 = vmax.f32 %v668, %v669
      %v671 = vsel %vm407, %v233, -inf
      %v672 = vmax.f32 %v670, %v671
      %v673 = vsel %vm407, %v234, -inf
      %v674 = vmax.f32 %v672, %v673
      %v675 = vrot.slane %v674, 4
      %v676 = vmax.f32 %v674, %v675
      %v677 = vrot.slane %v676, 2
      %v678 = vmax.f32 %v676, %v677
      %v679 = vrot.slane %v678, 1
      %v680 = vmax.f32 %v678, %v679
      %v681 = vsel %vm407, %v235, -inf
      %v682 = vsel %vm407, %v236, -inf
      %v683 = vmax.f32 %v681, %v682
      %v684 = vsel %vm407, %v237, -inf
      %v685 = vmax.f32 %v683, %v684
      %v686 = vsel %vm407, %v238, -inf
      %v687 = vmax.f32 %v685, %v686
      %v688 = vrot.slane %v687, 4
      %v689 = vmax.f32 %v687, %v688
      %v690 = vrot.slane %v689, 2
      %v691 = vmax.f32 %v689, %v690
      %v692 = vrot.slane %v691, 1
      %v693 = vmax.f32 %v691, %v692
      %v694 = vsel %vm407, %v239, -inf
      %v695 = vsel %vm407, %v240, -inf
      %v696 = vmax.f32 %v694, %v695
      %v697 = vsel %vm407, %v241, -inf
      %v698 = vmax.f32 %v696, %v697
      %v699 = vsel %vm407, %v242, -inf
      %v700 = vmax.f32 %v698, %v699
      %v701 = vrot.slane %v700, 4
      %v702 = vmax.f32 %v700, %v701
      %v703 = vrot.slane %v702, 2
      %v704 = vmax.f32 %v702, %v703
      %v705 = vrot.slane %v704, 1
      %v706 = vmax.f32 %v704, %v705
      %v707 = vsel %vm407, %v243, -inf
      %v708 = vsel %vm407, %v244, -inf
      %v709 = vmax.f32 %v707, %v708
      %v710 = vsel %vm407, %v245, -inf
      %v711 = vmax.f32 %v709, %v710
      %v712 = vsel %vm407, %v246, -inf
      %v713 = vmax.f32 %v711, %v712
      %v714 = vrot.slane %v713, 4
      %v715 = vmax.f32 %v713, %v714
      %v716 = vrot.slane %v715, 2
      %v717 = vmax.f32 %v715, %v716
      %v718 = vrot.slane %v717, 1
      %v719 = vmax.f32 %v717, %v718
      %v720 = vsel %vm407, %v247, -inf
      %v721 = vsel %vm407, %v248, -inf
      %v722 = vmax.f32 %v720, %v721
      %v723 = vsel %vm407, %v249, -inf
      %v724 = vmax.f32 %v722, %v723
      %v725 = vsel %vm407, %v250, -inf
      %v726 = vmax.f32 %v724, %v725
      %v727 = vrot.slane %v726, 4
      %v728 = vmax.f32 %v726, %v727
      %v729 = vrot.slane %v728, 2
      %v730 = vmax.f32 %v728, %v729
      %v731 = vrot.slane %v730, 1
      %v732 = vmax.f32 %v730, %v731
      %v733 = vsel %vm407, %v251, -inf
      %v734 = vsel %vm407, %v252, -inf
      %v735 = vmax.f32 %v733, %v734
      %v736 = vsel %vm407, %v253, -inf
      %v737 = vmax.f32 %v735, %v736
      %v738 = vsel %vm407, %v254, -inf
      %v739 = vmax.f32 %v737, %v738
      %v740 = vrot.slane %v739, 4
      %v741 = vmax.f32 %v739, %v740
      %v742 = vrot.slane %v741, 2
      %v743 = vmax.f32 %v741, %v742
      %v744 = vrot.slane %v743, 1
      %v745 = vmax.f32 %v743, %v744
      %v746 = vsel %vm407, %v255, -inf
      %v747 = vsel %vm407, %v256, -inf
      %v748 = vmax.f32 %v746, %v747
      %v749 = vsel %vm407, %v257, -inf
      %v750 = vmax.f32 %v748, %v749
      %v751 = vsel %vm407, %v258, -inf
      %v752 = vmax.f32 %v750, %v751
      %v753 = vrot.slane %v752, 4
      %v754 = vmax.f32 %v752, %v753
      %v755 = vrot.slane %v754, 2
      %v756 = vmax.f32 %v754, %v755
      %v757 = vrot.slane %v756, 1
      %v758 = vmax.f32 %v756, %v757
      %v759 = vsel %vm407, %v259, -inf
      %v760 = vsel %vm407, %v260, -inf
      %v761 = vmax.f32 %v759, %v760
      %v762 = vsel %vm407, %v261, -inf
      %v763 = vmax.f32 %v761, %v762
      %v764 = vsel %vm407, %v262, -inf
      %v765 = vmax.f32 %v763, %v764
      %v766 = vrot.slane %v765, 4
      %v767 = vmax.f32 %v765, %v766
      %v768 = vrot.slane %v767, 2
      %v769 = vmax.f32 %v767, %v768
      %v770 = vrot.slane %v769, 1
      %v771 = vmax.f32 %v769, %v770
      %v772 = vsel %vm407, %v263, -inf
      %v773 = vsel %vm407, %v264, -inf
      %v774 = vmax.f32 %v772, %v773
      %v775 = vsel %vm407, %v265, -inf
      %v776 = vmax.f32 %v774, %v775
      %v777 = vsel %vm407, %v266, -inf
      %v778 = vmax.f32 %v776, %v777
      %v779 = vrot.slane %v778, 4
      %v780 = vmax.f32 %v778, %v779
      %v781 = vrot.slane %v780, 2
      %v782 = vmax.f32 %v780, %v781
      %v783 = vrot.slane %v782, 1
      %v784 = vmax.f32 %v782, %v783
      %v785 = vsel %vm407, %v267, -inf
      %v786 = vsel %vm407, %v268, -inf
      %v787 = vmax.f32 %v785, %v786
      %v788 = vsel %vm407, %v269, -inf
      %v789 = vmax.f32 %v787, %v788
      %v790 = vsel %vm407, %v270, -inf
      %v791 = vmax.f32 %v789, %v790
      %v792 = vrot.slane %v791, 4
      %v793 = vmax.f32 %v791, %v792
      %v794 = vrot.slane %v793, 2
      %v795 = vmax.f32 %v793, %v794
      %v796 = vrot.slane %v795, 1
      %v797 = vmax.f32 %v795, %v796
      %v798 = vsel %vm407, %v271, -inf
      %v799 = vsel %vm407, %v272, -inf
      %v800 = vmax.f32 %v798, %v799
      %v801 = vsel %vm407, %v273, -inf
      %v802 = vmax.f32 %v800, %v801
      %v803 = vsel %vm407, %v274, -inf
      %v804 = vmax.f32 %v802, %v803
      %v805 = vrot.slane %v804, 4
      %v806 = vmax.f32 %v804, %v805
      %v807 = vrot.slane %v806, 2
      %v808 = vmax.f32 %v806, %v807
      %v809 = vrot.slane %v808, 1
      %v810 = vmax.f32 %v808, %v809
      %v811 = vsel %vm407, %v275, -inf
      %v812 = vsel %vm407, %v276, -inf
      %v813 = vmax.f32 %v811, %v812
      %v814 = vsel %vm407, %v277, -inf
      %v815 = vmax.f32 %v813, %v814
      %v816 = vsel %vm407, %v278, -inf
      %v817 = vmax.f32 %v815, %v816
      %v818 = vrot.slane %v817, 4
      %v819 = vmax.f32 %v817, %v818
      %v820 = vrot.slane %v819, 2
      %v821 = vmax.f32 %v819, %v820
      %v822 = vrot.slane %v821, 1
      %v823 = vmax.f32 %v821, %v822
      %v824 = vsel %vm407, %v279, -inf
      %v825 = vsel %vm407, %v280, -inf
      %v826 = vmax.f32 %v824, %v825
      %v827 = vsel %vm407, %v281, -inf
      %v828 = vmax.f32 %v826, %v827
      %v829 = vsel %vm407, %v282, -inf
      %v830 = vmax.f32 %v828, %v829
      %v831 = vrot.slane %v830, 4
      %v832 = vmax.f32 %v830, %v831
      %v833 = vrot.slane %v832, 2
      %v834 = vmax.f32 %v832, %v833
      %v835 = vrot.slane %v834, 1
      %v836 = vmax.f32 %v834, %v835
      %v837 = vsel %vm407, %v283, -inf
      %v838 = vsel %vm407, %v284, -inf
      %v839 = vmax.f32 %v837, %v838
      %v840 = vsel %vm407, %v285, -inf
      %v841 = vmax.f32 %v839, %v840
      %v842 = vsel %vm407, %v286, -inf
      %v843 = vmax.f32 %v841, %v842
      %v844 = vrot.slane %v843, 4
      %v845 = vmax.f32 %v843, %v844
      %v846 = vrot.slane %v845, 2
      %v847 = vmax.f32 %v845, %v846
      %v848 = vrot.slane %v847, 1
      %v849 = vmax.f32 %v847, %v848
      %v850 = vsel %vm407, %v287, -inf
      %v851 = vsel %vm407, %v288, -inf
      %v852 = vmax.f32 %v850, %v851
      %v853 = vsel %vm407, %v289, -inf
      %v854 = vmax.f32 %v852, %v853
      %v855 = vsel %vm407, %v290, -inf
      %v856 = vmax.f32 %v854, %v855
      %v857 = vrot.slane %v856, 4
      %v858 = vmax.f32 %v856, %v857
      %v859 = vrot.slane %v858, 2
      %v860 = vmax.f32 %v858, %v859
      %v861 = vrot.slane %v860, 1
      %v862 = vmax.f32 %v860, %v861
      %v863 = vsel %vm407, %v291, -inf
      %v864 = vsel %vm407, %v292, -inf
      %v865 = vmax.f32 %v863, %v864
      %v866 = vsel %vm407, %v293, -inf
      %v867 = vmax.f32 %v865, %v866
      %v868 = vsel %vm407, %v294, -inf
      %v869 = vmax.f32 %v867, %v868
      %v870 = vrot.slane %v869, 4
      %v871 = vmax.f32 %v869, %v870
      %v872 = vrot.slane %v871, 2
      %v873 = vmax.f32 %v871, %v872
      %v874 = vrot.slane %v873, 1
      %v875 = vmax.f32 %v873, %v874
      %v876 = vsel %vm407, %v295, -inf
      %v877 = vsel %vm407, %v296, -inf
      %v878 = vmax.f32 %v876, %v877
      %v879 = vsel %vm407, %v297, -inf
      %v880 = vmax.f32 %v878, %v879
      %v881 = vsel %vm407, %v298, -inf
      %v882 = vmax.f32 %v880, %v881
      %v883 = vrot.slane %v882, 4
      %v884 = vmax.f32 %v882, %v883
      %v885 = vrot.slane %v884, 2
      %v886 = vmax.f32 %v884, %v885
      %v887 = vrot.slane %v886, 1
      %v888 = vmax.f32 %v886, %v887
      %v889 = vsel %vm407, %v299, -inf
      %v890 = vsel %vm407, %v300, -inf
      %v891 = vmax.f32 %v889, %v890
      %v892 = vsel %vm407, %v301, -inf
      %v893 = vmax.f32 %v891, %v892
      %v894 = vsel %vm407, %v302, -inf
      %v895 = vmax.f32 %v893, %v894
      %v896 = vrot.slane %v895, 4
      %v897 = vmax.f32 %v895, %v896
      %v898 = vrot.slane %v897, 2
      %v899 = vmax.f32 %v897, %v898
      %v900 = vrot.slane %v899, 1
      %v901 = vmax.f32 %v899, %v900
      %v902 = vsel %vm407, %v303, -inf
      %v903 = vsel %vm407, %v304, -inf
      %v904 = vmax.f32 %v902, %v903
      %v905 = vsel %vm407, %v305, -inf
      %v906 = vmax.f32 %v904, %v905
      %v907 = vsel %vm407, %v306, -inf
      %v908 = vmax.f32 %v906, %v907
      %v909 = vrot.slane %v908, 4
      %v910 = vmax.f32 %v908, %v909
      %v911 = vrot.slane %v910, 2
      %v912 = vmax.f32 %v910, %v911
      %v913 = vrot.slane %v912, 1
      %v914 = vmax.f32 %v912, %v913
      %v915 = vsel %vm407, %v307, -inf
      %v916 = vsel %vm407, %v308, -inf
      %v917 = vmax.f32 %v915, %v916
      %v918 = vsel %vm407, %v309, -inf
      %v919 = vmax.f32 %v917, %v918
      %v920 = vsel %vm407, %v310, -inf
      %v921 = vmax.f32 %v919, %v920
      %v922 = vrot.slane %v921, 4
      %v923 = vmax.f32 %v921, %v922
      %v924 = vrot.slane %v923, 2
      %v925 = vmax.f32 %v923, %v924
      %v926 = vrot.slane %v925, 1
      %v927 = vmax.f32 %v925, %v926
      %v928 = vsel %vm407, %v311, -inf
      %v929 = vsel %vm407, %v312, -inf
      %v930 = vmax.f32 %v928, %v929
      %v931 = vsel %vm407, %v313, -inf
      %v932 = vmax.f32 %v930, %v931
      %v933 = vsel %vm407, %v314, -inf
      %v934 = vmax.f32 %v932, %v933
      %v935 = vrot.slane %v934, 4
      %v936 = vmax.f32 %v934, %v935
      %v937 = vrot.slane %v936, 2
      %v938 = vmax.f32 %v936, %v937
      %v939 = vrot.slane %v938, 1
      %v940 = vmax.f32 %v938, %v939
      %v941 = vsel %vm407, %v315, -inf
      %v942 = vsel %vm407, %v316, -inf
      %v943 = vmax.f32 %v941, %v942
      %v944 = vsel %vm407, %v317, -inf
      %v945 = vmax.f32 %v943, %v944
      %v946 = vsel %vm407, %v318, -inf
      %v947 = vmax.f32 %v945, %v946
      %v948 = vrot.slane %v947, 4
      %v949 = vmax.f32 %v947, %v948
      %v950 = vrot.slane %v949, 2
      %v951 = vmax.f32 %v949, %v950
      %v952 = vrot.slane %v951, 1
      %v953 = vmax.f32 %v951, %v952
      %v954 = vsel %vm407, %v319, -inf
      %v955 = vsel %vm407, %v320, -inf
      %v956 = vmax.f32 %v954, %v955
      %v957 = vsel %vm407, %v321, -inf
      %v958 = vmax.f32 %v956, %v957
      %v959 = vsel %vm407, %v322, -inf
      %v960 = vmax.f32 %v958, %v959
      %v961 = vrot.slane %v960, 4
      %v962 = vmax.f32 %v960, %v961
      %v963 = vrot.slane %v962, 2
      %v964 = vmax.f32 %v962, %v963
      %v965 = vrot.slane %v964, 1
      %v966 = vmax.f32 %v964, %v965
      %v967 = vsel %vm407, %v323, -inf
      %v968 = vsel %vm407, %v324, -inf
      %v969 = vmax.f32 %v967, %v968
      %v970 = vsel %vm407, %v325, -inf
      %v971 = vmax.f32 %v969, %v970
      %v972 = vsel %vm407, %v326, -inf
      %v973 = vmax.f32 %v971, %v972
      %v974 = vrot.slane %v973, 4
      %v975 = vmax.f32 %v973, %v974
      %v976 = vrot.slane %v975, 2
      %v977 = vmax.f32 %v975, %v976
      %v978 = vrot.slane %v977, 1
      %v979 = vmax.f32 %v977, %v978
      %v980 = vsel %vm407, %v327, -inf
      %v981 = vsel %vm407, %v328, -inf
      %v982 = vmax.f32 %v980, %v981
      %v983 = vsel %vm407, %v329, -inf
      %v984 = vmax.f32 %v982, %v983
      %v985 = vsel %vm407, %v330, -inf
      %v986 = vmax.f32 %v984, %v985
      %v987 = vrot.slane %v986, 4
      %v988 = vmax.f32 %v986, %v987
      %v989 = vrot.slane %v988, 2
      %v990 = vmax.f32 %v988, %v989
      %v991 = vrot.slane %v990, 1
      %v992 = vmax.f32 %v990, %v991
      %v993 = vsel %vm407, %v331, -inf
      %v994 = vsel %vm407, %v332, -inf
      %v995 = vmax.f32 %v993, %v994
      %v996 = vsel %vm407, %v333, -inf
      %v997 = vmax.f32 %v995, %v996
      %v998 = vsel %vm407, %v334, -inf
      %v999 = vmax.f32 %v997, %v998
      %v1000 = vrot.slane %v999, 4
      %v1001 = vmax.f32 %v999, %v1000
      %v1002 = vrot.slane %v1001, 2
      %v1003 = vmax.f32 %v1001, %v1002
      %v1004 = vrot.slane %v1003, 1
      %v1005 = vmax.f32 %v1003, %v1004
      %v1006 = vsel %vm407, %v335, -inf
      %v1007 = vsel %vm407, %v336, -inf
      %v1008 = vmax.f32 %v1006, %v1007
      %v1009 = vsel %vm407, %v337, -inf
      %v1010 = vmax.f32 %v1008, %v1009
      %v1011 = vsel %vm407, %v338, -inf
      %v1012 = vmax.f32 %v1010, %v1011
      %v1013 = vrot.slane %v1012, 4
      %v1014 = vmax.f32 %v1012, %v1013
      %v1015 = vrot.slane %v1014, 2
      %v1016 = vmax.f32 %v1014, %v1015
      %v1017 = vrot.slane %v1016, 1
      %v1018 = vmax.f32 %v1016, %v1017
      %v1019 = vsel %vm407, %v339, -inf
      %v1020 = vsel %vm407, %v340, -inf
      %v1021 = vmax.f32 %v1019, %v1020
      %v1022 = vsel %vm407, %v341, -inf
      %v1023 = vmax.f32 %v1021, %v1022
      %v1024 = vsel %vm407, %v342, -inf
      %v1025 = vmax.f32 %v1023, %v1024
      %v1026 = vrot.slane %v1025, 4
      %v1027 = vmax.f32 %v1025, %v1026
      %v1028 = vrot.slane %v1027, 2
      %v1029 = vmax.f32 %v1027, %v1028
      %v1030 = vrot.slane %v1029, 1
      %v1031 = vmax.f32 %v1029, %v1030
      %v1032 = vsel %vm407, %v343, -inf
      %v1033 = vsel %vm407, %v344, -inf
      %v1034 = vmax.f32 %v1032, %v1033
      %v1035 = vsel %vm407, %v345, -inf
      %v1036 = vmax.f32 %v1034, %v1035
      %v1037 = vsel %vm407, %v346, -inf
      %v1038 = vmax.f32 %v1036, %v1037
      %v1039 = vrot.slane %v1038, 4
      %v1040 = vmax.f32 %v1038, %v1039
      %v1041 = vrot.slane %v1040, 2
      %v1042 = vmax.f32 %v1040, %v1041
      %v1043 = vrot.slane %v1042, 1
      %v1044 = vmax.f32 %v1042, %v1043
      %v1045 = vsel %vm407, %v347, -inf
      %v1046 = vsel %vm407, %v348, -inf
      %v1047 = vmax.f32 %v1045, %v1046
      %v1048 = vsel %vm407, %v349, -inf
      %v1049 = vmax.f32 %v1047, %v1048
      %v1050 = vsel %vm407, %v350, -inf
      %v1051 = vmax.f32 %v1049, %v1050
      %v1052 = vrot.slane %v1051, 4
      %v1053 = vmax.f32 %v1051, %v1052
      %v1054 = vrot.slane %v1053, 2
      %v1055 = vmax.f32 %v1053, %v1054
      %v1056 = vrot.slane %v1055, 1
      %v1057 = vmax.f32 %v1055, %v1056
      %v1058 = vsel %vm407, %v351, -inf
      %v1059 = vsel %vm407, %v352, -inf
      %v1060 = vmax.f32 %v1058, %v1059
      %v1061 = vsel %vm407, %v353, -inf
      %v1062 = vmax.f32 %v1060, %v1061
      %v1063 = vsel %vm407, %v354, -inf
      %v1064 = vmax.f32 %v1062, %v1063
      %v1065 = vrot.slane %v1064, 4
      %v1066 = vmax.f32 %v1064, %v1065
      %v1067 = vrot.slane %v1066, 2
      %v1068 = vmax.f32 %v1066, %v1067
      %v1069 = vrot.slane %v1068, 1
      %v1070 = vmax.f32 %v1068, %v1069
      %v1071 = vsel %vm407, %v355, -inf
      %v1072 = vsel %vm407, %v356, -inf
      %v1073 = vmax.f32 %v1071, %v1072
      %v1074 = vsel %vm407, %v357, -inf
      %v1075 = vmax.f32 %v1073, %v1074
      %v1076 = vsel %vm407, %v358, -inf
      %v1077 = vmax.f32 %v1075, %v1076
      %v1078 = vrot.slane %v1077, 4
      %v1079 = vmax.f32 %v1077, %v1078
      %v1080 = vrot.slane %v1079, 2
      %v1081 = vmax.f32 %v1079, %v1080
      %v1082 = vrot.slane %v1081, 1
      %v1083 = vmax.f32 %v1081, %v1082
      %v1084 = vsel %vm407, %v359, -inf
      %v1085 = vsel %vm407, %v360, -inf
      %v1086 = vmax.f32 %v1084, %v1085
      %v1087 = vsel %vm407, %v361, -inf
      %v1088 = vmax.f32 %v1086, %v1087
      %v1089 = vsel %vm407, %v362, -inf
      %v1090 = vmax.f32 %v1088, %v1089
      %v1091 = vrot.slane %v1090, 4
      %v1092 = vmax.f32 %v1090, %v1091
      %v1093 = vrot.slane %v1092, 2
      %v1094 = vmax.f32 %v1092, %v1093
      %v1095 = vrot.slane %v1094, 1
      %v1096 = vmax.f32 %v1094, %v1095
      %v1097 = vsel %vm407, %v363, -inf
      %v1098 = vsel %vm407, %v364, -inf
      %v1099 = vmax.f32 %v1097, %v1098
      %v1100 = vsel %vm407, %v365, -inf
      %v1101 = vmax.f32 %v1099, %v1100
      %v1102 = vsel %vm407, %v366, -inf
      %v1103 = vmax.f32 %v1101, %v1102
      %v1104 = vrot.slane %v1103, 4
      %v1105 = vmax.f32 %v1103, %v1104
      %v1106 = vrot.slane %v1105, 2
      %v1107 = vmax.f32 %v1105, %v1106
      %v1108 = vrot.slane %v1107, 1
      %v1109 = vmax.f32 %v1107, %v1108
      %v1110 = vsel %vm407, %v367, -inf
      %v1111 = vsel %vm407, %v368, -inf
      %v1112 = vmax.f32 %v1110, %v1111
      %v1113 = vsel %vm407, %v369, -inf
      %v1114 = vmax.f32 %v1112, %v1113
      %v1115 = vsel %vm407, %v370, -inf
      %v1116 = vmax.f32 %v1114, %v1115
      %v1117 = vrot.slane %v1116, 4
      %v1118 = vmax.f32 %v1116, %v1117
      %v1119 = vrot.slane %v1118, 2
      %v1120 = vmax.f32 %v1118, %v1119
      %v1121 = vrot.slane %v1120, 1
      %v1122 = vmax.f32 %v1120, %v1121
      %v1123 = vsel %vm407, %v371, -inf
      %v1124 = vsel %vm407, %v372, -inf
      %v1125 = vmax.f32 %v1123, %v1124
      %v1126 = vsel %vm407, %v373, -inf
      %v1127 = vmax.f32 %v1125, %v1126
      %v1128 = vsel %vm407, %v374, -inf
      %v1129 = vmax.f32 %v1127, %v1128
      %v1130 = vrot.slane %v1129, 4
      %v1131 = vmax.f32 %v1129, %v1130
      %v1132 = vrot.slane %v1131, 2
      %v1133 = vmax.f32 %v1131, %v1132
      %v1134 = vrot.slane %v1133, 1
      %v1135 = vmax.f32 %v1133, %v1134
      %v1136 = vsel %vm407, %v375, -inf
      %v1137 = vsel %vm407, %v376, -inf
      %v1138 = vmax.f32 %v1136, %v1137
      %v1139 = vsel %vm407, %v377, -inf
      %v1140 = vmax.f32 %v1138, %v1139
      %v1141 = vsel %vm407, %v378, -inf
      %v1142 = vmax.f32 %v1140, %v1141
      %v1143 = vrot.slane %v1142, 4
      %v1144 = vmax.f32 %v1142, %v1143
      %v1145 = vrot.slane %v1144, 2
      %v1146 = vmax.f32 %v1144, %v1145
      %v1147 = vrot.slane %v1146, 1
      %v1148 = vmax.f32 %v1146, %v1147
      %v1149 = vsel %vm407, %v379, -inf
      %v1150 = vsel %vm407, %v380, -inf
      %v1151 = vmax.f32 %v1149, %v1150
      %v1152 = vsel %vm407, %v381, -inf
      %v1153 = vmax.f32 %v1151, %v1152
      %v1154 = vsel %vm407, %v382, -inf
      %v1155 = vmax.f32 %v1153, %v1154
      %v1156 = vrot.slane %v1155, 4
      %v1157 = vmax.f32 %v1155, %v1156
      %v1158 = vrot.slane %v1157, 2
      %v1159 = vmax.f32 %v1157, %v1158
      %v1160 = vrot.slane %v1159, 1
      %v1161 = vmax.f32 %v1159, %v1160
      %v1162 = vsel %vm407, %v383, -inf
      %v1163 = vsel %vm407, %v384, -inf
      %v1164 = vmax.f32 %v1162, %v1163
      %v1165 = vsel %vm407, %v385, -inf
      %v1166 = vmax.f32 %v1164, %v1165
      %v1167 = vsel %vm407, %v386, -inf
      %v1168 = vmax.f32 %v1166, %v1167
      %v1169 = vrot.slane %v1168, 4
      %v1170 = vmax.f32 %v1168, %v1169
      %v1171 = vrot.slane %v1170, 2
      %v1172 = vmax.f32 %v1170, %v1171
      %v1173 = vrot.slane %v1172, 1
      %v1174 = vmax.f32 %v1172, %v1173
      %v1175 = vsel %vm407, %v387, -inf
      %v1176 = vsel %vm407, %v388, -inf
      %v1177 = vmax.f32 %v1175, %v1176
      %v1178 = vsel %vm407, %v389, -inf
      %v1179 = vmax.f32 %v1177, %v1178
      %v1180 = vsel %vm407, %v390, -inf
      %v1181 = vmax.f32 %v1179, %v1180
      %v1182 = vrot.slane %v1181, 4
      %v1183 = vmax.f32 %v1181, %v1182
      %v1184 = vrot.slane %v1183, 2
      %v1185 = vmax.f32 %v1183, %v1184
      %v1186 = vrot.slane %v1185, 1
      %v1187 = vmax.f32 %v1185, %v1186
      %v1188 = vsel %vm407, %v391, -inf
      %v1189 = vsel %vm407, %v392, -inf
      %v1190 = vmax.f32 %v1188, %v1189
      %v1191 = vsel %vm407, %v393, -inf
      %v1192 = vmax.f32 %v1190, %v1191
      %v1193 = vsel %vm407, %v394, -inf
      %v1194 = vmax.f32 %v1192, %v1193
      %v1195 = vrot.slane %v1194, 4
      %v1196 = vmax.f32 %v1194, %v1195
      %v1197 = vrot.slane %v1196, 2
      %v1198 = vmax.f32 %v1196, %v1197
      %v1199 = vrot.slane %v1198, 1
      %v1200 = vmax.f32 %v1198, %v1199
      %v1201 = vsel %vm407, %v395, -inf
      %v1202 = vsel %vm407, %v396, -inf
      %v1203 = vmax.f32 %v1201, %v1202
      %v1204 = vsel %vm407, %v397, -inf
      %v1205 = vmax.f32 %v1203, %v1204
      %v1206 = vsel %vm407, %v398, -inf
      %v1207 = vmax.f32 %v1205, %v1206
      %v1208 = vrot.slane %v1207, 4
      %v1209 = vmax.f32 %v1207, %v1208
      %v1210 = vrot.slane %v1209, 2
      %v1211 = vmax.f32 %v1209, %v1210
      %v1212 = vrot.slane %v1211, 1
      %v1213 = vmax.f32 %v1211, %v1212
      %v1214 = vsel %vm407, %v399, -inf
      %v1215 = vsel %vm407, %v400, -inf
      %v1216 = vmax.f32 %v1214, %v1215
      %v1217 = vsel %vm407, %v401, -inf
      %v1218 = vmax.f32 %v1216, %v1217
      %v1219 = vsel %vm407, %v402, -inf
      %v1220 = vmax.f32 %v1218, %v1219
      %v1221 = vrot.slane %v1220, 4
      %v1222 = vmax.f32 %v1220, %v1221
      %v1223 = vrot.slane %v1222, 2
      %v1224 = vmax.f32 %v1222, %v1223
      %v1225 = vrot.slane %v1224, 1
      %v1226 = vmax.f32 %v1224, %v1225
      %v1227 = vsel %vm407, %v403, -inf
      %v1228 = vsel %vm407, %v404, -inf
      %v1229 = vmax.f32 %v1227, %v1228
      %v1230 = vsel %vm407, %v405, -inf
      %v1231 = vmax.f32 %v1229, %v1230
      %v1232 = vsel %vm407, %v406, -inf
      %v1233 = vmax.f32 %v1231, %v1232
      %v1234 = vrot.slane %v1233, 4
      %v1235 = vmax.f32 %v1233, %v1234
      %v1236 = vrot.slane %v1235, 2
      %v1237 = vmax.f32 %v1235, %v1236
      %v1238 = vrot.slane %v1237, 1
      %v1239 = vmax.f32 %v1237, %v1238
      %v1240 = vsel %vm407, %v420, -inf
      %v1241 = vsel %vm407, %v446, -inf
      %v1242 = vsel %vm407, %v472, -inf
      %v1243 = vmax.f32 %v1240, %v1242
      %v1244 = vsel %vm407, %v498, -inf
      %v1245 = vmax.f32 %v1241, %v1244
      %v1246 = vsel %vm407, %v524, -inf
      %v1247 = vmax.f32 %v1243, %v1246
      %v1248 = vsel %vm407, %v550, -inf
      %v1249 = vmax.f32 %v1245, %v1248
      %v1250 = vsel %vm407, %v576, -inf
      %v1251 = vmax.f32 %v1247, %v1250
      %v1252 = vsel %vm407, %v602, -inf
      %v1253 = vmax.f32 %v1249, %v1252
      %v1254 = vsel %vm407, %v628, -inf
      %v1255 = vmax.f32 %v1251, %v1254
      %v1256 = vsel %vm407, %v654, -inf
      %v1257 = vmax.f32 %v1253, %v1256
      %v1258 = vsel %vm407, %v680, -inf
      %v1259 = vmax.f32 %v1255, %v1258
      %v1260 = vsel %vm407, %v706, -inf
      %v1261 = vmax.f32 %v1257, %v1260
      %v1262 = vsel %vm407, %v732, -inf
      %v1263 = vmax.f32 %v1259, %v1262
      %v1264 = vsel %vm407, %v758, -inf
      %v1265 = vmax.f32 %v1261, %v1264
      %v1266 = vsel %vm407, %v784, -inf
      %v1267 = vmax.f32 %v1263, %v1266
      %v1268 = vsel %vm407, %v810, -inf
      %v1269 = vmax.f32 %v1265, %v1268
      %v1270 = vsel %vm407, %v836, -inf
      %v1271 = vmax.f32 %v1267, %v1270
      %v1272 = vsel %vm407, %v862, -inf
      %v1273 = vmax.f32 %v1269, %v1272
      %v1274 = vsel %vm407, %v888, -inf
      %v1275 = vmax.f32 %v1271, %v1274
      %v1276 = vsel %vm407, %v914, -inf
      %v1277 = vmax.f32 %v1273, %v1276
      %v1278 = vsel %vm407, %v940, -inf
      %v1279 = vmax.f32 %v1275, %v1278
      %v1280 = vsel %vm407, %v966, -inf
      %v1281 = vmax.f32 %v1277, %v1280
      %v1282 = vsel %vm407, %v992, -inf
      %v1283 = vmax.f32 %v1279, %v1282
      %v1284 = vsel %vm407, %v1018, -inf
      %v1285 = vmax.f32 %v1281, %v1284
      %v1286 = vsel %vm407, %v1044, -inf
      %v1287 = vmax.f32 %v1283, %v1286
      %v1288 = vsel %vm407, %v1070, -inf
      %v1289 = vmax.f32 %v1285, %v1288
      %v1290 = vsel %vm407, %v1096, -inf
      %v1291 = vmax.f32 %v1287, %v1290
      %v1292 = vsel %vm407, %v1122, -inf
      %v1293 = vmax.f32 %v1289, %v1292
      %v1294 = vsel %vm407, %v1148, -inf
      %v1295 = vmax.f32 %v1291, %v1294
      %v1296 = vsel %vm407, %v1174, -inf
      %v1297 = vmax.f32 %v1293, %v1296
      %v1298 = vsel %vm407, %v1200, -inf
      %v1299 = vmax.f32 %v1295, %v1298
      %v1300 = vsel %vm407, %v1226, -inf
      %v1301 = vmax.f32 %v1297, %v1300
      %v1302 = vmax.f32 %v1299, %v1301
      %v1303 = vsel %vm407, %v433, -inf
      %v1304 = vsel %vm407, %v459, -inf
      %v1305 = vsel %vm407, %v485, -inf
      %v1306 = vmax.f32 %v1303, %v1305
      %v1307 = vsel %vm407, %v511, -inf
      %v1308 = vmax.f32 %v1304, %v1307
      %v1309 = vsel %vm407, %v537, -inf
      %v1310 = vmax.f32 %v1306, %v1309
      %v1311 = vsel %vm407, %v563, -inf
      %v1312 = vmax.f32 %v1308, %v1311
      %v1313 = vsel %vm407, %v589, -inf
      %v1314 = vmax.f32 %v1310, %v1313
      %v1315 = vsel %vm407, %v615, -inf
      %v1316 = vmax.f32 %v1312, %v1315
      %v1317 = vsel %vm407, %v641, -inf
      %v1318 = vmax.f32 %v1314, %v1317
      %v1319 = vsel %vm407, %v667, -inf
      %v1320 = vmax.f32 %v1316, %v1319
      %v1321 = vsel %vm407, %v693, -inf
      %v1322 = vmax.f32 %v1318, %v1321
      %v1323 = vsel %vm407, %v719, -inf
      %v1324 = vmax.f32 %v1320, %v1323
      %v1325 = vsel %vm407, %v745, -inf
      %v1326 = vmax.f32 %v1322, %v1325
      %v1327 = vsel %vm407, %v771, -inf
      %v1328 = vmax.f32 %v1324, %v1327
      %v1329 = vsel %vm407, %v797, -inf
      %v1330 = vmax.f32 %v1326, %v1329
      %v1331 = vsel %vm407, %v823, -inf
      %v1332 = vmax.f32 %v1328, %v1331
      %v1333 = vsel %vm407, %v849, -inf
      %v1334 = vmax.f32 %v1330, %v1333
      %v1335 = vsel %vm407, %v875, -inf
      %v1336 = vmax.f32 %v1332, %v1335
      %v1337 = vsel %vm407, %v901, -inf
      %v1338 = vmax.f32 %v1334, %v1337
      %v1339 = vsel %vm407, %v927, -inf
      %v1340 = vmax.f32 %v1336, %v1339
      %v1341 = vsel %vm407, %v953, -inf
      %v1342 = vmax.f32 %v1338, %v1341
      %v1343 = vsel %vm407, %v979, -inf
      %v1344 = vmax.f32 %v1340, %v1343
      %v1345 = vsel %vm407, %v1005, -inf
      %v1346 = vmax.f32 %v1342, %v1345
      %v1347 = vsel %vm407, %v1031, -inf
      %v1348 = vmax.f32 %v1344, %v1347
      %v1349 = vsel %vm407, %v1057, -inf
      %v1350 = vmax.f32 %v1346, %v1349
      %v1351 = vsel %vm407, %v1083, -inf
      %v1352 = vmax.f32 %v1348, %v1351
      %v1353 = vsel %vm407, %v1109, -inf
      %v1354 = vmax.f32 %v1350, %v1353
      %v1355 = vsel %vm407, %v1135, -inf
      %v1356 = vmax.f32 %v1352, %v1355
      %v1357 = vsel %vm407, %v1161, -inf
      %v1358 = vmax.f32 %v1354, %v1357
      %v1359 = vsel %vm407, %v1187, -inf
      %v1360 = vmax.f32 %v1356, %v1359
      %v1361 = vsel %vm407, %v1213, -inf
      %v1362 = vmax.f32 %v1358, %v1361
      %v1363 = vsel %vm407, %v1239, -inf
      %v1364 = vmax.f32 %v1360, %v1363
      %v1365 = vmax.f32 %v1362, %v1364
      %vm1368 = vcmask 1041409
      %v1369 = vsel %vm1368, %v1365, %v1302
      %vm1371 = vcmask 517120
      %1372 = vst.msk [vmem:[%s150] sm:$0x3] %vm1371, %v1369
      %p1373 = scmp.lt.s32.totalorder %s16, 1
      %s1374 = scalar_select %p1373, %s16, 1
      %p1375 = scmp.lt.s32.totalorder %s17, 1
      %s1376 = scalar_select %p1375, %s17, 1
      %s1377 = smul.addr %s1374, 2
      %s1378 = sadd.s32 %s1376, %s1377
      %s1379 = smul.addr %s1378, 2
      %s1380 = scalar_lea.vmem %s1, %s1379
      // Predicated region
      $region25: #{yolov5_with_cmaff_forward.12} parent=23 // pred_check
        %p1381 = pneg %p72
      $region26: #{yolov5_with_cmaff_forward.12} parent=23 // pred_check_branch
        %1383 = sbr.rel (%p1381) target = $region28
      $region27: #{yolov5_with_cmaff_forward.12} parent=23 // pred_region
        _
      $region28: #{yolov5_with_cmaff_forward.12} parent=23 // pred_fallthru
        _
    $region24: #{yolov5_with_cmaff_forward.12} parent=5 // pred_fallthru
      _
    %p1384 = scmp.le.s32.totalorder 2, %s7
    // Predicated region
    $region29: #{yolov5_with_cmaff_forward.12} parent=5 // pred_check
      %p1385 = pneg %p1384
    $region30: #{yolov5_with_cmaff_forward.12} parent=5 // pred_check_branch
      %1387 = sbr.rel (%p1385) target = $region32
    $region31: #{yolov5_with_cmaff_forward.12} parent=5 // pred_region
      %s1388 = ssub.s32 %s7, 2
      // Predicated region
      $region33: #{yolov5_with_cmaff_forward.12} parent=31 // pred_check
        %p1389 = pneg %p78
      $region34: #{yolov5_with_cmaff_forward.12} parent=31 // pred_check_branch
        %1391 = sbr.rel (%p1389) target = $region36
      $region35: #{yolov5_with_cmaff_forward.12} parent=31 // pred_region
        %p1392 = scmp.lt.s32.totalorder %s18, 1
        %s1393 = scalar_select %p1392, %s18, 1
        %p1394 = scmp.lt.s32.totalorder %s19, 1
        %s1395 = scalar_select %p1394, %s19, 1
        %s1396 = smul.addr %s1393, 2
        %s1397 = sadd.s32 %s1395, %s1396
        %s1398 = smul.addr %s1397, 2
        %s1399 = scalar_lea.vmem %s1, %s1398
      $region36: #{yolov5_with_cmaff_forward.12} parent=31 // pred_fallthru
        _
    $region32: #{yolov5_with_cmaff_forward.12} parent=5 // pred_fallthru
      _
  $region6: #{yolov5_with_cmaff_forward.12} parent=0 // loop_footer
    %s11 = sadd.s32 1, %s7
  $region7: #{yolov5_with_cmaff_forward.12} parent=0 // loop_footer_branch
    %6 = sbr.rel target = $region3
  $region8: #{yolov5_with_cmaff_forward.12} parent=0 // loop_exit
    _

// kernel: yolov5_with_cmaff_forward.16
$region0: #{yolov5_with_cmaff_forward.16}
  #allocation0 [shape = 'u32[]', space=smem, size = 0x4, offset = 0x4, fixed_abs, tag = 'smem constant byte address 0x4 - core index']
  #allocation1 [shape = 'u32[144,128]{1,0:T(1,128)}', space=vmem, size = 0x12000, scoped, tag = 'internal scratch']
  #allocation2 [shape = 'f32[8,128]{1,0:T(8,128)}', space=vmem, size = 0x1000, scoped, tag = 'scratch operand']
  %s0 = inlined_call_operand.vmem [shape: bf16[8,64], index: 0, kind: input, shape index: {}]
  %s1 = inlined_call_operand.vmem [shape: bf16[64,128], index: 1, kind: input, shape index: {}]
  %s2 = inlined_call_operand.vmem [shape: f32[1,128], index: 2, kind: input, shape index: {}]
  %s3 = inlined_call_operand.vmem [shape: f32[8,128], index: 3, kind: output, shape index: {}]
  %s4 = sld [smem:[#allocation0]]
  $region30: #{yolov5_with_cmaff_forward.16} parent=0
    _
  %s6 = ssub.s32 1, %s4
  %s7 = scalar_select 0, %s6, %s4
  // Predicated region
  $region2: #{yolov5_with_cmaff_forward.16} parent=0 // pred_check
    _
  $region3: #{yolov5_with_cmaff_forward.16} parent=0 // pred_check_branch
    %9 = sbr.rel (0) target = $region5
  $region4: #{yolov5_with_cmaff_forward.16} parent=0 // pred_region
    _
  $region5: #{yolov5_with_cmaff_forward.16} parent=0 // pred_fallthru
    _
  // Predicated region
  $region6: #{yolov5_with_cmaff_forward.16} parent=0 // pred_check
    _
  $region7: #{yolov5_with_cmaff_forward.16} parent=0 // pred_check_branch
    %11 = sbr.rel (0) target = $region9
  $region8: #{yolov5_with_cmaff_forward.16} parent=0 // pred_region
    _
  $region9: #{yolov5_with_cmaff_forward.16} parent=0 // pred_fallthru
    _
  // Predicated region
  $region10: #{yolov5_with_cmaff_forward.16} parent=0 // pred_check
    _
  $region11: #{yolov5_with_cmaff_forward.16} parent=0 // pred_check_branch
    %13 = sbr.rel (0) target = $region13
  $region12: #{yolov5_with_cmaff_forward.16} parent=0 // pred_region
    _
  $region13: #{yolov5_with_cmaff_forward.16} parent=0 // pred_fallthru
    _
  %p15 = scmp.eq.s32.totalorder 0, 0
  // Predicated region
  $region14: #{yolov5_with_cmaff_forward.16} parent=0 // pred_check
    %p16 = pneg %p15
  $region15: #{yolov5_with_cmaff_forward.16} parent=0 // pred_check_branch
    %18 = sbr.rel (%p16) target = $region17
  $region16: #{yolov5_with_cmaff_forward.16} parent=0 // pred_region
    %19 = vst [vmem:[#allocation2] sm:$0xff] 0.0
  $region17: #{yolov5_with_cmaff_forward.16} parent=0 // pred_fallthru
    _
  %v20 = vld [vmem:[#allocation2] sm:$0xff]
  %v21 = vld [vmem:[%s0] sm:$0xf]
  %v22 = vld [vmem:[%s1] sm:$0xf]
  %v23 = vld [vmem:[%s1 + $0x4] sm:$0xf]
  %v24 = vld [vmem:[%s1 + $0x8] sm:$0xf]
  %v25 = vld [vmem:[%s1 + $0xc] sm:$0xf]
  %v26 = vld [vmem:[%s1 + $0x10] sm:$0xf]
  %v27 = vld [vmem:[%s1 + $0x14] sm:$0xf]
  %v28 = vld [vmem:[%s1 + $0x18] sm:$0xf]
  %v29 = vld [vmem:[%s1 + $0x1c] sm:$0xf]
  %v38 = vunpack.c.l.b16 %v22
  %v39 = vunpack.c.l.b16 %v23
  %v40 = vunpack.c.l.b16 %v24
  %v41 = vunpack.c.l.b16 %v25
  %v42 = vunpack.c.l.b16 %v26
  %v43 = vunpack.c.l.b16 %v27
  %v44 = vunpack.c.l.b16 %v28
  %v45 = vunpack.c.l.b16 %v29
  %v46 = vpack.c.b16 %v39, %v38
  %v47 = vpack.c.b16 %v41, %v40
  %v48 = vpack.c.b16 %v43, %v42
  %v49 = vpack.c.b16 %v45, %v44
  %vm54 = vcmask 523264
  %v56 = vsel %vm54, %v21, 0
  %58 = vmatprep.subr.bf16.mxu0 0
  %59 = vmatpush1.bf16.msra.mxu0 %v46
  %60 = vmatprep.subr.bf16.mxu0 0
  %61 = vmatpush1.bf16.msra.mxu0 %v47
  %62 = vmatprep.subr.bf16.mxu0 0
  %63 = vmatpush1.bf16.msra.mxu0 %v48
  %64 = vmatprep.subr.bf16.mxu0 0
  %65 = vmatpush1.bf16.msra.mxu0 %v49
  %66 = vmatprep.subr.bf16.mxu0 0
  %67 = vmatpush1.bf16.msra.mxu0 0
  %68 = vmatprep.subr.bf16.mxu0 0
  %69 = vmatpush1.bf16.msra.mxu0 0
  %70 = vmatprep.subr.bf16.mxu0 0
  %71 = vmatpush1.bf16.msra.mxu0 0
  %72 = vmatprep.subr.bf16.mxu0 0
  %73 = vmatpush1.bf16.msra.mxu0 0
  %74 = vmatprep.subr.bf16.mxu0 0
  %75 = vmatpush1.bf16.msra.mxu0 0
  %76 = vmatprep.subr.bf16.mxu0 0
  %77 = vmatpush1.bf16.msra.mxu0 0
  %78 = vmatprep.subr.bf16.mxu0 0
  %79 = vmatpush1.bf16.msra.mxu0 0
  %80 = vmatprep.subr.bf16.mxu0 0
  %81 = vmatpush1.bf16.msra.mxu0 0
  %82 = vmatprep.subr.bf16.mxu0 0
  %83 = vmatpush1.bf16.msra.mxu0 0
  %84 = vmatprep.subr.bf16.mxu0 0
  %85 = vmatpush1.bf16.msra.mxu0 0
  %86 = vmatprep.subr.bf16.mxu0 0
  %87 = vmatpush1.bf16.msra.mxu0 0
  %88 = vmatprep.subr.bf16.mxu0 0
  %89 = vmatpush1.bf16.msra.mxu0 0
  %90 = vmatprep.mubr.bf16.mxu0 0
  %91 = vmatmul.mubr.bf16.gmra.mrb[0].mxu0 %v56
  %v92 = vpop.f32.mrb[0].mxu0
  %v93 = vadd.f32 0.0, %v92
  %v94 = vpop.f32.mrb[0].mxu0
  %v95 = vpop.f32.mrb[0].mxu0
  %v96 = vpop.f32.mrb[0].mxu0
  %97 = vdwg.mxu0
  %v98 = vadd.f32 %v20, %v93
  %99 = vst [vmem:[#allocation2] sm:$0xff] %v98
  // Predicated region
  $region18: #{yolov5_with_cmaff_forward.16} parent=0 // pred_check
    %p100 = pneg %p15
  $region19: #{yolov5_with_cmaff_forward.16} parent=0 // pred_check_branch
    %102 = sbr.rel (%p100) target = $region21
  $region20: #{yolov5_with_cmaff_forward.16} parent=0 // pred_region
    %v103 = vld [vmem:[#allocation2] sm:$0xff]
    %v104 = vld [vmem:[%s2] sm:$0x1]
    %v106 = vlaneseq
    %v107 = vshrl.u32 %v106, 7
    %v108 = vsub.s32 0, %v107
    %v109 = vrot.slane %v104, %v108
    %v111 = vadd.f32 %v103, %v109
    %112 = vst [vmem:[%s3] sm:$0xff] %v111
  $region21: #{yolov5_with_cmaff_forward.16} parent=0 // pred_fallthru
    _
  // Predicated region
  $region22: #{yolov5_with_cmaff_forward.16} parent=0 // pred_check
    _
  $region23: #{yolov5_with_cmaff_forward.16} parent=0 // pred_check_branch
    %114 = sbr.rel (0) target = $region25
  $region24: #{yolov5_with_cmaff_forward.16} parent=0 // pred_region
    _
  $region25: #{yolov5_with_cmaff_forward.16} parent=0 // pred_fallthru
    _
  // Predicated region
  $region26: #{yolov5_with_cmaff_forward.16} parent=0 // pred_check
    _
  $region27: #{yolov5_with_cmaff_forward.16} parent=0 // pred_check_branch
    %116 = sbr.rel (0) target = $region29
  $region28: #{yolov5_with_cmaff_forward.16} parent=0 // pred_region
    _
  $region29: #{yolov5_with_cmaff_forward.16} parent=0 // pred_fallthru
    _

// kernel: yolov5_with_cmaff_forward.15
$region0: #{yolov5_with_cmaff_forward.15}
  #allocation0 [shape = 'u32[]', space=smem, size = 0x4, offset = 0x4, fixed_abs, tag = 'smem constant byte address 0x4 - core index']
  #allocation1 [shape = 'u32[144,128]{1,0:T(1,128)}', space=vmem, size = 0x12000, scoped, tag = 'internal scratch']
  %s0 = inlined_call_operand.vmem [shape: f32[2,4,64], index: 0, kind: input, shape index: {}]
  %s1 = inlined_call_operand.vmem [shape: f32[2,4,64], index: 1, kind: input, shape index: {}]
  %s2 = inlined_call_operand.vmem [shape: f32[64,4], index: 2, kind: input, shape index: {}]
  %s3 = inlined_call_operand.vmem [shape: f32[1,4], index: 3, kind: input, shape index: {}]
  %s4 = inlined_call_operand.vmem [shape: f32[4,64], index: 4, kind: input, shape index: {}]
  %s5 = inlined_call_operand.vmem [shape: f32[1,64], index: 5, kind: input, shape index: {}]
  %s6 = inlined_call_operand.vmem [shape: f32[64,4], index: 6, kind: input, shape index: {}]
  %s7 = inlined_call_operand.vmem [shape: f32[1,4], index: 7, kind: input, shape index: {}]
  %s8 = inlined_call_operand.vmem [shape: f32[4,64], index: 8, kind: input, shape index: {}]
  %s9 = inlined_call_operand.vmem [shape: f32[1,64], index: 9, kind: input, shape index: {}]
  %s10 = inlined_call_operand.vmem [shape: f32[64,64], index: 10, kind: input, shape index: {}]
  %s11 = inlined_call_operand.vmem [shape: f32[64,64], index: 11, kind: input, shape index: {}]
  %s12 = inlined_call_operand.vmem [shape: f32[1,64], index: 12, kind: input, shape index: {}]
  %s13 = inlined_call_operand.vmem [shape: f32[2,4,64], index: 13, kind: output, shape index: {}]
  %s14 = sld [smem:[#allocation0]]
  $region85: #{yolov5_with_cmaff_forward.15} parent=0
    _
  %s16 = ssub.s32 1, %s14
  %s17 = scalar_select 0, %s16, %s14
  loop: start=0, step=1, limit=4
  $region2: #{yolov5_with_cmaff_forward.15} parent=0 // loop_pre_header
    _
  $region3: #{yolov5_with_cmaff_forward.15} parent=0 // loop_header
    %s19 = sphi 0, %s23
    %p20 = scmp.ge.s32.totalorder %s19, 4
    %s29 = sphi 0, %s31
    %s32 = sphi 0, %s29
    %s33 = sphi 0, %s32
    %s49 = sphi 0, %s33
    %s55 = sphi 0, %s57
    %s58 = sphi 0, %s55
    %s59 = sphi 0, %s58
    %s75 = sphi 0, %s59
    %s79 = sphi 0, %s79
    %s81 = sphi 0, %s79
    %s82 = sphi 0, %s81
    %s96 = sphi 0, %s82
    %s100 = sphi 0, %s100
    %s102 = sphi 0, %s100
    %s103 = sphi 0, %s102
    %s117 = sphi 0, %s103
    %s121 = sphi 0, %s121
    %s123 = sphi 0, %s121
    %s124 = sphi 0, %s123
    %s138 = sphi 0, %s124
    %s142 = sphi 0, %s142
    %s144 = sphi 0, %s142
    %s145 = sphi 0, %s144
    %s159 = sphi 0, %s145
    %s163 = sphi 0, %s163
    %s165 = sphi 0, %s163
    %s166 = sphi 0, %s165
    %s180 = sphi 0, %s166
    %s184 = sphi 0, %s184
    %s186 = sphi 0, %s184
    %s187 = sphi 0, %s186
    %s201 = sphi 0, %s187
    %s205 = sphi 0, %s205
    %s207 = sphi 0, %s205
    %s208 = sphi 0, %s207
    %s222 = sphi 0, %s208
    %s226 = sphi 0, %s226
    %s228 = sphi 0, %s226
    %s229 = sphi 0, %s228
    %s243 = sphi 0, %s229
    %s247 = sphi 0, %s247
    %s249 = sphi 0, %s247
    %s250 = sphi 0, %s249
    %s264 = sphi 0, %s250
    %s268 = sphi 0, %s268
    %s270 = sphi 0, %s268
    %s271 = sphi 0, %s270
    %s285 = sphi 0, %s271
    %s289 = sphi 0, %s289
    %s291 = sphi 0, %s289
    %s292 = sphi 0, %s291
    %s306 = sphi 0, %s292
    %s312 = sphi 0, %s314
    %s315 = sphi 0, %s312
    %s316 = sphi 0, %s315
    %s332 = sphi 0, %s316
  $region4: #{yolov5_with_cmaff_forward.15} parent=0 // loop_header_branch
    %22 = sbr.rel (%p20) target = $region8
  $region5: #{yolov5_with_cmaff_forward.15} parent=0 // loop_body
    %s24 = ssub.s32 %s19, 1
    %s25 = ssub.s32 %s19, 2
    %s26 = sadd.s32 %s19, 1
    %s27 = ssub.s32 %s19, %s26
    %p28 = scmp.eq.s32.totalorder %s27, 0
    %s30 = sadd.s32 %s29, 1
    %s31 = scalar_select %p28, %s29, %s30
    %p34 = pneg %p28
    %p35 = scmp.eq.s32.totalorder %s19, 1
    %p36 = por %p34, %p35
    %p37 = scmp.ne.s32.totalorder %s29, %s32
    %p38 = scmp.eq.s32.totalorder %s19, 0
    %p39 = por %p37, %p38
    %p40 = scmp.ne.s32.totalorder %s29, %s32
    %p41 = scmp.eq.s32.totalorder %s24, 1
    %p42 = por %p40, %p41
    %p43 = scmp.ne.s32.totalorder %s32, %s33
    %p44 = scmp.eq.s32.totalorder %s24, 0
    %p45 = por %p43, %p44
    %p46 = scmp.ne.s32.totalorder %s32, %s33
    %p47 = scmp.eq.s32.totalorder %s25, 1
    %p48 = por %p46, %p47
    %p50 = scmp.ne.s32.totalorder %s33, %s49
    %p51 = scmp.eq.s32.totalorder %s25, 0
    %p52 = por %p50, %p51
    %s53 = ssub.s32 %s19, %s26
    %p54 = scmp.eq.s32.totalorder %s53, 0
    %s56 = sadd.s32 %s55, 1
    %s57 = scalar_select %p54, %s55, %s56
    %p60 = pneg %p54
    %p61 = scmp.eq.s32.totalorder %s19, 1
    %p62 = por %p60, %p61
    %p63 = scmp.ne.s32.totalorder %s55, %s58
    %p64 = scmp.eq.s32.totalorder %s19, 0
    %p65 = por %p63, %p64
    %p66 = scmp.ne.s32.totalorder %s55, %s58
    %p67 = scmp.eq.s32.totalorder %s24, 1
    %p68 = por %p66, %p67
    %p69 = scmp.ne.s32.totalorder %s58, %s59
    %p70 = scmp.eq.s32.totalorder %s24, 0
    %p71 = por %p69, %p70
    %p72 = scmp.ne.s32.totalorder %s58, %s59
    %p73 = scmp.eq.s32.totalorder %s25, 1
    %p74 = por %p72, %p73
    %p76 = scmp.ne.s32.totalorder %s59, %s75
    %p77 = scmp.eq.s32.totalorder %s25, 0
    %p78 = por %p76, %p77
    %s80 = sadd.s32 %s79, 1
    %p83 = scmp.eq.s32.totalorder %s19, 1
    %p84 = scmp.ne.s32.totalorder %s79, %s81
    %p85 = scmp.eq.s32.totalorder %s19, 0
    %p86 = por %p84, %p85
    %p87 = scmp.ne.s32.totalorder %s79, %s81
    %p88 = scmp.eq.s32.totalorder %s24, 1
    %p89 = por %p87, %p88
    %p90 = scmp.ne.s32.totalorder %s81, %s82
    %p91 = scmp.eq.s32.totalorder %s24, 0
    %p92 = por %p90, %p91
    %p93 = scmp.ne.s32.totalorder %s81, %s82
    %p94 = scmp.eq.s32.totalorder %s25, 1
    %p95 = por %p93, %p94
    %p97 = scmp.ne.s32.totalorder %s82, %s96
    %p98 = scmp.eq.s32.totalorder %s25, 0
    %p99 = por %p97, %p98
    %s101 = sadd.s32 %s100, 1
    %p104 = scmp.eq.s32.totalorder %s19, 1
    %p105 = scmp.ne.s32.totalorder %s100, %s102
    %p106 = scmp.eq.s32.totalorder %s19, 0
    %p107 = por %p105, %p106
    %p108 = scmp.ne.s32.totalorder %s100, %s102
    %p109 = scmp.eq.s32.totalorder %s24, 1
    %p110 = por %p108, %p109
    %p111 = scmp.ne.s32.totalorder %s102, %s103
    %p112 = scmp.eq.s32.totalorder %s24, 0
    %p113 = por %p111, %p112
    %p114 = scmp.ne.s32.totalorder %s102, %s103
    %p115 = scmp.eq.s32.totalorder %s25, 1
    %p116 = por %p114, %p115
    %p118 = scmp.ne.s32.totalorder %s103, %s117
    %p119 = scmp.eq.s32.totalorder %s25, 0
    %p120 = por %p118, %p119
    %s122 = sadd.s32 %s121, 1
    %p125 = scmp.eq.s32.totalorder %s19, 1
    %p126 = scmp.ne.s32.totalorder %s121, %s123
    %p127 = scmp.eq.s32.totalorder %s19, 0
    %p128 = por %p126, %p127
    %p129 = scmp.ne.s32.totalorder %s121, %s123
    %p130 = scmp.eq.s32.totalorder %s24, 1
    %p131 = por %p129, %p130
    %p132 = scmp.ne.s32.totalorder %s123, %s124
    %p133 = scmp.eq.s32.totalorder %s24, 0
    %p134 = por %p132, %p133
    %p135 = scmp.ne.s32.totalorder %s123, %s124
    %p136 = scmp.eq.s32.totalorder %s25, 1
    %p137 = por %p135, %p136
    %p139 = scmp.ne.s32.totalorder %s124, %s138
    %p140 = scmp.eq.s32.totalorder %s25, 0
    %p141 = por %p139, %p140
    %s143 = sadd.s32 %s142, 1
    %p146 = scmp.eq.s32.totalorder %s19, 1
    %p147 = scmp.ne.s32.totalorder %s142, %s144
    %p148 = scmp.eq.s32.totalorder %s19, 0
    %p149 = por %p147, %p148
    %p150 = scmp.ne.s32.totalorder %s142, %s144
    %p151 = scmp.eq.s32.totalorder %s24, 1
    %p152 = por %p150, %p151
    %p153 = scmp.ne.s32.totalorder %s144, %s145
    %p154 = scmp.eq.s32.totalorder %s24, 0
    %p155 = por %p153, %p154
    %p156 = scmp.ne.s32.totalorder %s144, %s145
    %p157 = scmp.eq.s32.totalorder %s25, 1
    %p158 = por %p156, %p157
    %p160 = scmp.ne.s32.totalorder %s145, %s159
    %p161 = scmp.eq.s32.totalorder %s25, 0
    %p162 = por %p160, %p161
    %s164 = sadd.s32 %s163, 1
    %p167 = scmp.eq.s32.totalorder %s19, 1
    %p168 = scmp.ne.s32.totalorder %s163, %s165
    %p169 = scmp.eq.s32.totalorder %s19, 0
    %p170 = por %p168, %p169
    %p171 = scmp.ne.s32.totalorder %s163, %s165
    %p172 = scmp.eq.s32.totalorder %s24, 1
    %p173 = por %p171, %p172
    %p174 = scmp.ne.s32.totalorder %s165, %s166
    %p175 = scmp.eq.s32.totalorder %s24, 0
    %p176 = por %p174, %p175
    %p177 = scmp.ne.s32.totalorder %s165, %s166
    %p178 = scmp.eq.s32.totalorder %s25, 1
    %p179 = por %p177, %p178
    %p181 = scmp.ne.s32.totalorder %s166, %s180
    %p182 = scmp.eq.s32.totalorder %s25, 0
    %p183 = por %p181, %p182
    %s185 = sadd.s32 %s184, 1
    %p188 = scmp.eq.s32.totalorder %s19, 1
    %p189 = scmp.ne.s32.totalorder %s184, %s186
    %p190 = scmp.eq.s32.totalorder %s19, 0
    %p191 = por %p189, %p190
    %p192 = scmp.ne.s32.totalorder %s184, %s186
    %p193 = scmp.eq.s32.totalorder %s24, 1
    %p194 = por %p192, %p193
    %p195 = scmp.ne.s32.totalorder %s186, %s187
    %p196 = scmp.eq.s32.totalorder %s24, 0
    %p197 = por %p195, %p196
    %p198 = scmp.ne.s32.totalorder %s186, %s187
    %p199 = scmp.eq.s32.totalorder %s25, 1
    %p200 = por %p198, %p199
    %p202 = scmp.ne.s32.totalorder %s187, %s201
    %p203 = scmp.eq.s32.totalorder %s25, 0
    %p204 = por %p202, %p203
    %s206 = sadd.s32 %s205, 1
    %p209 = scmp.eq.s32.totalorder %s19, 1
    %p210 = scmp.ne.s32.totalorder %s205, %s207
    %p211 = scmp.eq.s32.totalorder %s19, 0
    %p212 = por %p210, %p211
    %p213 = scmp.ne.s32.totalorder %s205, %s207
    %p214 = scmp.eq.s32.totalorder %s24, 1
    %p215 = por %p213, %p214
    %p216 = scmp.ne.s32.totalorder %s207, %s208
    %p217 = scmp.eq.s32.totalorder %s24, 0
    %p218 = por %p216, %p217
    %p219 = scmp.ne.s32.totalorder %s207, %s208
    %p220 = scmp.eq.s32.totalorder %s25, 1
    %p221 = por %p219, %p220
    %p223 = scmp.ne.s32.totalorder %s208, %s222
    %p224 = scmp.eq.s32.totalorder %s25, 0
    %p225 = por %p223, %p224
    %s227 = sadd.s32 %s226, 1
    %p230 = scmp.eq.s32.totalorder %s19, 1
    %p231 = scmp.ne.s32.totalorder %s226, %s228
    %p232 = scmp.eq.s32.totalorder %s19, 0
    %p233 = por %p231, %p232
    %p234 = scmp.ne.s32.totalorder %s226, %s228
    %p235 = scmp.eq.s32.totalorder %s24, 1
    %p236 = por %p234, %p235
    %p237 = scmp.ne.s32.totalorder %s228, %s229
    %p238 = scmp.eq.s32.totalorder %s24, 0
    %p239 = por %p237, %p238
    %p240 = scmp.ne.s32.totalorder %s228, %s229
    %p241 = scmp.eq.s32.totalorder %s25, 1
    %p242 = por %p240, %p241
    %p244 = scmp.ne.s32.totalorder %s229, %s243
    %p245 = scmp.eq.s32.totalorder %s25, 0
    %p246 = por %p244, %p245
    %s248 = sadd.s32 %s247, 1
    %p251 = scmp.eq.s32.totalorder %s19, 1
    %p252 = scmp.ne.s32.totalorder %s247, %s249
    %p253 = scmp.eq.s32.totalorder %s19, 0
    %p254 = por %p252, %p253
    %p255 = scmp.ne.s32.totalorder %s247, %s249
    %p256 = scmp.eq.s32.totalorder %s24, 1
    %p257 = por %p255, %p256
    %p258 = scmp.ne.s32.totalorder %s249, %s250
    %p259 = scmp.eq.s32.totalorder %s24, 0
    %p260 = por %p258, %p259
    %p261 = scmp.ne.s32.totalorder %s249, %s250
    %p262 = scmp.eq.s32.totalorder %s25, 1
    %p263 = por %p261, %p262
    %p265 = scmp.ne.s32.totalorder %s250, %s264
    %p266 = scmp.eq.s32.totalorder %s25, 0
    %p267 = por %p265, %p266
    %s269 = sadd.s32 %s268, 1
    %p272 = scmp.eq.s32.totalorder %s19, 1
    %p273 = scmp.ne.s32.totalorder %s268, %s270
    %p274 = scmp.eq.s32.totalorder %s19, 0
    %p275 = por %p273, %p274
    %p276 = scmp.ne.s32.totalorder %s268, %s270
    %p277 = scmp.eq.s32.totalorder %s24, 1
    %p278 = por %p276, %p277
    %p279 = scmp.ne.s32.totalorder %s270, %s271
    %p280 = scmp.eq.s32.totalorder %s24, 0
    %p281 = por %p279, %p280
    %p282 = scmp.ne.s32.totalorder %s270, %s271
    %p283 = scmp.eq.s32.totalorder %s25, 1
    %p284 = por %p282, %p283
    %p286 = scmp.ne.s32.totalorder %s271, %s285
    %p287 = scmp.eq.s32.totalorder %s25, 0
    %p288 = por %p286, %p287
    %s290 = sadd.s32 %s289, 1
    %p293 = scmp.eq.s32.totalorder %s19, 1
    %p294 = scmp.ne.s32.totalorder %s289, %s291
    %p295 = scmp.eq.s32.totalorder %s19, 0
    %p296 = por %p294, %p295
    %p297 = scmp.ne.s32.totalorder %s289, %s291
    %p298 = scmp.eq.s32.totalorder %s24, 1
    %p299 = por %p297, %p298
    %p300 = scmp.ne.s32.totalorder %s291, %s292
    %p301 = scmp.eq.s32.totalorder %s24, 0
    %p302 = por %p300, %p301
    %p303 = scmp.ne.s32.totalorder %s291, %s292
    %p304 = scmp.eq.s32.totalorder %s25, 1
    %p305 = por %p303, %p304
    %p307 = scmp.ne.s32.totalorder %s292, %s306
    %p308 = scmp.eq.s32.totalorder %s25, 0
    %p309 = por %p307, %p308
    %s310 = ssub.s32 %s19, %s26
    %p311 = scmp.eq.s32.totalorder %s310, 0
    %s313 = sadd.s32 %s312, 1
    %s314 = scalar_select %p311, %s312, %s313
    %p317 = pneg %p311
    %p318 = scmp.eq.s32.totalorder %s19, 1
    %p319 = por %p317, %p318
    %p320 = scmp.ne.s32.totalorder %s312, %s315
    %p321 = scmp.eq.s32.totalorder %s19, 0
    %p322 = por %p320, %p321
    %p323 = scmp.ne.s32.totalorder %s312, %s315
    %p324 = scmp.eq.s32.totalorder %s24, 1
    %p325 = por %p323, %p324
    %p326 = scmp.ne.s32.totalorder %s315, %s316
    %p327 = scmp.eq.s32.totalorder %s24, 0
    %p328 = por %p326, %p327
    %p329 = scmp.ne.s32.totalorder %s315, %s316
    %p330 = scmp.eq.s32.totalorder %s25, 1
    %p331 = por %p329, %p330
    %p333 = scmp.ne.s32.totalorder %s316, %s332
    %p334 = scmp.eq.s32.totalorder %s25, 0
    %p335 = por %p333, %p334
    %p336 = scmp.le.s32.totalorder 1, %s19
    %p337 = scmp.lt.s32.totalorder %s19, 3
    %p338 = pnand %p336, %p337
    %p339 = pneg %p338
    // Predicated region
    $region9: #{yolov5_with_cmaff_forward.15} parent=5 // pred_check
      _
    $region10: #{yolov5_with_cmaff_forward.15} parent=5 // pred_check_branch
      %341 = sbr.rel (%p338) target = $region12
    $region11: #{yolov5_with_cmaff_forward.15} parent=5 // pred_region
      %s342 = ssub.s32 %s19, 1
      // Predicated region
      $region13: #{yolov5_with_cmaff_forward.15} parent=11 // pred_check
        %p343 = pneg %p92
      $region14: #{yolov5_with_cmaff_forward.15} parent=11 // pred_check_branch
        %345 = sbr.rel (%p343) target = $region16
      $region15: #{yolov5_with_cmaff_forward.15} parent=11 // pred_region
        _
      $region16: #{yolov5_with_cmaff_forward.15} parent=11 // pred_fallthru
        _
      // Predicated region
      $region17: #{yolov5_with_cmaff_forward.15} parent=11 // pred_check
        %p346 = pneg %p113
      $region18: #{yolov5_with_cmaff_forward.15} parent=11 // pred_check_branch
        %348 = sbr.rel (%p346) target = $region20
      $region19: #{yolov5_with_cmaff_forward.15} parent=11 // pred_region
        _
      $region20: #{yolov5_with_cmaff_forward.15} parent=11 // pred_fallthru
        _
      // Predicated region
      $region21: #{yolov5_with_cmaff_forward.15} parent=11 // pred_check
        %p349 = pneg %p134
      $region22: #{yolov5_with_cmaff_forward.15} parent=11 // pred_check_branch
        %351 = sbr.rel (%p349) target = $region24
      $region23: #{yolov5_with_cmaff_forward.15} parent=11 // pred_region
        _
      $region24: #{yolov5_with_cmaff_forward.15} parent=11 // pred_fallthru
        _
      // Predicated region
      $region25: #{yolov5_with_cmaff_forward.15} parent=11 // pred_check
        %p352 = pneg %p155
      $region26: #{yolov5_with_cmaff_forward.15} parent=11 // pred_check_branch
        %354 = sbr.rel (%p352) target = $region28
      $region27: #{yolov5_with_cmaff_forward.15} parent=11 // pred_region
        _
      $region28: #{yolov5_with_cmaff_forward.15} parent=11 // pred_fallthru
        _
      // Predicated region
      $region29: #{yolov5_with_cmaff_forward.15} parent=11 // pred_check
        %p355 = pneg %p176
      $region30: #{yolov5_with_cmaff_forward.15} parent=11 // pred_check_branch
        %357 = sbr.rel (%p355) target = $region32
      $region31: #{yolov5_with_cmaff_forward.15} parent=11 // pred_region
        _
      $region32: #{yolov5_with_cmaff_forward.15} parent=11 // pred_fallthru
        _
      // Predicated region
      $region33: #{yolov5_with_cmaff_forward.15} parent=11 // pred_check
        %p358 = pneg %p197
      $region34: #{yolov5_with_cmaff_forward.15} parent=11 // pred_check_branch
        %360 = sbr.rel (%p358) target = $region36
      $region35: #{yolov5_with_cmaff_forward.15} parent=11 // pred_region
        _
      $region36: #{yolov5_with_cmaff_forward.15} parent=11 // pred_fallthru
        _
      // Predicated region
      $region37: #{yolov5_with_cmaff_forward.15} parent=11 // pred_check
        %p361 = pneg %p218
      $region38: #{yolov5_with_cmaff_forward.15} parent=11 // pred_check_branch
        %363 = sbr.rel (%p361) target = $region40
      $region39: #{yolov5_with_cmaff_forward.15} parent=11 // pred_region
        _
      $region40: #{yolov5_with_cmaff_forward.15} parent=11 // pred_fallthru
        _
      // Predicated region
      $region41: #{yolov5_with_cmaff_forward.15} parent=11 // pred_check
        %p364 = pneg %p239
      $region42: #{yolov5_with_cmaff_forward.15} parent=11 // pred_check_branch
        %366 = sbr.rel (%p364) target = $region44
      $region43: #{yolov5_with_cmaff_forward.15} parent=11 // pred_region
        _
      $region44: #{yolov5_with_cmaff_forward.15} parent=11 // pred_fallthru
        _
      // Predicated region
      $region45: #{yolov5_with_cmaff_forward.15} parent=11 // pred_check
        %p367 = pneg %p260
      $region46: #{yolov5_with_cmaff_forward.15} parent=11 // pred_check_branch
        %369 = sbr.rel (%p367) target = $region48
      $region47: #{yolov5_with_cmaff_forward.15} parent=11 // pred_region
        _
      $region48: #{yolov5_with_cmaff_forward.15} parent=11 // pred_fallthru
        _
      // Predicated region
      $region49: #{yolov5_with_cmaff_forward.15} parent=11 // pred_check
        %p370 = pneg %p281
      $region50: #{yolov5_with_cmaff_forward.15} parent=11 // pred_check_branch
        %372 = sbr.rel (%p370) target = $region52
      $region51: #{yolov5_with_cmaff_forward.15} parent=11 // pred_region
        _
      $region52: #{yolov5_with_cmaff_forward.15} parent=11 // pred_fallthru
        _
      // Predicated region
      $region53: #{yolov5_with_cmaff_forward.15} parent=11 // pred_check
        %p373 = pneg %p302
      $region54: #{yolov5_with_cmaff_forward.15} parent=11 // pred_check_branch
        %375 = sbr.rel (%p373) target = $region56
      $region55: #{yolov5_with_cmaff_forward.15} parent=11 // pred_region
        _
      $region56: #{yolov5_with_cmaff_forward.15} parent=11 // pred_fallthru
        _
    $region12: #{yolov5_with_cmaff_forward.15} parent=5 // pred_fallthru
      _
    %p376 = scmp.lt.s32.totalorder %s19, 2
    // Predicated region
    $region57: #{yolov5_with_cmaff_forward.15} parent=5 // pred_check
      %p377 = pneg %p376
    $region58: #{yolov5_with_cmaff_forward.15} parent=5 // pred_check_branch
      %379 = sbr.rel (%p377) target = $region60
    $region59: #{yolov5_with_cmaff_forward.15} parent=5 // pred_region
      // Predicated region
      $region61: #{yolov5_with_cmaff_forward.15} parent=59 // pred_check
        %p380 = pneg %p39
      $region62: #{yolov5_with_cmaff_forward.15} parent=59 // pred_check_branch
        %382 = sbr.rel (%p380) target = $region64
      $region63: #{yolov5_with_cmaff_forward.15} parent=59 // pred_region
        %p383 = scmp.lt.s32.totalorder %s19, 1
        %s384 = scalar_select %p383, %s19, 1
        %s385 = smul.addr %s384, 4
        %s386 = scalar_lea.vmem %s0, %s385
      $region64: #{yolov5_with_cmaff_forward.15} parent=59 // pred_fallthru
        _
      // Predicated region
      $region65: #{yolov5_with_cmaff_forward.15} parent=59 // pred_check
        %p387 = pneg %p65
      $region66: #{yolov5_with_cmaff_forward.15} parent=59 // pred_check_branch
        %389 = sbr.rel (%p387) target = $region68
      $region67: #{yolov5_with_cmaff_forward.15} parent=59 // pred_region
        %p390 = scmp.lt.s32.totalorder %s19, 1
        %s391 = scalar_select %p390, %s19, 1
        %s392 = smul.addr %s391, 4
        %s393 = scalar_lea.vmem %s1, %s392
      $region68: #{yolov5_with_cmaff_forward.15} parent=59 // pred_fallthru
        _
    $region60: #{yolov5_with_cmaff_forward.15} parent=5 // pred_fallthru
      _
    %p394 = scmp.le.s32.totalorder 1, %s19
    %p395 = scmp.lt.s32.totalorder %s19, 3
    %p396 = pnand %p394, %p395
    %p397 = pneg %p396
    // Predicated region
    $region69: #{yolov5_with_cmaff_forward.15} parent=5 // pred_check
      _
    $region70: #{yolov5_with_cmaff_forward.15} parent=5 // pred_check_branch
      %399 = sbr.rel (%p396) target = $region72
    $region71: #{yolov5_with_cmaff_forward.15} parent=5 // pred_region
      %s400 = ssub.s32 %s19, 1
      %p401 = scmp.lt.s32.totalorder %s24, 1
      %s402 = scalar_select %p401, %s24, 1
      %s403 = smul.addr %s402, 4
      %s404 = scalar_lea.vmem %s0, %s403
      %p405 = pneg %p45
      %p406 = pneg %p42
      %p407 = scmp.lt.s32.totalorder %s24, 1
      %s408 = scalar_select %p407, %s24, 1
      %s409 = smul.addr %s408, 4
      %s410 = scalar_lea.vmem %s1, %s409
      %p411 = pneg %p71
      %p412 = pneg %p68
      %p413 = pneg %p92
      %p414 = pneg %p89
      %p415 = pneg %p113
      %p416 = pneg %p110
      %p417 = pneg %p134
      %p418 = pneg %p131
      %p419 = pneg %p155
      %p420 = pneg %p152
      %p421 = pneg %p176
      %p422 = pneg %p173
      %p423 = pneg %p197
      %p424 = pneg %p194
      %p425 = pneg %p218
      %p426 = pneg %p215
      %p427 = pneg %p239
      %p428 = pneg %p236
      %p429 = pneg %p260
      %p430 = pneg %p257
      %p431 = pneg %p281
      %p432 = pneg %p278
      %p433 = pneg %p302
      %p434 = pneg %p299
      %p435 = pneg %p328
      %p436 = pneg %p325
      %p437 = scmp.lt.s32.totalorder %s24, 1
      %s438 = scalar_select %p437, %s24, 1
      %s439 = smul.addr %s438, 4
      %s440 = scalar_lea.vmem %s13, %s439
      %p441 = scmp.lt.s32.totalorder %s24, 1
      %s442 = scalar_select %p441, %s24, 1
      %s443 = smul.addr %s442, 4
      %s444 = scalar_lea.vmem %s0, %s443
      %p445 = scmp.lt.s32.totalorder %s24, 1
      %s446 = scalar_select %p445, %s24, 1
      %s447 = smul.addr %s446, 4
      %s448 = scalar_lea.vmem %s1, %s447
      %p449 = scmp.lt.s32.totalorder %s24, 1
      %s450 = scalar_select %p449, %s24, 1
      %s451 = smul.addr %s450, 4
      %s452 = scalar_lea.vmem %s13, %s451
      %v453 = vld [vmem:[%s444] sm:$0xf]
      %v454 = vld [vmem:[%s448] sm:$0xf]
      %v455 = vsub.f32 %v453, %v454
      %v456 = vmul.f32 %v455, 0.5
      %v457 = vadd.f32 %v453, %v454
      %v458 = vmul.f32 %v457, 0.5
      %vm459 = vcmask 519168
      %v460 = vsel %vm459, %v456, 0.0
      %v461 = vrot.slane %v460, 4
      %v462 = vadd.f32 %v460, %v461
      %v463 = vrot.slane %v462, 2
      %v464 = vadd.f32 %v462, %v463
      %v465 = vrot.slane %v464, 1
      %v466 = vadd.f32 %v464, %v465
      %v467 = vrcp.pop 4.0
      %v468 = vmul.f32 %v466, %v467
      %v469 = vsel %vm459, %v456, -inf
      %v470 = vrot.slane %v469, 4
      %v471 = vmax.f32 %v469, %v470
      %v472 = vrot.slane %v471, 2
      %v473 = vmax.f32 %v471, %v472
      %v474 = vrot.slane %v473, 1
      %v475 = vmax.f32 %v473, %v474
      %v476 = vadd.f32 %v468, %v475
      %v477 = vld [vmem:[%s2] sm:$0xff]
      %v478 = vld [vmem:[%s2 + $0x8] sm:$0xff]
      %v479 = vld [vmem:[%s2 + $0x10] sm:$0xff]
      %v480 = vld [vmem:[%s2 + $0x18] sm:$0xff]
      %v481 = vld [vmem:[%s2 + $0x20] sm:$0xff]
      %v482 = vld [vmem:[%s2 + $0x28] sm:$0xff]
      %v483 = vld [vmem:[%s2 + $0x30] sm:$0xff]
      %v484 = vld [vmem:[%s2 + $0x38] sm:$0xff]
      %v485 = vld [vmem:[%s3] sm:$0x1]
      %vm486 = vcmask 523264
      %v488 = vsel %vm486, %v476, 0
      %490 = vmatprep.subr.mxu0 0.0
      %491 = vmatpush1.msra.mxu0 %v477
      %492 = vmatprep.subr.mxu0 0.0
      %493 = vmatpush1.msra.mxu0 %v478
      %494 = vmatprep.subr.mxu0 0.0
      %495 = vmatpush1.msra.mxu0 %v479
      %496 = vmatprep.subr.mxu0 0.0
      %497 = vmatpush1.msra.mxu0 %v480
      %498 = vmatprep.subr.mxu0 0.0
      %499 = vmatpush1.msra.mxu0 %v481
      %500 = vmatprep.subr.mxu0 0.0
      %501 = vmatpush1.msra.mxu0 %v482
      %502 = vmatprep.subr.mxu0 0.0
      %503 = vmatpush1.msra.mxu0 %v483
      %504 = vmatprep.subr.mxu0 0.0
      %505 = vmatpush1.msra.mxu0 %v484
      %506 = vmatprep.subr.mxu0 0.0
      %507 = vmatpush1.msra.mxu0 0.0
      %508 = vmatprep.subr.mxu0 0.0
      %509 = vmatpush1.msra.mxu0 0.0
      %510 = vmatprep.subr.mxu0 0.0
      %511 = vmatpush1.msra.mxu0 0.0
      %512 = vmatprep.subr.mxu0 0.0
      %513 = vmatpush1.msra.mxu0 0.0
      %514 = vmatprep.subr.mxu0 0.0
      %515 = vmatpush1.msra.mxu0 0.0
      %516 = vmatprep.subr.mxu0 0.0
      %517 = vmatpush1.msra.mxu0 0.0
      %518 = vmatprep.subr.mxu0 0.0
      %519 = vmatpush1.msra.mxu0 0.0
      %520 = vmatprep.subr.mxu0 0.0
      %521 = vmatpush1.msra.mxu0 0.0
      %522 = vmatprep.subr.mxu0 0.0
      %523 = vmatpush1.msra.mxu0 0.0
      %524 = vmatprep.subr.mxu0 0.0
      %525 = vmatpush1.msra.mxu0 0.0
      %526 = vmatprep.subr.mxu0 0.0
      %527 = vmatpush1.msra.mxu0 0.0
      %528 = vmatprep.subr.mxu0 0.0
      %529 = vmatpush1.msra.mxu0 0.0
      %530 = vmatprep.subr.mxu0 0.0
      %531 = vmatpush1.msra.mxu0 0.0
      %532 = vmatprep.subr.mxu0 0.0
      %533 = vmatpush1.msra.mxu0 0.0
      %534 = vmatprep.subr.mxu0 0.0
      %535 = vmatpush1.msra.mxu0 0.0
      %536 = vmatprep.subr.mxu0 0.0
      %537 = vmatpush1.msra.mxu0 0.0
      %538 = vmatprep.subr.mxu0 0.0
      %539 = vmatpush1.msra.mxu0 0.0
      %540 = vmatprep.subr.mxu0 0.0
      %541 = vmatpush1.msra.mxu0 0.0
      %542 = vmatprep.subr.mxu0 0.0
      %543 = vmatpush1.msra.mxu0 0.0
      %544 = vmatprep.subr.mxu0 0.0
      %545 = vmatpush1.msra.mxu0 0.0
      %546 = vmatprep.subr.mxu0 0.0
      %547 = vmatpush1.msra.mxu0 0.0
      %548 = vmatprep.subr.mxu0 0.0
      %549 = vmatpush1.msra.mxu0 0.0
      %550 = vmatprep.subr.mxu0 0.0
      %551 = vmatpush1.msra.mxu0 0.0
      %552 = vmatprep.subr.mxu0 0.0
      %553 = vmatpush1.msra.mxu0 0.0
      %554 = vmatprep.mubr.f32.mxu0 0.0
      %555 = vmatmul.mubr.f32.gmra.mrb[0].mxu0 %v488
      %v556 = vpop.f32.mrb[0].mxu0
      %v557 = vadd.f32 %v485, %v556
      %v558 = vpop.f32.mrb[0].mxu0
      %559 = vdwg.mxu0
      %v560 = vmax.f32 %v557, 0.0
      %v561 = vld [vmem:[%s4] sm:$0xf]
      %v562 = vld [vmem:[%s5] sm:$0x1]
      %vm563 = vcmask 31744
      %v565 = vsel %vm563, %v560, 0
      %vm567 = vcmask 1043456
      %v569 = vsel %vm567, %v561, 0
      %571 = vmatprep.subr.mxu0 0.0
      %572 = vmatpush1.msra.mxu0 %v569
      %573 = vmatprep.subr.mxu0 0.0
      %574 = vmatpush1.msra.mxu0 0.0
      %575 = vmatprep.subr.mxu0 0.0
      %576 = vmatpush1.msra.mxu0 0.0
      %577 = vmatprep.subr.mxu0 0.0
      %578 = vmatpush1.msra.mxu0 0.0
      %579 = vmatprep.subr.mxu0 0.0
      %580 = vmatpush1.msra.mxu0 0.0
      %581 = vmatprep.subr.mxu0 0.0
      %582 = vmatpush1.msra.mxu0 0.0
      %583 = vmatprep.subr.mxu0 0.0
      %584 = vmatpush1.msra.mxu0 0.0
      %585 = vmatprep.subr.mxu0 0.0
      %586 = vmatpush1.msra.mxu0 0.0
      %587 = vmatprep.subr.mxu0 0.0
      %588 = vmatpush1.msra.mxu0 0.0
      %589 = vmatprep.subr.mxu0 0.0
      %590 = vmatpush1.msra.mxu0 0.0
      %591 = vmatprep.subr.mxu0 0.0
      %592 = vmatpush1.msra.mxu0 0.0
      %593 = vmatprep.subr.mxu0 0.0
      %594 = vmatpush1.msra.mxu0 0.0
      %595 = vmatprep.subr.mxu0 0.0
      %596 = vmatpush1.msra.mxu0 0.0
      %597 = vmatprep.subr.mxu0 0.0
      %598 = vmatpush1.msra.mxu0 0.0
      %599 = vmatprep.subr.mxu0 0.0
      %600 = vmatpush1.msra.mxu0 0.0
      %601 = vmatprep.subr.mxu0 0.0
      %602 = vmatpush1.msra.mxu0 0.0
      %603 = vmatprep.subr.mxu0 0.0
      %604 = vmatpush1.msra.mxu0 0.0
      %605 = vmatprep.subr.mxu0 0.0
      %606 = vmatpush1.msra.mxu0 0.0
      %607 = vmatprep.subr.mxu0 0.0
      %608 = vmatpush1.msra.mxu0 0.0
      %609 = vmatprep.subr.mxu0 0.0
      %610 = vmatpush1.msra.mxu0 0.0
      %611 = vmatprep.subr.mxu0 0.0
      %612 = vmatpush1.msra.mxu0 0.0
      %613 = vmatprep.subr.mxu0 0.0
      %614 = vmatpush1.msra.mxu0 0.0
      %615 = vmatprep.subr.mxu0 0.0
      %616 = vmatpush1.msra.mxu0 0.0
      %617 = vmatprep.subr.mxu0 0.0
      %618 = vmatpush1.msra.mxu0 0.0
      %619 = vmatprep.subr.mxu0 0.0
      %620 = vmatpush1.msra.mxu0 0.0
      %621 = vmatprep.subr.mxu0 0.0
      %622 = vmatpush1.msra.mxu0 0.0
      %623 = vmatprep.subr.mxu0 0.0
      %624 = vmatpush1.msra.mxu0 0.0
      %625 = vmatprep.subr.mxu0 0.0
      %626 = vmatpush1.msra.mxu0 0.0
      %627 = vmatprep.subr.mxu0 0.0
      %628 = vmatpush1.msra.mxu0 0.0
      %629 = vmatprep.subr.mxu0 0.0
      %630 = vmatpush1.msra.mxu0 0.0
      %631 = vmatprep.subr.mxu0 0.0
      %632 = vmatpush1.msra.mxu0 0.0
      %633 = vmatprep.subr.mxu0 0.0
      %634 = vmatpush1.msra.mxu0 0.0
      %635 = vmatprep.mubr.f32.mxu0 0.0
      %636 = vmatmul.mubr.f32.gmra.mrb[0].mxu0 %v565
      %v637 = vpop.f32.mrb[0].mxu0
      %v638 = vadd.f32 %v562, %v637
      %v639 = vpop.f32.mrb[0].mxu0
      %640 = vdwg.mxu0
      %v641 = vsub.f32 0.0, %v638
      %v642 = vmul.f32 %v641, 1.442695
      %v643 = vpow.pop %v642
      %v644 = vadd.f32 %v643, 1.0
      %v645 = vrcp.pop %v644
      %v646 = vmul.f32 1.0, %v645
      %v647 = vadd.f32 %v646, 1.0
      %v648 = vlaneseq
      %v649 = vshrl.u32 %v648, 7
      %v650 = vsub.s32 0, %v649
      %v651 = vrot.slane %v647, %v650
      %v652 = vmul.f32 %v456, %v651
      %v653 = vld [vmem:[%s6] sm:$0xff]
      %v654 = vld [vmem:[%s6 + $0x8] sm:$0xff]
      %v655 = vld [vmem:[%s6 + $0x10] sm:$0xff]
      %v656 = vld [vmem:[%s6 + $0x18] sm:$0xff]
      %v657 = vld [vmem:[%s6 + $0x20] sm:$0xff]
      %v658 = vld [vmem:[%s6 + $0x28] sm:$0xff]
      %v659 = vld [vmem:[%s6 + $0x30] sm:$0xff]
      %v660 = vld [vmem:[%s6 + $0x38] sm:$0xff]
      %v661 = vld [vmem:[%s7] sm:$0x1]
      %v663 = vlaneseq
      %v664 = vshrl.u32 %v663, 7
      %v665 = vsub.s32 0, %v664
      %v666 = vrot.slane %v661, %v665
      %v669 = vsel %vm486, %v458, 0
      %671 = vmatprep.subr.mxu0 0.0
      %672 = vmatpush1.msra.mxu0 %v653
      %673 = vmatprep.subr.mxu0 0.0
      %674 = vmatpush1.msra.mxu0 %v654
      %675 = vmatprep.subr.mxu0 0.0
      %676 = vmatpush1.msra.mxu0 %v655
      %677 = vmatprep.subr.mxu0 0.0
      %678 = vmatpush1.msra.mxu0 %v656
      %679 = vmatprep.subr.mxu0 0.0
      %680 = vmatpush1.msra.mxu0 %v657
      %681 = vmatprep.subr.mxu0 0.0
      %682 = vmatpush1.msra.mxu0 %v658
      %683 = vmatprep.subr.mxu0 0.0
      %684 = vmatpush1.msra.mxu0 %v659
      %685 = vmatprep.subr.mxu0 0.0
      %686 = vmatpush1.msra.mxu0 %v660
      %687 = vmatprep.subr.mxu0 0.0
      %688 = vmatpush1.msra.mxu0 0.0
      %689 = vmatprep.subr.mxu0 0.0
      %690 = vmatpush1.msra.mxu0 0.0
      %691 = vmatprep.subr.mxu0 0.0
      %692 = vmatpush1.msra.mxu0 0.0
      %693 = vmatprep.subr.mxu0 0.0
      %694 = vmatpush1.msra.mxu0 0.0
      %695 = vmatprep.subr.mxu0 0.0
      %696 = vmatpush1.msra.mxu0 0.0
      %697 = vmatprep.subr.mxu0 0.0
      %698 = vmatpush1.msra.mxu0 0.0
      %699 = vmatprep.subr.mxu0 0.0
      %700 = vmatpush1.msra.mxu0 0.0
      %701 = vmatprep.subr.mxu0 0.0
      %702 = vmatpush1.msra.mxu0 0.0
      %703 = vmatprep.subr.mxu0 0.0
      %704 = vmatpush1.msra.mxu0 0.0
      %705 = vmatprep.subr.mxu0 0.0
      %706 = vmatpush1.msra.mxu0 0.0
      %707 = vmatprep.subr.mxu0 0.0
      %708 = vmatpush1.msra.mxu0 0.0
      %709 = vmatprep.subr.mxu0 0.0
      %710 = vmatpush1.msra.mxu0 0.0
      %711 = vmatprep.subr.mxu0 0.0
      %712 = vmatpush1.msra.mxu0 0.0
      %713 = vmatprep.subr.mxu0 0.0
      %714 = vmatpush1.msra.mxu0 0.0
      %715 = vmatprep.subr.mxu0 0.0
      %716 = vmatpush1.msra.mxu0 0.0
      %717 = vmatprep.subr.mxu0 0.0
      %718 = vmatpush1.msra.mxu0 0.0
      %719 = vmatprep.subr.mxu0 0.0
      %720 = vmatpush1.msra.mxu0 0.0
      %721 = vmatprep.subr.mxu0 0.0
      %722 = vmatpush1.msra.mxu0 0.0
      %723 = vmatprep.subr.mxu0 0.0
      %724 = vmatpush1.msra.mxu0 0.0
      %725 = vmatprep.subr.mxu0 0.0
      %726 = vmatpush1.msra.mxu0 0.0
      %727 = vmatprep.subr.mxu0 0.0
      %728 = vmatpush1.msra.mxu0 0.0
      %729 = vmatprep.subr.mxu0 0.0
      %730 = vmatpush1.msra.mxu0 0.0
      %731 = vmatprep.subr.mxu0 0.0
      %732 = vmatpush1.msra.mxu0 0.0
      %733 = vmatprep.subr.mxu0 0.0
      %734 = vmatpush1.msra.mxu0 0.0
      %735 = vmatprep.mubr.f32.mxu0 0.0
      %736 = vmatmul.mubr.f32.gmra.mrb[0].mxu0 %v669
      %v737 = vpop.f32.mrb[0].mxu0
      %v738 = vadd.f32 %v666, %v737
      %v739 = vpop.f32.mrb[0].mxu0
      %740 = vdwg.mxu0
      %v741 = vmax.f32 %v738, 0.0
      %v742 = vld [vmem:[%s8] sm:$0xf]
      %v743 = vld [vmem:[%s9] sm:$0x1]
      %v745 = vlaneseq
      %v746 = vshrl.u32 %v745, 7
      %v747 = vsub.s32 0, %v746
      %v748 = vrot.slane %v743, %v747
      %v751 = vsel %vm563, %v741, 0
      %v754 = vsel %vm567, %v742, 0
      %756 = vmatprep.subr.mxu0 0.0
      %757 = vmatpush1.msra.mxu0 %v754
      %758 = vmatprep.subr.mxu0 0.0
      %759 = vmatpush1.msra.mxu0 0.0
      %760 = vmatprep.subr.mxu0 0.0
      %761 = vmatpush1.msra.mxu0 0.0
      %762 = vmatprep.subr.mxu0 0.0
      %763 = vmatpush1.msra.mxu0 0.0
      %764 = vmatprep.subr.mxu0 0.0
      %765 = vmatpush1.msra.mxu0 0.0
      %766 = vmatprep.subr.mxu0 0.0
      %767 = vmatpush1.msra.mxu0 0.0
      %768 = vmatprep.subr.mxu0 0.0
      %769 = vmatpush1.msra.mxu0 0.0
      %770 = vmatprep.subr.mxu0 0.0
      %771 = vmatpush1.msra.mxu0 0.0
      %772 = vmatprep.subr.mxu0 0.0
      %773 = vmatpush1.msra.mxu0 0.0
      %774 = vmatprep.subr.mxu0 0.0
      %775 = vmatpush1.msra.mxu0 0.0
      %776 = vmatprep.subr.mxu0 0.0
      %777 = vmatpush1.msra.mxu0 0.0
      %778 = vmatprep.subr.mxu0 0.0
      %779 = vmatpush1.msra.mxu0 0.0
      %780 = vmatprep.subr.mxu0 0.0
      %781 = vmatpush1.msra.mxu0 0.0
      %782 = vmatprep.subr.mxu0 0.0
      %783 = vmatpush1.msra.mxu0 0.0
      %784 = vmatprep.subr.mxu0 0.0
      %785 = vmatpush1.msra.mxu0 0.0
      %786 = vmatprep.subr.mxu0 0.0
      %787 = vmatpush1.msra.mxu0 0.0
      %788 = vmatprep.subr.mxu0 0.0
      %789 = vmatpush1.msra.mxu0 0.0
      %790 = vmatprep.subr.mxu0 0.0
      %791 = vmatpush1.msra.mxu0 0.0
      %792 = vmatprep.subr.mxu0 0.0
      %793 = vmatpush1.msra.mxu0 0.0
      %794 = vmatprep.subr.mxu0 0.0
      %795 = vmatpush1.msra.mxu0 0.0
      %796 = vmatprep.subr.mxu0 0.0
      %797 = vmatpush1.msra.mxu0 0.0
      %798 = vmatprep.subr.mxu0 0.0
      %799 = vmatpush1.msra.mxu0 0.0
      %800 = vmatprep.subr.mxu0 0.0
      %801 = vmatpush1.msra.mxu0 0.0
      %802 = vmatprep.subr.mxu0 0.0
      %803 = vmatpush1.msra.mxu0 0.0
      %804 = vmatprep.subr.mxu0 0.0
      %805 = vmatpush1.msra.mxu0 0.0
      %806 = vmatprep.subr.mxu0 0.0
      %807 = vmatpush1.msra.mxu0 0.0
      %808 = vmatprep.subr.mxu0 0.0
      %809 = vmatpush1.msra.mxu0 0.0
      %810 = vmatprep.subr.mxu0 0.0
      %811 = vmatpush1.msra.mxu0 0.0
      %812 = vmatprep.subr.mxu0 0.0
      %813 = vmatpush1.msra.mxu0 0.0
      %814 = vmatprep.subr.mxu0 0.0
      %815 = vmatpush1.msra.mxu0 0.0
      %816 = vmatprep.subr.mxu0 0.0
      %817 = vmatpush1.msra.mxu0 0.0
      %818 = vmatprep.subr.mxu0 0.0
      %819 = vmatpush1.msra.mxu0 0.0
      %820 = vmatprep.mubr.f32.mxu0 0.0
      %821 = vmatmul.mubr.f32.gmra.mrb[0].mxu0 %v751
      %v822 = vpop.f32.mrb[0].mxu0
      %v823 = vadd.f32 %v748, %v822
      %v824 = vpop.f32.mrb[0].mxu0
      %825 = vdwg.mxu0
      %v826 = vsel %vm459, %v823, -inf
      %827 = vmax.xlane.f32.xlu0 %v826
      %v828 = vpop.xlane.xlu0 %827
      %v829 = vsub.f32 %v823, %v828
      %v830 = vmul.f32 %v829, 1.442695
      %v831 = vpow.pop %v830
      %v832 = vsel %vm459, %v831, 0.0
      %833 = vadd.xlane.f32.xlu0 %v832
      %v834 = vpop.xlane.xlu0 %833
      %v835 = vrcp.pop %v834
      %v836 = vmul.f32 %v831, %v835
      %v837 = vmul.f32 %v458, %v836
      %v838 = vld [vmem:[%s10] sm:$0xff]
      %v839 = vld [vmem:[%s10 + $0x8] sm:$0xff]
      %v840 = vld [vmem:[%s10 + $0x10] sm:$0xff]
      %v841 = vld [vmem:[%s10 + $0x18] sm:$0xff]
      %v842 = vld [vmem:[%s10 + $0x20] sm:$0xff]
      %v843 = vld [vmem:[%s10 + $0x28] sm:$0xff]
      %v844 = vld [vmem:[%s10 + $0x30] sm:$0xff]
      %v845 = vld [vmem:[%s10 + $0x38] sm:$0xff]
      %v846 = vld [vmem:[%s11] sm:$0xff]
      %v847 = vld [vmem:[%s11 + $0x8] sm:$0xff]
      %v848 = vld [vmem:[%s11 + $0x10] sm:$0xff]
      %v849 = vld [vmem:[%s11 + $0x18] sm:$0xff]
      %v850 = vld [vmem:[%s11 + $0x20] sm:$0xff]
      %v851 = vld [vmem:[%s11 + $0x28] sm:$0xff]
      %v852 = vld [vmem:[%s11 + $0x30] sm:$0xff]
      %v853 = vld [vmem:[%s11 + $0x38] sm:$0xff]
      %v855 = vsel %vm486, %v837, 0
      %857 = vmatprep.subr.mxu0 0.0
      %858 = vmatpush1.msra.mxu0 %v846
      %859 = vmatprep.subr.mxu0 0.0
      %860 = vmatpush1.msra.mxu0 %v847
      %861 = vmatprep.subr.mxu0 0.0
      %862 = vmatpush1.msra.mxu0 %v848
      %863 = vmatprep.subr.mxu0 0.0
      %864 = vmatpush1.msra.mxu0 %v849
      %865 = vmatprep.subr.mxu0 0.0
      %866 = vmatpush1.msra.mxu0 %v850
      %867 = vmatprep.subr.mxu0 0.0
      %868 = vmatpush1.msra.mxu0 %v851
      %869 = vmatprep.subr.mxu0 0.0
      %870 = vmatpush1.msra.mxu0 %v852
      %871 = vmatprep.subr.mxu0 0.0
      %872 = vmatpush1.msra.mxu0 %v853
      %873 = vmatprep.subr.mxu0 0.0
      %874 = vmatpush1.msra.mxu0 0.0
      %875 = vmatprep.subr.mxu0 0.0
      %876 = vmatpush1.msra.mxu0 0.0
      %877 = vmatprep.subr.mxu0 0.0
      %878 = vmatpush1.msra.mxu0 0.0
      %879 = vmatprep.subr.mxu0 0.0
      %880 = vmatpush1.msra.mxu0 0.0
      %881 = vmatprep.subr.mxu0 0.0
      %882 = vmatpush1.msra.mxu0 0.0
      %883 = vmatprep.subr.mxu0 0.0
      %884 = vmatpush1.msra.mxu0 0.0
      %885 = vmatprep.subr.mxu0 0.0
      %886 = vmatpush1.msra.mxu0 0.0
      %887 = vmatprep.subr.mxu0 0.0
      %888 = vmatpush1.msra.mxu0 0.0
      %889 = vmatprep.subr.mxu0 0.0
      %890 = vmatpush1.msra.mxu0 0.0
      %891 = vmatprep.subr.mxu0 0.0
      %892 = vmatpush1.msra.mxu0 0.0
      %893 = vmatprep.subr.mxu0 0.0
      %894 = vmatpush1.msra.mxu0 0.0
      %895 = vmatprep.subr.mxu0 0.0
      %896 = vmatpush1.msra.mxu0 0.0
      %897 = vmatprep.subr.mxu0 0.0
      %898 = vmatpush1.msra.mxu0 0.0
      %899 = vmatprep.subr.mxu0 0.0
      %900 = vmatpush1.msra.mxu0 0.0
      %901 = vmatprep.subr.mxu0 0.0
      %902 = vmatpush1.msra.mxu0 0.0
      %903 = vmatprep.subr.mxu0 0.0
      %904 = vmatpush1.msra.mxu0 0.0
      %905 = vmatprep.subr.mxu0 0.0
      %906 = vmatpush1.msra.mxu0 0.0
      %907 = vmatprep.subr.mxu0 0.0
      %908 = vmatpush1.msra.mxu0 0.0
      %909 = vmatprep.subr.mxu0 0.0
      %910 = vmatpush1.msra.mxu0 0.0
      %911 = vmatprep.subr.mxu0 0.0
      %912 = vmatpush1.msra.mxu0 0.0
      %913 = vmatprep.subr.mxu0 0.0
      %914 = vmatpush1.msra.mxu0 0.0
      %915 = vmatprep.subr.mxu0 0.0
      %916 = vmatpush1.msra.mxu0 0.0
      %917 = vmatprep.subr.mxu0 0.0
      %918 = vmatpush1.msra.mxu0 0.0
      %919 = vmatprep.subr.mxu0 0.0
      %920 = vmatpush1.msra.mxu0 0.0
      %921 = vmatprep.mubr.f32.mxu0 0.0
      %922 = vmatmul.mubr.f32.gmra.mrb[0].mxu0 %v855
      %v923 = vpop.f32.mrb[0].mxu0
      %v924 = vadd.f32 0.0, %v923
      %v925 = vpop.f32.mrb[0].mxu0
      %926 = vdwg.mxu0
      %v928 = vsel %vm486, %v652, 0
      %930 = vmatprep.subr.mxu0 0.0
      %931 = vmatpush1.msra.mxu0 %v838
      %932 = vmatprep.subr.mxu0 0.0
      %933 = vmatpush1.msra.mxu0 %v839
      %934 = vmatprep.subr.mxu0 0.0
      %935 = vmatpush1.msra.mxu0 %v840
      %936 = vmatprep.subr.mxu0 0.0
      %937 = vmatpush1.msra.mxu0 %v841
      %938 = vmatprep.subr.mxu0 0.0
      %939 = vmatpush1.msra.mxu0 %v842
      %940 = vmatprep.subr.mxu0 0.0
      %941 = vmatpush1.msra.mxu0 %v843
      %942 = vmatprep.subr.mxu0 0.0
      %943 = vmatpush1.msra.mxu0 %v844
      %944 = vmatprep.subr.mxu0 0.0
      %945 = vmatpush1.msra.mxu0 %v845
      %946 = vmatprep.subr.mxu0 0.0
      %947 = vmatpush1.msra.mxu0 0.0
      %948 = vmatprep.subr.mxu0 0.0
      %949 = vmatpush1.msra.mxu0 0.0
      %950 = vmatprep.subr.mxu0 0.0
      %951 = vmatpush1.msra.mxu0 0.0
      %952 = vmatprep.subr.mxu0 0.0
      %953 = vmatpush1.msra.mxu0 0.0
      %954 = vmatprep.subr.mxu0 0.0
      %955 = vmatpush1.msra.mxu0 0.0
      %956 = vmatprep.subr.mxu0 0.0
      %957 = vmatpush1.msra.mxu0 0.0
      %958 = vmatprep.subr.mxu0 0.0
      %959 = vmatpush1.msra.mxu0 0.0
      %960 = vmatprep.subr.mxu0 0.0
      %961 = vmatpush1.msra.mxu0 0.0
      %962 = vmatprep.subr.mxu0 0.0
      %963 = vmatpush1.msra.mxu0 0.0
      %964 = vmatprep.subr.mxu0 0.0
      %965 = vmatpush1.msra.mxu0 0.0
      %966 = vmatprep.subr.mxu0 0.0
      %967 = vmatpush1.msra.mxu0 0.0
      %968 = vmatprep.subr.mxu0 0.0
      %969 = vmatpush1.msra.mxu0 0.0
      %970 = vmatprep.subr.mxu0 0.0
      %971 = vmatpush1.msra.mxu0 0.0
      %972 = vmatprep.subr.mxu0 0.0
      %973 = vmatpush1.msra.mxu0 0.0
      %974 = vmatprep.subr.mxu0 0.0
      %975 = vmatpush1.msra.mxu0 0.0
      %976 = vmatprep.subr.mxu0 0.0
      %977 = vmatpush1.msra.mxu0 0.0
      %978 = vmatprep.subr.mxu0 0.0
      %979 = vmatpush1.msra.mxu0 0.0
      %980 = vmatprep.subr.mxu0 0.0
      %981 = vmatpush1.msra.mxu0 0.0
      %982 = vmatprep.subr.mxu0 0.0
      %983 = vmatpush1.msra.mxu0 0.0
      %984 = vmatprep.subr.mxu0 0.0
      %985 = vmatpush1.msra.mxu0 0.0
      %986 = vmatprep.subr.mxu0 0.0
      %987 = vmatpush1.msra.mxu0 0.0
      %988 = vmatprep.subr.mxu0 0.0
      %989 = vmatpush1.msra.mxu0 0.0
      %990 = vmatprep.subr.mxu0 0.0
      %991 = vmatpush1.msra.mxu0 0.0
      %992 = vmatprep.subr.mxu0 0.0
      %993 = vmatpush1.msra.mxu0 0.0
      %994 = vmatprep.mubr.f32.mxu0 0.0
      %995 = vmatmul.mubr.f32.gmra.mrb[0].mxu0 %v928
      %v996 = vpop.f32.mrb[0].mxu0
      %v997 = vadd.f32 %v924, %v996
      %v998 = vpop.f32.mrb[0].mxu0
      %999 = vdwg.mxu0
      %v1000 = vld [vmem:[%s12] sm:$0x1]
      %v1002 = vlaneseq
      %v1003 = vshrl.u32 %v1002, 7
      %v1004 = vsub.s32 0, %v1003
      %v1005 = vrot.slane %v1000, %v1004
      %v1007 = vadd.f32 %v997, %v1005
      %1008 = vst.msk [vmem:[%s452] sm:$0xf] %vm459, %v1007
      %p1009 = scmp.lt.s32.totalorder %s24, 1
      %s1010 = scalar_select %p1009, %s24, 1
      %s1011 = smul.addr %s1010, 4
      %s1012 = scalar_lea.vmem %s13, %s1011
      // Predicated region
      $region73: #{yolov5_with_cmaff_forward.15} parent=71 // pred_check
        %p1013 = pneg %p325
      $region74: #{yolov5_with_cmaff_forward.15} parent=71 // pred_check_branch
        %1015 = sbr.rel (%p1013) target = $region76
      $region75: #{yolov5_with_cmaff_forward.15} parent=71 // pred_region
        _
      $region76: #{yolov5_with_cmaff_forward.15} parent=71 // pred_fallthru
        _
    $region72: #{yolov5_with_cmaff_forward.15} parent=5 // pred_fallthru
      _
    %p1016 = scmp.le.s32.totalorder 2, %s19
    // Predicated region
    $region77: #{yolov5_with_cmaff_forward.15} parent=5 // pred_check
      %p1017 = pneg %p1016
    $region78: #{yolov5_with_cmaff_forward.15} parent=5 // pred_check_branch
      %1019 = sbr.rel (%p1017) target = $region80
    $region79: #{yolov5_with_cmaff_forward.15} parent=5 // pred_region
      %s1020 = ssub.s32 %s19, 2
      // Predicated region
      $region81: #{yolov5_with_cmaff_forward.15} parent=79 // pred_check
        %p1021 = pneg %p331
      $region82: #{yolov5_with_cmaff_forward.15} parent=79 // pred_check_branch
        %1023 = sbr.rel (%p1021) target = $region84
      $region83: #{yolov5_with_cmaff_forward.15} parent=79 // pred_region
        %p1024 = scmp.lt.s32.totalorder %s25, 1
        %s1025 = scalar_select %p1024, %s25, 1
        %s1026 = smul.addr %s1025, 4
        %s1027 = scalar_lea.vmem %s13, %s1026
      $region84: #{yolov5_with_cmaff_forward.15} parent=79 // pred_fallthru
        _
    $region80: #{yolov5_with_cmaff_forward.15} parent=5 // pred_fallthru
      _
  $region6: #{yolov5_with_cmaff_forward.15} parent=0 // loop_footer
    %s23 = sadd.s32 1, %s19
  $region7: #{yolov5_with_cmaff_forward.15} parent=0 // loop_footer_branch
    %18 = sbr.rel target = $region3
  $region8: #{yolov5_with_cmaff_forward.15} parent=0 // loop_exit
    _

// kernel: yolov5_with_cmaff_forward.17
$region0: #{yolov5_with_cmaff_forward.17}
  #allocation0 [shape = 'u32[]', space=smem, size = 0x4, offset = 0x4, fixed_abs, tag = 'smem constant byte address 0x4 - core index']
  #allocation1 [shape = 'u32[144,128]{1,0:T(1,128)}', space=vmem, size = 0x12000, scoped, tag = 'internal scratch']
  #allocation2 [shape = 'f32[8,128]{1,0:T(8,128)}', space=vmem, size = 0x1000, scoped, tag = 'scratch operand']
  %s0 = inlined_call_operand.vmem [shape: bf16[8,576], index: 0, kind: input, shape index: {}]
  %s1 = inlined_call_operand.vmem [shape: bf16[576,128], index: 1, kind: input, shape index: {}]
  %s2 = inlined_call_operand.vmem [shape: f32[1,128], index: 2, kind: input, shape index: {}]
  %s3 = inlined_call_operand.vmem [shape: f32[8,128], index: 3, kind: output, shape index: {}]
  %s4 = sld [smem:[#allocation0]]
  $region30: #{yolov5_with_cmaff_forward.17} parent=0
    _
  %s6 = ssub.s32 1, %s4
  %s7 = scalar_select 0, %s6, %s4
  // Predicated region
  $region2: #{yolov5_with_cmaff_forward.17} parent=0 // pred_check
    _
  $region3: #{yolov5_with_cmaff_forward.17} parent=0 // pred_check_branch
    %9 = sbr.rel (0) target = $region5
  $region4: #{yolov5_with_cmaff_forward.17} parent=0 // pred_region
    _
  $region5: #{yolov5_with_cmaff_forward.17} parent=0 // pred_fallthru
    _
  // Predicated region
  $region6: #{yolov5_with_cmaff_forward.17} parent=0 // pred_check
    _
  $region7: #{yolov5_with_cmaff_forward.17} parent=0 // pred_check_branch
    %11 = sbr.rel (0) target = $region9
  $region8: #{yolov5_with_cmaff_forward.17} parent=0 // pred_region
    _
  $region9: #{yolov5_with_cmaff_forward.17} parent=0 // pred_fallthru
    _
  // Predicated region
  $region10: #{yolov5_with_cmaff_forward.17} parent=0 // pred_check
    _
  $region11: #{yolov5_with_cmaff_forward.17} parent=0 // pred_check_branch
    %13 = sbr.rel (0) target = $region13
  $region12: #{yolov5_with_cmaff_forward.17} parent=0 // pred_region
    _
  $region13: #{yolov5_with_cmaff_forward.17} parent=0 // pred_fallthru
    _
  %p15 = scmp.eq.s32.totalorder 0, 0
  // Predicated region
  $region14: #{yolov5_with_cmaff_forward.17} parent=0 // pred_check
    %p16 = pneg %p15
  $region15: #{yolov5_with_cmaff_forward.17} parent=0 // pred_check_branch
    %18 = sbr.rel (%p16) target = $region17
  $region16: #{yolov5_with_cmaff_forward.17} parent=0 // pred_region
    %19 = vst [vmem:[#allocation2] sm:$0xff] 0.0
  $region17: #{yolov5_with_cmaff_forward.17} parent=0 // pred_fallthru
    _
  %v20 = vld [vmem:[#allocation2] sm:$0xff]
  %v21 = vld [vmem:[%s0] sm:$0xff]
  %v22 = vld [vmem:[%s0 + $0x8] sm:$0xff]
  %v23 = vld [vmem:[%s0 + $0x10] sm:$0xf]
  %v24 = vld [vmem:[%s1] sm:$0xf]
  %v25 = vld [vmem:[%s1 + $0x4] sm:$0xf]
  %v26 = vld [vmem:[%s1 + $0x8] sm:$0xf]
  %v27 = vld [vmem:[%s1 + $0xc] sm:$0xf]
  %v28 = vld [vmem:[%s1 + $0x10] sm:$0xf]
  %v29 = vld [vmem:[%s1 + $0x14] sm:$0xf]
  %v30 = vld [vmem:[%s1 + $0x18] sm:$0xf]
  %v31 = vld [vmem:[%s1 + $0x1c] sm:$0xf]
  %v32 = vld [vmem:[%s1 + $0x20] sm:$0xf]
  %v33 = vld [vmem:[%s1 + $0x24] sm:$0xf]
  %v34 = vld [vmem:[%s1 + $0x28] sm:$0xf]
  %v35 = vld [vmem:[%s1 + $0x2c] sm:$0xf]
  %v36 = vld [vmem:[%s1 + $0x30] sm:$0xf]
  %v37 = vld [vmem:[%s1 + $0x34] sm:$0xf]
  %v38 = vld [vmem:[%s1 + $0x38] sm:$0xf]
  %v39 = vld [vmem:[%s1 + $0x3c] sm:$0xf]
  %v40 = vld [vmem:[%s1 + $0x40] sm:$0xf]
  %v41 = vld [vmem:[%s1 + $0x44] sm:$0xf]
  %v42 = vld [vmem:[%s1 + $0x48] sm:$0xf]
  %v43 = vld [vmem:[%s1 + $0x4c] sm:$0xf]
  %v44 = vld [vmem:[%s1 + $0x50] sm:$0xf]
  %v45 = vld [vmem:[%s1 + $0x54] sm:$0xf]
  %v46 = vld [vmem:[%s1 + $0x58] sm:$0xf]
  %v47 = vld [vmem:[%s1 + $0x5c] sm:$0xf]
  %v48 = vld [vmem:[%s1 + $0x60] sm:$0xf]
  %v49 = vld [vmem:[%s1 + $0x64] sm:$0xf]
  %v50 = vld [vmem:[%s1 + $0x68] sm:$0xf]
  %v51 = vld [vmem:[%s1 + $0x6c] sm:$0xf]
  %v52 = vld [vmem:[%s1 + $0x70] sm:$0xf]
  %v53 = vld [vmem:[%s1 + $0x74] sm:$0xf]
  %v54 = vld [vmem:[%s1 + $0x78] sm:$0xf]
  %v55 = vld [vmem:[%s1 + $0x7c] sm:$0xf]
  %v56 = vld [vmem:[%s1 + $0x80] sm:$0xf]
  %v57 = vld [vmem:[%s1 + $0x84] sm:$0xf]
  %v58 = vld [vmem:[%s1 + $0x88] sm:$0xf]
  %v59 = vld [vmem:[%s1 + $0x8c] sm:$0xf]
  %v60 = vld [vmem:[%s1 + $0x90] sm:$0xf]
  %v61 = vld [vmem:[%s1 + $0x94] sm:$0xf]
  %v62 = vld [vmem:[%s1 + $0x98] sm:$0xf]
  %v63 = vld [vmem:[%s1 + $0x9c] sm:$0xf]
  %v64 = vld [vmem:[%s1 + $0xa0] sm:$0xf]
  %v65 = vld [vmem:[%s1 + $0xa4] sm:$0xf]
  %v66 = vld [vmem:[%s1 + $0xa8] sm:$0xf]
  %v67 = vld [vmem:[%s1 + $0xac] sm:$0xf]
  %v68 = vld [vmem:[%s1 + $0xb0] sm:$0xf]
  %v69 = vld [vmem:[%s1 + $0xb4] sm:$0xf]
  %v70 = vld [vmem:[%s1 + $0xb8] sm:$0xf]
  %v71 = vld [vmem:[%s1 + $0xbc] sm:$0xf]
  %v72 = vld [vmem:[%s1 + $0xc0] sm:$0xf]
  %v73 = vld [vmem:[%s1 + $0xc4] sm:$0xf]
  %v74 = vld [vmem:[%s1 + $0xc8] sm:$0xf]
  %v75 = vld [vmem:[%s1 + $0xcc] sm:$0xf]
  %v76 = vld [vmem:[%s1 + $0xd0] sm:$0xf]
  %v77 = vld [vmem:[%s1 + $0xd4] sm:$0xf]
  %v78 = vld [vmem:[%s1 + $0xd8] sm:$0xf]
  %v79 = vld [vmem:[%s1 + $0xdc] sm:$0xf]
  %v80 = vld [vmem:[%s1 + $0xe0] sm:$0xf]
  %v81 = vld [vmem:[%s1 + $0xe4] sm:$0xf]
  %v82 = vld [vmem:[%s1 + $0xe8] sm:$0xf]
  %v83 = vld [vmem:[%s1 + $0xec] sm:$0xf]
  %v84 = vld [vmem:[%s1 + $0xf0] sm:$0xf]
  %v85 = vld [vmem:[%s1 + $0xf4] sm:$0xf]
  %v86 = vld [vmem:[%s1 + $0xf8] sm:$0xf]
  %v87 = vld [vmem:[%s1 + $0xfc] sm:$0xf]
  %v88 = vld [vmem:[%s1 + $0x100] sm:$0xf]
  %v89 = vld [vmem:[%s1 + $0x104] sm:$0xf]
  %v90 = vld [vmem:[%s1 + $0x108] sm:$0xf]
  %v91 = vld [vmem:[%s1 + $0x10c] sm:$0xf]
  %v92 = vld [vmem:[%s1 + $0x110] sm:$0xf]
  %v93 = vld [vmem:[%s1 + $0x114] sm:$0xf]
  %v94 = vld [vmem:[%s1 + $0x118] sm:$0xf]
  %v95 = vld [vmem:[%s1 + $0x11c] sm:$0xf]
  %v99 = vunpack.c.l.b16 %v21
  %v100 = vunpack.c.h.b16 %v21
  %v101 = vunpack.c.l.b16 %v22
  %v102 = vunpack.c.h.b16 %v22
  %v103 = vunpack.c.l.b16 %v23
  %v104 = vpack.c.b16 %v99, %v99
  %v105 = vpack.c.b16 %v100, %v100
  %v106 = vpack.c.b16 %v101, %v101
  %v107 = vpack.c.b16 %v102, %v102
  %v108 = vpack.c.b16 %v103, %v103
  %v185 = vunpack.c.l.b16 %v24
  %v186 = vunpack.c.l.b16 %v25
  %v187 = vunpack.c.l.b16 %v26
  %v188 = vunpack.c.l.b16 %v27
  %v189 = vunpack.c.l.b16 %v28
  %v190 = vunpack.c.l.b16 %v29
  %v191 = vunpack.c.l.b16 %v30
  %v192 = vunpack.c.l.b16 %v31
  %v193 = vunpack.c.l.b16 %v32
  %v194 = vunpack.c.l.b16 %v33
  %v195 = vunpack.c.l.b16 %v34
  %v196 = vunpack.c.l.b16 %v35
  %v197 = vunpack.c.l.b16 %v36
  %v198 = vunpack.c.l.b16 %v37
  %v199 = vunpack.c.l.b16 %v38
  %v200 = vunpack.c.l.b16 %v39
  %v201 = vunpack.c.l.b16 %v40
  %v202 = vunpack.c.l.b16 %v41
  %v203 = vunpack.c.l.b16 %v42
  %v204 = vunpack.c.l.b16 %v43
  %v205 = vunpack.c.l.b16 %v44
  %v206 = vunpack.c.l.b16 %v45
  %v207 = vunpack.c.l.b16 %v46
  %v208 = vunpack.c.l.b16 %v47
  %v209 = vunpack.c.l.b16 %v48
  %v210 = vunpack.c.l.b16 %v49
  %v211 = vunpack.c.l.b16 %v50
  %v212 = vunpack.c.l.b16 %v51
  %v213 = vunpack.c.l.b16 %v52
  %v214 = vunpack.c.l.b16 %v53
  %v215 = vunpack.c.l.b16 %v54
  %v216 = vunpack.c.l.b16 %v55
  %v217 = vunpack.c.l.b16 %v56
  %v218 = vunpack.c.l.b16 %v57
  %v219 = vunpack.c.l.b16 %v58
  %v220 = vunpack.c.l.b16 %v59
  %v221 = vunpack.c.l.b16 %v60
  %v222 = vunpack.c.l.b16 %v61
  %v223 = vunpack.c.l.b16 %v62
  %v224 = vunpack.c.l.b16 %v63
  %v225 = vunpack.c.l.b16 %v64
  %v226 = vunpack.c.l.b16 %v65
  %v227 = vunpack.c.l.b16 %v66
  %v228 = vunpack.c.l.b16 %v67
  %v229 = vunpack.c.l.b16 %v68
  %v230 = vunpack.c.l.b16 %v69
  %v231 = vunpack.c.l.b16 %v70
  %v232 = vunpack.c.l.b16 %v71
  %v233 = vunpack.c.l.b16 %v72
  %v234 = vunpack.c.l.b16 %v73
  %v235 = vunpack.c.l.b16 %v74
  %v236 = vunpack.c.l.b16 %v75
  %v237 = vunpack.c.l.b16 %v76
  %v238 = vunpack.c.l.b16 %v77
  %v239 = vunpack.c.l.b16 %v78
  %v240 = vunpack.c.l.b16 %v79
  %v241 = vunpack.c.l.b16 %v80
  %v242 = vunpack.c.l.b16 %v81
  %v243 = vunpack.c.l.b16 %v82
  %v244 = vunpack.c.l.b16 %v83
  %v245 = vunpack.c.l.b16 %v84
  %v246 = vunpack.c.l.b16 %v85
  %v247 = vunpack.c.l.b16 %v86
  %v248 = vunpack.c.l.b16 %v87
  %v249 = vunpack.c.l.b16 %v88
  %v250 = vunpack.c.l.b16 %v89
  %v251 = vunpack.c.l.b16 %v90
  %v252 = vunpack.c.l.b16 %v91
  %v253 = vunpack.c.l.b16 %v92
  %v254 = vunpack.c.l.b16 %v93
  %v255 = vunpack.c.l.b16 %v94
  %v256 = vunpack.c.l.b16 %v95
  %v257 = vpack.c.b16 %v186, %v185
  %v258 = vpack.c.b16 %v188, %v187
  %v259 = vpack.c.b16 %v190, %v189
  %v260 = vpack.c.b16 %v192, %v191
  %v261 = vpack.c.b16 %v194, %v193
  %v262 = vpack.c.b16 %v196, %v195
  %v263 = vpack.c.b16 %v198, %v197
  %v264 = vpack.c.b16 %v200, %v199
  %v265 = vpack.c.b16 %v202, %v201
  %v266 = vpack.c.b16 %v204, %v203
  %v267 = vpack.c.b16 %v206, %v205
  %v268 = vpack.c.b16 %v208, %v207
  %v269 = vpack.c.b16 %v210, %v209
  %v270 = vpack.c.b16 %v212, %v211
  %v271 = vpack.c.b16 %v214, %v213
  %v272 = vpack.c.b16 %v216, %v215
  %v273 = vpack.c.b16 %v218, %v217
  %v274 = vpack.c.b16 %v220, %v219
  %v275 = vpack.c.b16 %v222, %v221
  %v276 = vpack.c.b16 %v224, %v223
  %v277 = vpack.c.b16 %v226, %v225
  %v278 = vpack.c.b16 %v228, %v227
  %v279 = vpack.c.b16 %v230, %v229
  %v280 = vpack.c.b16 %v232, %v231
  %v281 = vpack.c.b16 %v234, %v233
  %v282 = vpack.c.b16 %v236, %v235
  %v283 = vpack.c.b16 %v238, %v237
  %v284 = vpack.c.b16 %v240, %v239
  %v285 = vpack.c.b16 %v242, %v241
  %v286 = vpack.c.b16 %v244, %v243
  %v287 = vpack.c.b16 %v246, %v245
  %v288 = vpack.c.b16 %v248, %v247
  %v289 = vpack.c.b16 %v250, %v249
  %v290 = vpack.c.b16 %v252, %v251
  %v291 = vpack.c.b16 %v254, %v253
  %v292 = vpack.c.b16 %v256, %v255
  %vm329 = vcmask 523264
  %v331 = vsel %vm329, %v108, 0
  %333 = vmatprep.subr.bf16.mxu0 0
  %334 = vmatpush1.bf16.msra.mxu0 %v257
  %335 = vmatprep.subr.bf16.mxu0 0
  %336 = vmatpush1.bf16.msra.mxu0 %v258
  %337 = vmatprep.subr.bf16.mxu0 0
  %338 = vmatpush1.bf16.msra.mxu0 %v259
  %339 = vmatprep.subr.bf16.mxu0 0
  %340 = vmatpush1.bf16.msra.mxu0 %v260
  %341 = vmatprep.subr.bf16.mxu0 0
  %342 = vmatpush1.bf16.msra.mxu0 %v261
  %343 = vmatprep.subr.bf16.mxu0 0
  %344 = vmatpush1.bf16.msra.mxu0 %v262
  %345 = vmatprep.subr.bf16.mxu0 0
  %346 = vmatpush1.bf16.msra.mxu0 %v263
  %347 = vmatprep.subr.bf16.mxu0 0
  %348 = vmatpush1.bf16.msra.mxu0 %v264
  %349 = vmatprep.subr.bf16.mxu0 0
  %350 = vmatpush1.bf16.msra.mxu0 %v265
  %351 = vmatprep.subr.bf16.mxu0 0
  %352 = vmatpush1.bf16.msra.mxu0 %v266
  %353 = vmatprep.subr.bf16.mxu0 0
  %354 = vmatpush1.bf16.msra.mxu0 %v267
  %355 = vmatprep.subr.bf16.mxu0 0
  %356 = vmatpush1.bf16.msra.mxu0 %v268
  %357 = vmatprep.subr.bf16.mxu0 0
  %358 = vmatpush1.bf16.msra.mxu0 %v269
  %359 = vmatprep.subr.bf16.mxu0 0
  %360 = vmatpush1.bf16.msra.mxu0 %v270
  %361 = vmatprep.subr.bf16.mxu0 0
  %362 = vmatpush1.bf16.msra.mxu0 %v271
  %363 = vmatprep.subr.bf16.mxu0 0
  %364 = vmatpush1.bf16.msra.mxu0 %v272
  %365 = vmatprep.mubr.bf16.mxu0 %v105
  %366 = vmatmul.mubr.bf16.gmra.mrb[0].mxu0 %v104
  %v367 = vpop.f32.mrb[0].mxu0
  %v368 = vadd.f32 0.0, %v367
  %v369 = vpop.f32.mrb[0].mxu0
  %v370 = vpop.f32.mrb[0].mxu0
  %v371 = vpop.f32.mrb[0].mxu0
  %372 = vdwg.mxu0
  %373 = vmatprep.subr.bf16.mxu0 0
  %374 = vmatpush1.bf16.msra.mxu0 %v273
  %375 = vmatprep.subr.bf16.mxu0 0
  %376 = vmatpush1.bf16.msra.mxu0 %v274
  %377 = vmatprep.subr.bf16.mxu0 0
  %378 = vmatpush1.bf16.msra.mxu0 %v275
  %379 = vmatprep.subr.bf16.mxu0 0
  %380 = vmatpush1.bf16.msra.mxu0 %v276
  %381 = vmatprep.subr.bf16.mxu0 0
  %382 = vmatpush1.bf16.msra.mxu0 %v277
  %383 = vmatprep.subr.bf16.mxu0 0
  %384 = vmatpush1.bf16.msra.mxu0 %v278
  %385 = vmatprep.subr.bf16.mxu0 0
  %386 = vmatpush1.bf16.msra.mxu0 %v279
  %387 = vmatprep.subr.bf16.mxu0 0
  %388 = vmatpush1.bf16.msra.mxu0 %v280
  %389 = vmatprep.subr.bf16.mxu0 0
  %390 = vmatpush1.bf16.msra.mxu0 %v281
  %391 = vmatprep.subr.bf16.mxu0 0
  %392 = vmatpush1.bf16.msra.mxu0 %v282
  %393 = vmatprep.subr.bf16.mxu0 0
  %394 = vmatpush1.bf16.msra.mxu0 %v283
  %395 = vmatprep.subr.bf16.mxu0 0
  %396 = vmatpush1.bf16.msra.mxu0 %v284
  %397 = vmatprep.subr.bf16.mxu0 0
  %398 = vmatpush1.bf16.msra.mxu0 %v285
  %399 = vmatprep.subr.bf16.mxu0 0
  %400 = vmatpush1.bf16.msra.mxu0 %v286
  %401 = vmatprep.subr.bf16.mxu0 0
  %402 = vmatpush1.bf16.msra.mxu0 %v287
  %403 = vmatprep.subr.bf16.mxu0 0
  %404 = vmatpush1.bf16.msra.mxu0 %v288
  %405 = vmatprep.mubr.bf16.mxu0 %v107
  %406 = vmatmul.mubr.bf16.gmra.mrb[0].mxu0 %v106
  %v407 = vpop.f32.mrb[0].mxu0
  %v408 = vadd.f32 %v368, %v407
  %v409 = vpop.f32.mrb[0].mxu0
  %v410 = vpop.f32.mrb[0].mxu0
  %v411 = vpop.f32.mrb[0].mxu0
  %412 = vdwg.mxu0
  %413 = vmatprep.subr.bf16.mxu0 0
  %414 = vmatpush1.bf16.msra.mxu0 %v289
  %415 = vmatprep.subr.bf16.mxu0 0
  %416 = vmatpush1.bf16.msra.mxu0 %v290
  %417 = vmatprep.subr.bf16.mxu0 0
  %418 = vmatpush1.bf16.msra.mxu0 %v291
  %419 = vmatprep.subr.bf16.mxu0 0
  %420 = vmatpush1.bf16.msra.mxu0 %v292
  %421 = vmatprep.subr.bf16.mxu0 0
  %422 = vmatpush1.bf16.msra.mxu0 0
  %423 = vmatprep.subr.bf16.mxu0 0
  %424 = vmatpush1.bf16.msra.mxu0 0
  %425 = vmatprep.subr.bf16.mxu0 0
  %426 = vmatpush1.bf16.msra.mxu0 0
  %427 = vmatprep.subr.bf16.mxu0 0
  %428 = vmatpush1.bf16.msra.mxu0 0
  %429 = vmatprep.subr.bf16.mxu0 0
  %430 = vmatpush1.bf16.msra.mxu0 0
  %431 = vmatprep.subr.bf16.mxu0 0
  %432 = vmatpush1.bf16.msra.mxu0 0
  %433 = vmatprep.subr.bf16.mxu0 0
  %434 = vmatpush1.bf16.msra.mxu0 0
  %435 = vmatprep.subr.bf16.mxu0 0
  %436 = vmatpush1.bf16.msra.mxu0 0
  %437 = vmatprep.subr.bf16.mxu0 0
  %438 = vmatpush1.bf16.msra.mxu0 0
  %439 = vmatprep.subr.bf16.mxu0 0
  %440 = vmatpush1.bf16.msra.mxu0 0
  %441 = vmatprep.subr.bf16.mxu0 0
  %442 = vmatpush1.bf16.msra.mxu0 0
  %443 = vmatprep.subr.bf16.mxu0 0
  %444 = vmatpush1.bf16.msra.mxu0 0
  %445 = vmatprep.mubr.bf16.mxu0 0
  %446 = vmatmul.mubr.bf16.gmra.mrb[0].mxu0 %v331
  %v447 = vpop.f32.mrb[0].mxu0
  %v448 = vadd.f32 %v408, %v447
  %v449 = vpop.f32.mrb[0].mxu0
  %v450 = vpop.f32.mrb[0].mxu0
  %v451 = vpop.f32.mrb[0].mxu0
  %452 = vdwg.mxu0
  %v453 = vadd.f32 %v20, %v448
  %454 = vst [vmem:[#allocation2] sm:$0xff] %v453
  // Predicated region
  $region18: #{yolov5_with_cmaff_forward.17} parent=0 // pred_check
    %p455 = pneg %p15
  $region19: #{yolov5_with_cmaff_forward.17} parent=0 // pred_check_branch
    %457 = sbr.rel (%p455) target = $region21
  $region20: #{yolov5_with_cmaff_forward.17} parent=0 // pred_region
    %v458 = vld [vmem:[#allocation2] sm:$0xff]
    %v459 = vld [vmem:[%s2] sm:$0x1]
    %v461 = vlaneseq
    %v462 = vshrl.u32 %v461, 7
    %v463 = vsub.s32 0, %v462
    %v464 = vrot.slane %v459, %v463
    %v466 = vadd.f32 %v458, %v464
    %467 = vst [vmem:[%s3] sm:$0xff] %v466
  $region21: #{yolov5_with_cmaff_forward.17} parent=0 // pred_fallthru
    _
  // Predicated region
  $region22: #{yolov5_with_cmaff_forward.17} parent=0 // pred_check
    _
  $region23: #{yolov5_with_cmaff_forward.17} parent=0 // pred_check_branch
    %469 = sbr.rel (0) target = $region25
  $region24: #{yolov5_with_cmaff_forward.17} parent=0 // pred_region
    _
  $region25: #{yolov5_with_cmaff_forward.17} parent=0 // pred_fallthru
    _
  // Predicated region
  $region26: #{yolov5_with_cmaff_forward.17} parent=0 // pred_check
    _
  $region27: #{yolov5_with_cmaff_forward.17} parent=0 // pred_check_branch
    %471 = sbr.rel (0) target = $region29
  $region28: #{yolov5_with_cmaff_forward.17} parent=0 // pred_region
    _
  $region29: #{yolov5_with_cmaff_forward.17} parent=0 // pred_fallthru
    _

</llo_original>
